<compile_context>
chip_gen: v6e
topology: v6e:2x2x1
jax: 0.10.0
libtpu: 0.0.40
codegen_flags: <defaults>
</compile_context>

<pallas_src>
import functools

import jax
import jax.numpy as jnp
from jax import lax
from jax.experimental import pallas as pl
from jax.experimental.pallas import tpu as pltpu


def _round_up(x, m):
    return (x + m - 1) // m * m


def _choose_bn(n, block_n=128):
    """Batch tile: >=2 grid blocks when possible (feeds both v7x TCs /
    megacore), aligned to 16 sublanes so bf16 operand blocks stay tile-aligned."""
    want = _round_up(max(-(-n // 2), 1), 16)
    return min(block_n, want)


# ----------------------------------------------------------------------------
# Fused BiGRU + attention (+ optional FC) Pallas kernel
# ----------------------------------------------------------------------------
def _bigru_attn_kernel(fuse_fc, mdt, *args):
    """x block (T, N, D) -> pooled (N, 2H), or logits (N, C) if FC is fused.

    wih_ref : (D, 6H)    input weights, columns = [fwd(r,z,n) | bwd(r,z,n)]
    bi_ref  : (1, 6H)    biases foldable into the ih precompute
    whh_ref : (2H, 6H)   block-diagonal recurrent weights, rows [h_f | h_b]
    bhn_ref : (2, 1, H)  recurrent n-gate bias (must stay inside r*(.))
    wlin_ref: (2H, 2H), blin_ref: (1, 2H), ctx_ref: (2H, 1)  attention params
    """
    if fuse_fc:
        (x_ref, wih_ref, bi_ref, whh_ref, bhn_ref,
         wlin_ref, blin_ref, ctx_ref, fcw_ref, fcb_ref,
         out_ref, ih_ref, h_ref) = args
    else:
        (x_ref, wih_ref, bi_ref, whh_ref, bhn_ref,
         wlin_ref, blin_ref, ctx_ref,
         out_ref, ih_ref, h_ref) = args
        fcw_ref = fcb_ref = None

    T, N, D = x_ref.shape
    H = bhn_ref.shape[-1]
    H3 = 3 * H

    # ---- hoisted input-gate matmul: one big MXU pass, biases folded in ------
    x2 = x_ref[...].reshape(T * N, D)
    ih = (jnp.dot(x2, wih_ref[...], preferred_element_type=jnp.float32)
          + bi_ref[...]).reshape(T, N, 2 * H3)
    ih_ref[0] = ih[:, :, :H3].astype(ih_ref.dtype)    # forward-direction gates
    ih_ref[1] = ih[:, :, H3:].astype(ih_ref.dtype)    # backward-direction gates

    # ---- weights hoisted out of the serial loop (stay vreg-resident) --------
    whh = whh_ref[...]            # (2H, 6H) block-diagonal
    bhn_f = bhn_ref[0]            # (1, H)
    bhn_b = bhn_ref[1]            # (1, H)

    def gru_gate(ih3, gh3, bhn, h_prev):
        r = jax.nn.sigmoid(ih3[:, :H] + gh3[:, :H])
        z = jax.nn.sigmoid(ih3[:, H:2 * H] + gh3[:, H:2 * H])
        n = jnp.tanh(ih3[:, 2 * H:] + r * (gh3[:, 2 * H:] + bhn))
        return (1.0 - z) * n + z * h_prev

    def step(t, h):
        tb = T - 1 - t
        # single fused (N, 2H) @ (2H, 6H) recurrent matmul for both directions
        gh = jnp.dot(h.astype(mdt), whh, preferred_element_type=jnp.float32)
        row_f = ih_ref[0, t].astype(jnp.float32)       # (N, 3H) fwd half only
        row_b = ih_ref[1, tb].astype(jnp.float32)      # (N, 3H) bwd half only
        h_f = gru_gate(row_f, gh[:, :H3], bhn_f, h[:, :H])
        h_b = gru_gate(row_b, gh[:, H3:], bhn_b, h[:, H:])
        h_ref[t, :, :H] = h_f                          # merged (T, N, 2H) scratch
        h_ref[tb, :, H:] = h_b
        return jnp.concatenate([h_f, h_b], axis=-1)

    h0 = jnp.zeros((N, 2 * H), jnp.float32)
    lax.fori_loop(0, T, step, h0, unroll=min(T, 8))

    # ---- vectorized attention scoring + pooling ------------------------------
    hall = h_ref[...]                                  # (T, N, 2H) f32
    h2 = hall.reshape(T * N, 2 * H)
    u = jnp.tanh(jnp.dot(h2.astype(mdt), wlin_ref[...],
                         preferred_element_type=jnp.float32) + blin_ref[...])
    s = jnp.dot(u, ctx_ref[...], preferred_element_type=jnp.float32)  # (T*N, 1)
    s = s.reshape(T, N, 1)
    m = jnp.max(s, axis=0, keepdims=True)
    e = jnp.exp(s - m)
    denom = jnp.sum(e, axis=0, keepdims=True)
    alpha = e * pl.reciprocal(denom, approx=True)      # softmax over time (EUP)
    pooled = jnp.sum(alpha * hall, axis=0)             # (N, 2H), contiguous

    if fuse_fc:
        out = (jnp.dot(pooled.astype(mdt), fcw_ref[...],
                       preferred_element_type=jnp.float32) + fcb_ref[...])
    else:
        out = pooled
    out_ref[...] = out.astype(out_ref.dtype)


def _full_spec(a):
    zeros = (0,) * a.ndim
    return pl.BlockSpec(a.shape, lambda i, _z=zeros: _z)


def bigru_attention(x, wih, bi, whh, bhn, wlin, blin, ctx, fc=None, *,
                    block_n=128, bn=None, mxu_dtype=jnp.float32):
    """x: (T, N, D) time-major.  Returns (N, 2H) pooled vectors, or (N, C) if
    fc=(fc_w, fc_b) is given (final FC fused into the kernel epilogue)."""
    T, N, D = x.shape
    H = whh.shape[1]
    if bn is None:
        bn = _choose_bn(N, block_n)
    Np = _round_up(N, bn)
    x = x.astype(mxu_dtype)
    if Np != N:
        # Small / sentence-level inputs only; the big word-level activation is
        # pre-padded via the int32 token tensor in han_forward (cheaper).
        x = jnp.pad(x, ((0, 0), (0, Np - N), (0, 0)))

    # Block-diagonal recurrent weight: rows [h_f | h_b], cols [fwd rzn | bwd rzn]
    zblk = jnp.zeros((H, 3 * H), whh.dtype)
    whh_blk = jnp.concatenate(
        [jnp.concatenate([whh[0], zblk], axis=1),
         jnp.concatenate([zblk, whh[1]], axis=1)], axis=0).astype(mxu_dtype)

    fuse_fc = fc is not None
    n_out = fc[0].shape[1] if fuse_fc else 2 * H

    weights = [wih.astype(mxu_dtype), bi, whh_blk, bhn,
               wlin.astype(mxu_dtype), blin, ctx]
    if fuse_fc:
        weights += [fc[0].astype(mxu_dtype), fc[1]]

    in_specs = [pl.BlockSpec((T, bn, D), lambda i: (0, i, 0))]
    in_specs += [_full_spec(w) for w in weights]

    # Per-block VMEM estimate -> scoped-VMEM limit (v5e default 16 MiB, v6e/v7x
    # 32 MiB; v7x physical is 64 MiB so cap there).
    isz = jnp.dtype(mxu_dtype).itemsize
    est = (2 * T * bn * D * isz                      # x double-buffer
           + 2 * T * bn * 3 * H * isz                # ih scratch (both dirs)
           + T * bn * 6 * H * 4                      # f32 ih intermediate
           + T * bn * 2 * H * 4                      # merged h scratch
           + 2 * sum(int(w.size) * w.dtype.itemsize for w in weights)
           + 2 * bn * n_out * 4)
    vmem_limit = int(min(max(est + (8 << 20), 32 << 20), 64 << 20))

    out = pl.pallas_call(
        functools.partial(_bigru_attn_kernel, fuse_fc, mxu_dtype),
        out_shape=jax.ShapeDtypeStruct((Np, n_out), jnp.float32),
        grid=(Np // bn,),
        in_specs=in_specs,
        out_specs=pl.BlockSpec((bn, n_out), lambda i: (i, 0)),
        scratch_shapes=[pltpu.VMEM((2, T, bn, 3 * H), mxu_dtype),  # ih precompute
                        pltpu.VMEM((T, bn, 2 * H), jnp.float32)],  # merged hidden
        compiler_params=pltpu.CompilerParams(
            dimension_semantics=("parallel",),
            vmem_limit_bytes=vmem_limit),
    )(x, *weights)
    return out[:N]


# ----------------------------------------------------------------------------
# HAN forward (glue in plain JAX, compute in Pallas)
# ----------------------------------------------------------------------------
def han_forward(params, x_tokens, *, mxu_dtype=jnp.float32, block_n=128):
    B, S, W = x_tokens.shape
    pw, ps = params['word'], params['sent']
    Hw = pw['whh'].shape[1]

    # Word level: pad the tiny int32 token tensor (not the D-wide activation)
    # so the kernel's batch axis is already tile-aligned, then gather directly
    # into the time-major (W, S*B, D) layout the kernel wants.
    n_w = S * B
    bn_w = _choose_bn(n_w, block_n)
    np_w = _round_up(n_w, bn_w)
    tok = jnp.transpose(x_tokens, (2, 1, 0)).reshape(W, n_w)
    if np_w != n_w:
        tok = jnp.pad(tok, ((0, 0), (0, np_w - n_w)))   # pad id 0 stays in-vocab
    embed = params['embed'].astype(mxu_dtype)
    word_in = jnp.take(embed, tok, axis=0)              # (W, np_w, D)

    sent_vecs = bigru_attention(word_in, pw['wih'], pw['bi'], pw['whh'],
                                pw['bhn'], pw['wlin'], pw['blin'], pw['ctx'],
                                bn=bn_w, block_n=block_n, mxu_dtype=mxu_dtype)
    # n = s*B + b reproduces torch.cat(word_attentions, dim=0) -> (S, B, 2*Hw)
    sent_in = sent_vecs[:n_w].reshape(S, B, 2 * Hw)

    logits = bigru_attention(sent_in, ps['wih'], ps['bi'], ps['whh'],
                             ps['bhn'], ps['wlin'], ps['blin'], ps['ctx'],
                             fc=(params['fc_w'], params['fc_b']),
                             block_n=block_n, mxu_dtype=mxu_dtype)
    return logits                                       # (B, C)


# ----------------------------------------------------------------------------
# Pure-JAX reference (same math, f32) for a correctness check
# ----------------------------------------------------------------------------
def ref_bigru_attn(x, wih, bi, whh, bhn, wlin, blin, ctx):
    T, N, _ = x.shape
    H = whh.shape[1]
    ih = jnp.einsum('tnd,dk->tnk', x, wih) + bi               # (T, N, 6H)

    def run(ih_d, whh_d, bhn_d, reverse):
        def step(h, ih_t):
            g = h @ whh_d
            r = jax.nn.sigmoid(ih_t[:, :H] + g[:, :H])
            z = jax.nn.sigmoid(ih_t[:, H:2 * H] + g[:, H:2 * H])
            n = jnp.tanh(ih_t[:, 2 * H:] + r * (g[:, 2 * H:] + bhn_d))
            h_new = (1.0 - z) * n + z * h
            return h_new, h_new
        _, hs = lax.scan(step, jnp.zeros((N, H), jnp.float32), ih_d,
                         reverse=reverse)
        return hs

    hf = run(ih[:, :, :3 * H], whh[0], bhn[0], False)
    hb = run(ih[:, :, 3 * H:], whh[1], bhn[1], True)
    h = jnp.concatenate([hf, hb], axis=-1)                    # (T, N, 2H)
    u = jnp.tanh(jnp.einsum('tnk,kj->tnj', h, wlin) + blin)
    s = jnp.einsum('tnj,jo->tno', u, ctx)                     # (T, N, 1)
    a = jax.nn.softmax(s, axis=0)
    return jnp.sum(a * h, axis=0)


def ref_forward(params, x_tokens):
    B, S, W = x_tokens.shape
    tok = jnp.transpose(x_tokens, (2, 1, 0)).reshape(W, S * B)
    word_in = jnp.take(params['embed'], tok, axis=0)
    pw = params['word']
    sv = ref_bigru_attn(word_in, pw['wih'], pw['bi'], pw['whh'], pw['bhn'],
                        pw['wlin'], pw['blin'], pw['ctx'])
    sent_in = sv.reshape(S, B, sv.shape[-1])
    ps = params['sent']
    dv = ref_bigru_attn(sent_in, ps['wih'], ps['bi'], ps['whh'], ps['bhn'],
                        ps['wlin'], ps['blin'], ps['ctx'])
    return dv @ params['fc_w'] + params['fc_b']


# ----------------------------------------------------------------------------
# Deterministic parameter init (fused-GRU weight layout)
# ----------------------------------------------------------------------------
def init_params(key, vocab, words_dim, word_hidden, sent_hidden, num_classes):
    ks = jax.random.split(key, 17)

    def gru_level(keys, din, h, ctx_range):
        kwih, kwhh, kbi, kbh, kwlin, kblin, kctx = keys
        a = 1.0 / (h ** 0.5)
        al = 1.0 / ((2 * h) ** 0.5)
        return dict(
            # (D, 6H): columns [fwd(r,z,n) | bwd(r,z,n)], gate blocks of width h
            wih=jax.random.uniform(kwih, (din, 6 * h), jnp.float32, -a, a),
            # combined foldable biases (b_ir+b_hr, b_iz+b_hz, b_in per direction)
            bi=jax.random.uniform(kbi, (1, 6 * h), jnp.float32, -a, a),
            whh=jax.random.uniform(kwhh, (2, h, 3 * h), jnp.float32, -a, a),
            bhn=jax.random.uniform(kbh, (2, 1, h), jnp.float32, -a, a),
            wlin=jax.random.uniform(kwlin, (2 * h, 2 * h), jnp.float32, -al, al),
            blin=jax.random.uniform(kblin, (1, 2 * h), jnp.float32, -al, al),
            ctx=jax.random.uniform(kctx, (2 * h, 1), jnp.float32,
                                   -ctx_range, ctx_range),
        )

    af = 1.0 / ((2 * sent_hidden) ** 0.5)
    return dict(
        embed=jax.random.uniform(ks[0], (vocab, words_dim), jnp.float32,
                                 -0.25, 0.25),                # mode='rand'
        word=gru_level(ks[1:8], words_dim, word_hidden, 0.25),
        sent=gru_level(ks[8:15], 2 * word_hidden, sent_hidden, 0.1),
        fc_w=jax.random.uniform(ks[15], (2 * sent_hidden, num_classes),
                                jnp.float32, -af, af),
        fc_b=jax.random.uniform(ks[16], (1, num_classes), jnp.float32, -af, af),
    )


if __name__ == "__main__":
    B, S, W = 2, 3, 8            # batch, sentences per doc, words per sentence
    VOCAB, D = 100, 32           # words_num, words_dim
    HW, HS, C = 16, 16, 4        # word_num_hidden, sentence_num_hidden, classes

    key = jax.random.PRNGKey(0)
    k_tok, k_par = jax.random.split(key)
    x_tokens = jax.random.randint(k_tok, (B, S, W), 0, VOCAB, dtype=jnp.int32)
    params = init_params(k_par, VOCAB, D, HW, HS, C)

    ref = jax.block_until_ready(ref_forward(params, x_tokens))

    # f32 mode: tight correctness check against the pure-JAX reference.
    out = jax.block_until_ready(
        jax.jit(functools.partial(han_forward, mxu_dtype=jnp.float32))(
            params, x_tokens))
    assert out.shape == (B, C), out.shape
    assert bool(jnp.all(jnp.isfinite(out)))
    assert bool(jnp.allclose(out, ref, atol=5e-3, rtol=5e-3)), (out, ref)

    # bf16 MXU-operand mode (perf config for v6e/v7x); looser tolerance.
    out_bf = jax.block_until_ready(
        jax.jit(functools.partial(han_forward, mxu_dtype=jnp.bfloat16))(
            params, x_tokens))
    assert out_bf.shape == (B, C), out_bf.shape
    assert bool(jnp.all(jnp.isfinite(out_bf)))
    assert bool(jnp.allclose(out_bf, ref, atol=1e-1, rtol=1e-1)), (out_bf, ref)

    print("KERNEL_OK")
</pallas_src>

<mosaic_0001>
module attributes {stable_mosaic.version = 11 : i64} {
  func.func @_bigru_attn_kernel(%arg0: i32, %arg1: memref<3x16x32xf32, #tpu.memory_space<vmem>>, %arg2: memref<32x96xf32, #tpu.memory_space<vmem>>, %arg3: memref<1x96xf32, #tpu.memory_space<vmem>>, %arg4: memref<32x96xf32, #tpu.memory_space<vmem>>, %arg5: memref<2x1x16xf32, #tpu.memory_space<vmem>>, %arg6: memref<32x32xf32, #tpu.memory_space<vmem>>, %arg7: memref<1x32xf32, #tpu.memory_space<vmem>>, %arg8: memref<32x1xf32, #tpu.memory_space<vmem>>, %arg9: memref<32x4xf32, #tpu.memory_space<vmem>>, %arg10: memref<1x4xf32, #tpu.memory_space<vmem>>, %arg11: memref<16x4xf32, #tpu.memory_space<vmem>>, %arg12: memref<2x3x16x48xf32, #tpu.memory_space<vmem>>, %arg13: memref<3x16x32xf32, #tpu.memory_space<vmem>>) attributes {dimension_semantics = [#tpu.dimension_semantics<parallel>], iteration_bounds = array<i64: 1>, scalar_prefetch = 0 : i64, scratch_operands = 2 : i64, tpu.core_type = #tpu.core_type<tc>, window_params = [{transform_indices = @transform_0, window_bounds = array<i64: 3, 16, 32>}, {pipeline_mode = #tpu.pipeline_mode<synchronous>, transform_indices = @transform_1, window_bounds = array<i64: 32, 96>}, {pipeline_mode = #tpu.pipeline_mode<synchronous>, transform_indices = @transform_2, window_bounds = array<i64: 1, 96>}, {pipeline_mode = #tpu.pipeline_mode<synchronous>, transform_indices = @transform_3, window_bounds = array<i64: 32, 96>}, {pipeline_mode = #tpu.pipeline_mode<synchronous>, transform_indices = @transform_4, window_bounds = array<i64: 2, 1, 16>}, {pipeline_mode = #tpu.pipeline_mode<synchronous>, transform_indices = @transform_5, window_bounds = array<i64: 32, 32>}, {pipeline_mode = #tpu.pipeline_mode<synchronous>, transform_indices = @transform_6, window_bounds = array<i64: 1, 32>}, {pipeline_mode = #tpu.pipeline_mode<synchronous>, transform_indices = @transform_7, window_bounds = array<i64: 32, 1>}, {pipeline_mode = #tpu.pipeline_mode<synchronous>, transform_indices = @transform_8, window_bounds = array<i64: 32, 4>}, {pipeline_mode = #tpu.pipeline_mode<synchronous>, transform_indices = @transform_9, window_bounds = array<i64: 1, 4>}, {transform_indices = @transform_10, window_bounds = array<i64: 16, 4>}]} {
    %c0 = arith.constant 0 : index
    %c0_0 = arith.constant 0 : index
    %c0_1 = arith.constant 0 : index
    %0 = vector.load %arg1[%c0, %c0_0, %c0_1] : memref<3x16x32xf32, #tpu.memory_space<vmem>>, vector<3x16x32xf32>
    %1 = vector.shape_cast %0 : vector<3x16x32xf32> to vector<48x32xf32>
    %c0_2 = arith.constant 0 : index
    %c0_3 = arith.constant 0 : index
    %2 = vector.load %arg2[%c0_2, %c0_3] : memref<32x96xf32, #tpu.memory_space<vmem>>, vector<32x96xf32>
    %cst = arith.constant dense<0.000000e+00> : vector<48x96xf32>
    %3 = tpu.matmul %1, %2, %cst {dimension_numbers = #tpu.dot_dimension_numbers<[1], [0], [0], [1], [0, 0, 1, 1], [], []>} : vector<48x32xf32>, vector<32x96xf32>, vector<48x96xf32> -> vector<48x96xf32>
    %c0_4 = arith.constant 0 : index
    %c0_5 = arith.constant 0 : index
    %4 = vector.load %arg3[%c0_4, %c0_5] : memref<1x96xf32, #tpu.memory_space<vmem>>, vector<1x96xf32>
    %5 = vector.broadcast %4 : vector<1x96xf32> to vector<48x96xf32>
    %6 = arith.addf %3, %5 : vector<48x96xf32>
    %7 = vector.shape_cast %6 : vector<48x96xf32> to vector<3x16x96xf32>
    %8 = vector.extract_strided_slice %7 {offsets = [0, 0, 0], sizes = [3, 16, 48], strides = [1, 1, 1]} : vector<3x16x96xf32> to vector<3x16x48xf32>
    %c0_6 = arith.constant 0 : index
    %c0_7 = arith.constant 0 : index
    %c0_8 = arith.constant 0 : index
    %c0_9 = arith.constant 0 : index
    %9 = vector.load %arg12[%c0_6, %c0_7, %c0_8, %c0_9] : memref<2x3x16x48xf32, #tpu.memory_space<vmem>>, vector<1x3x16x48xf32>
    %10 = vector.shape_cast %9 : vector<1x3x16x48xf32> to vector<3x16x48xf32>
    %11 = vector.shape_cast %8 : vector<3x16x48xf32> to vector<1x3x16x48xf32>
    tpu.vector_store %arg12[%c0_6, %c0_7, %c0_8, %c0_9], %11 {strides = array<i32>} : memref<2x3x16x48xf32, #tpu.memory_space<vmem>>, vector<1x3x16x48xf32>,
    %12 = vector.extract_strided_slice %7 {offsets = [0, 0, 48], sizes = [3, 16, 48], strides = [1, 1, 1]} : vector<3x16x96xf32> to vector<3x16x48xf32>
    %c1 = arith.constant 1 : index
    %c0_10 = arith.constant 0 : index
    %c0_11 = arith.constant 0 : index
    %c0_12 = arith.constant 0 : index
    %13 = vector.load %arg12[%c1, %c0_10, %c0_11, %c0_12] : memref<2x3x16x48xf32, #tpu.memory_space<vmem>>, vector<1x3x16x48xf32>
    %14 = vector.shape_cast %13 : vector<1x3x16x48xf32> to vector<3x16x48xf32>
    %15 = vector.shape_cast %12 : vector<3x16x48xf32> to vector<1x3x16x48xf32>
    tpu.vector_store %arg12[%c1, %c0_10, %c0_11, %c0_12], %15 {strides = array<i32>} : memref<2x3x16x48xf32, #tpu.memory_space<vmem>>, vector<1x3x16x48xf32>,
    %c0_13 = arith.constant 0 : index
    %c0_14 = arith.constant 0 : index
    %16 = vector.load %arg4[%c0_13, %c0_14] : memref<32x96xf32, #tpu.memory_space<vmem>>, vector<32x96xf32>
    %c0_15 = arith.constant 0 : index
    %c0_16 = arith.constant 0 : index
    %c0_17 = arith.constant 0 : index
    %17 = vector.load %arg5[%c0_15, %c0_16, %c0_17] : memref<2x1x16xf32, #tpu.memory_space<vmem>>, vector<1x1x16xf32>
    %18 = vector.shape_cast %17 : vector<1x1x16xf32> to vector<1x16xf32>
    %c1_18 = arith.constant 1 : index
    %c0_19 = arith.constant 0 : index
    %c0_20 = arith.constant 0 : index
    %19 = vector.load %arg5[%c1_18, %c0_19, %c0_20] : memref<2x1x16xf32, #tpu.memory_space<vmem>>, vector<1x1x16xf32>
    %20 = vector.shape_cast %19 : vector<1x1x16xf32> to vector<1x16xf32>
    %cst_21 = arith.constant 0.000000e+00 : f32
    %21 = vector.broadcast %cst_21 : f32 to vector<16x32xf32>
    %c0_i32 = arith.constant 0 : i32
    %c2_i32 = arith.constant 2 : i32
    %22 = arith.subi %c2_i32, %c0_i32 : i32
    %cst_22 = arith.constant dense<0.000000e+00> : vector<16x96xf32>
    %23 = tpu.matmul %21, %16, %cst_22 {dimension_numbers = #tpu.dot_dimension_numbers<[1], [0], [0], [1], [0, 0, 1, 1], [], []>} : vector<16x32xf32>, vector<32x96xf32>, vector<16x96xf32> -> vector<16x96xf32>
    %c0_23 = arith.constant 0 : index
    %24 = arith.index_cast %c0_i32 : i32 to index
    %c0_24 = arith.constant 0 : index
    %c0_25 = arith.constant 0 : index
    %25 = vector.load %arg12[%c0_23, %24, %c0_24, %c0_25] : memref<2x3x16x48xf32, #tpu.memory_space<vmem>>, vector<1x1x16x48xf32>
    %26 = vector.shape_cast %25 : vector<1x1x16x48xf32> to vector<16x48xf32>
    %c1_26 = arith.constant 1 : index
    %27 = arith.index_cast %22 : i32 to index
    %c0_27 = arith.constant 0 : index
    %c0_28 = arith.constant 0 : index
    %28 = vector.load %arg12[%c1_26, %27, %c0_27, %c0_28] : memref<2x3x16x48xf32, #tpu.memory_space<vmem>>, vector<1x1x16x48xf32>
    %29 = vector.shape_cast %28 : vector<1x1x16x48xf32> to vector<16x48xf32>
    %30 = vector.extract_strided_slice %23 {offsets = [0, 0], sizes = [16, 48], strides = [1, 1]} : vector<16x96xf32> to vector<16x48xf32>
    %31 = vector.extract_strided_slice %21 {offsets = [0, 0], sizes = [16, 16], strides = [1, 1]} : vector<16x32xf32> to vector<16x16xf32>
    %32 = vector.extract_strided_slice %26 {offsets = [0, 0], sizes = [16, 16], strides = [1, 1]} : vector<16x48xf32> to vector<16x16xf32>
    %33 = vector.extract_strided_slice %30 {offsets = [0, 0], sizes = [16, 16], strides = [1, 1]} : vector<16x48xf32> to vector<16x16xf32>
    %34 = arith.addf %32, %33 : vector<16x16xf32>
    %35 = arith.negf %34 : vector<16x16xf32>
    %36 = math.exp %35 : vector<16x16xf32>
    %cst_29 = arith.constant 1.000000e+00 : f32
    %37 = vector.broadcast %cst_29 : f32 to vector<16x16xf32>
    %38 = arith.addf %37, %36 : vector<16x16xf32>
    %39 = arith.divf %37, %38 : vector<16x16xf32>
    %40 = vector.extract_strided_slice %26 {offsets = [0, 16], sizes = [16, 16], strides = [1, 1]} : vector<16x48xf32> to vector<16x16xf32>
    %41 = vector.extract_strided_slice %30 {offsets = [0, 16], sizes = [16, 16], strides = [1, 1]} : vector<16x48xf32> to vector<16x16xf32>
    %42 = arith.addf %40, %41 : vector<16x16xf32>
    %43 = arith.negf %42 : vector<16x16xf32>
    %44 = math.exp %43 : vector<16x16xf32>
    %cst_30 = arith.constant 1.000000e+00 : f32
    %45 = vector.broadcast %cst_30 : f32 to vector<16x16xf32>
    %46 = arith.addf %45, %44 : vector<16x16xf32>
    %47 = arith.divf %45, %46 : vector<16x16xf32>
    %48 = vector.extract_strided_slice %26 {offsets = [0, 32], sizes = [16, 16], strides = [1, 1]} : vector<16x48xf32> to vector<16x16xf32>
    %49 = vector.extract_strided_slice %30 {offsets = [0, 32], sizes = [16, 16], strides = [1, 1]} : vector<16x48xf32> to vector<16x16xf32>
    %50 = vector.broadcast %18 : vector<1x16xf32> to vector<16x16xf32>
    %51 = arith.addf %49, %50 : vector<16x16xf32>
    %52 = arith.mulf %39, %51 : vector<16x16xf32>
    %53 = arith.addf %48, %52 : vector<16x16xf32>
    %54 = math.tanh %53 : vector<16x16xf32>
    %cst_31 = arith.constant 1.000000e+00 : f32
    %55 = vector.broadcast %cst_31 : f32 to vector<16x16xf32>
    %56 = arith.subf %55, %47 : vector<16x16xf32>
    %57 = arith.mulf %56, %54 : vector<16x16xf32>
    %58 = arith.mulf %47, %31 : vector<16x16xf32>
    %59 = arith.addf %57, %58 : vector<16x16xf32>
    %60 = vector.extract_strided_slice %23 {offsets = [0, 48], sizes = [16, 48], strides = [1, 1]} : vector<16x96xf32> to vector<16x48xf32>
    %61 = vector.extract_strided_slice %21 {offsets = [0, 16], sizes = [16, 16], strides = [1, 1]} : vector<16x32xf32> to vector<16x16xf32>
    %62 = vector.extract_strided_slice %29 {offsets = [0, 0], sizes = [16, 16], strides = [1, 1]} : vector<16x48xf32> to vector<16x16xf32>
    %63 = vector.extract_strided_slice %60 {offsets = [0, 0], sizes = [16, 16], strides = [1, 1]} : vector<16x48xf32> to vector<16x16xf32>
    %64 = arith.addf %62, %63 : vector<16x16xf32>
    %65 = arith.negf %64 : vector<16x16xf32>
    %66 = math.exp %65 : vector<16x16xf32>
    %cst_32 = arith.constant 1.000000e+00 : f32
    %67 = vector.broadcast %cst_32 : f32 to vector<16x16xf32>
    %68 = arith.addf %67, %66 : vector<16x16xf32>
    %69 = arith.divf %67, %68 : vector<16x16xf32>
    %70 = vector.extract_strided_slice %29 {offsets = [0, 16], sizes = [16, 16], strides = [1, 1]} : vector<16x48xf32> to vector<16x16xf32>
    %71 = vector.extract_strided_slice %60 {offsets = [0, 16], sizes = [16, 16], strides = [1, 1]} : vector<16x48xf32> to vector<16x16xf32>
    %72 = arith.addf %70, %71 : vector<16x16xf32>
    %73 = arith.negf %72 : vector<16x16xf32>
    %74 = math.exp %73 : vector<16x16xf32>
    %cst_33 = arith.constant 1.000000e+00 : f32
    %75 = vector.broadcast %cst_33 : f32 to vector<16x16xf32>
    %76 = arith.addf %75, %74 : vector<16x16xf32>
    %77 = arith.divf %75, %76 : vector<16x16xf32>
    %78 = vector.extract_strided_slice %29 {offsets = [0, 32], sizes = [16, 16], strides = [1, 1]} : vector<16x48xf32> to vector<16x16xf32>
    %79 = vector.extract_strided_slice %60 {offsets = [0, 32], sizes = [16, 16], strides = [1, 1]} : vector<16x48xf32> to vector<16x16xf32>
    %80 = vector.broadcast %20 : vector<1x16xf32> to vector<16x16xf32>
    %81 = arith.addf %79, %80 : vector<16x16xf32>
    %82 = arith.mulf %69, %81 : vector<16x16xf32>
    %83 = arith.addf %78, %82 : vector<16x16xf32>
    %84 = math.tanh %83 : vector<16x16xf32>
    %cst_34 = arith.constant 1.000000e+00 : f32
    %85 = vector.broadcast %cst_34 : f32 to vector<16x16xf32>
    %86 = arith.subf %85, %77 : vector<16x16xf32>
    %87 = arith.mulf %86, %84 : vector<16x16xf32>
    %88 = arith.mulf %77, %61 : vector<16x16xf32>
    %89 = arith.addf %87, %88 : vector<16x16xf32>
    %90 = arith.index_cast %c0_i32 : i32 to index
    %c0_35 = arith.constant 0 : index
    %c0_36 = arith.constant 0 : index
    %91 = vector.load %arg13[%90, %c0_35, %c0_36] : memref<3x16x32xf32, #tpu.memory_space<vmem>>, vector<1x16x16xf32>
    %92 = vector.shape_cast %91 : vector<1x16x16xf32> to vector<16x16xf32>
    %93 = vector.shape_cast %59 : vector<16x16xf32> to vector<1x16x16xf32>
    tpu.vector_store %arg13[%90, %c0_35, %c0_36], %93 {strides = array<i32>} : memref<3x16x32xf32, #tpu.memory_space<vmem>>, vector<1x16x16xf32>,
    %94 = arith.index_cast %22 : i32 to index
    %c0_37 = arith.constant 0 : index
    %c16 = arith.constant 16 : index
    %95 = vector.load %arg13[%94, %c0_37, %c16] : memref<3x16x32xf32, #tpu.memory_space<vmem>>, vector<1x16x16xf32>
    %96 = vector.shape_cast %95 : vector<1x16x16xf32> to vector<16x16xf32>
    %97 = vector.shape_cast %89 : vector<16x16xf32> to vector<1x16x16xf32>
    tpu.vector_store %arg13[%94, %c0_37, %c16], %97 {strides = array<i32>} : memref<3x16x32xf32, #tpu.memory_space<vmem>>, vector<1x16x16xf32>,
    %98 = tpu.concatenate %59, %89 in 1 : vector<16x16xf32>, vector<16x16xf32> -> vector<16x32xf32>
    %c1_i32 = arith.constant 1 : i32
    %c2_i32_38 = arith.constant 2 : i32
    %99 = arith.subi %c2_i32_38, %c1_i32 : i32
    %cst_39 = arith.constant dense<0.000000e+00> : vector<16x96xf32>
    %100 = tpu.matmul %98, %16, %cst_39 {dimension_numbers = #tpu.dot_dimension_numbers<[1], [0], [0], [1], [0, 0, 1, 1], [], []>} : vector<16x32xf32>, vector<32x96xf32>, vector<16x96xf32> -> vector<16x96xf32>
    %c0_40 = arith.constant 0 : index
    %101 = arith.index_cast %c1_i32 : i32 to index
    %c0_41 = arith.constant 0 : index
    %c0_42 = arith.constant 0 : index
    %102 = vector.load %arg12[%c0_40, %101, %c0_41, %c0_42] : memref<2x3x16x48xf32, #tpu.memory_space<vmem>>, vector<1x1x16x48xf32>
    %103 = vector.shape_cast %102 : vector<1x1x16x48xf32> to vector<16x48xf32>
    %c1_43 = arith.constant 1 : index
    %104 = arith.index_cast %99 : i32 to index
    %c0_44 = arith.constant 0 : index
    %c0_45 = arith.constant 0 : index
    %105 = vector.load %arg12[%c1_43, %104, %c0_44, %c0_45] : memref<2x3x16x48xf32, #tpu.memory_space<vmem>>, vector<1x1x16x48xf32>
    %106 = vector.shape_cast %105 : vector<1x1x16x48xf32> to vector<16x48xf32>
    %107 = vector.extract_strided_slice %100 {offsets = [0, 0], sizes = [16, 48], strides = [1, 1]} : vector<16x96xf32> to vector<16x48xf32>
    %108 = vector.extract_strided_slice %98 {offsets = [0, 0], sizes = [16, 16], strides = [1, 1]} : vector<16x32xf32> to vector<16x16xf32>
    %109 = vector.extract_strided_slice %103 {offsets = [0, 0], sizes = [16, 16], strides = [1, 1]} : vector<16x48xf32> to vector<16x16xf32>
    %110 = vector.extract_strided_slice %107 {offsets = [0, 0], sizes = [16, 16], strides = [1, 1]} : vector<16x48xf32> to vector<16x16xf32>
    %111 = arith.addf %109, %110 : vector<16x16xf32>
    %112 = arith.negf %111 : vector<16x16xf32>
    %113 = math.exp %112 : vector<16x16xf32>
    %cst_46 = arith.constant 1.000000e+00 : f32
    %114 = vector.broadcast %cst_46 : f32 to vector<16x16xf32>
    %115 = arith.addf %114, %113 : vector<16x16xf32>
    %116 = arith.divf %114, %115 : vector<16x16xf32>
    %117 = vector.extract_strided_slice %103 {offsets = [0, 16], sizes = [16, 16], strides = [1, 1]} : vector<16x48xf32> to vector<16x16xf32>
    %118 = vector.extract_strided_slice %107 {offsets = [0, 16], sizes = [16, 16], strides = [1, 1]} : vector<16x48xf32> to vector<16x16xf32>
    %119 = arith.addf %117, %118 : vector<16x16xf32>
    %120 = arith.negf %119 : vector<16x16xf32>
    %121 = math.exp %120 : vector<16x16xf32>
    %cst_47 = arith.constant 1.000000e+00 : f32
    %122 = vector.broadcast %cst_47 : f32 to vector<16x16xf32>
    %123 = arith.addf %122, %121 : vector<16x16xf32>
    %124 = arith.divf %122, %123 : vector<16x16xf32>
    %125 = vector.extract_strided_slice %103 {offsets = [0, 32], sizes = [16, 16], strides = [1, 1]} : vector<16x48xf32> to vector<16x16xf32>
    %126 = vector.extract_strided_slice %107 {offsets = [0, 32], sizes = [16, 16], strides = [1, 1]} : vector<16x48xf32> to vector<16x16xf32>
    %127 = vector.broadcast %18 : vector<1x16xf32> to vector<16x16xf32>
    %128 = arith.addf %126, %127 : vector<16x16xf32>
    %129 = arith.mulf %116, %128 : vector<16x16xf32>
    %130 = arith.addf %125, %129 : vector<16x16xf32>
    %131 = math.tanh %130 : vector<16x16xf32>
    %cst_48 = arith.constant 1.000000e+00 : f32
    %132 = vector.broadcast %cst_48 : f32 to vector<16x16xf32>
    %133 = arith.subf %132, %124 : vector<16x16xf32>
    %134 = arith.mulf %133, %131 : vector<16x16xf32>
    %135 = arith.mulf %124, %108 : vector<16x16xf32>
    %136 = arith.addf %134, %135 : vector<16x16xf32>
    %137 = vector.extract_strided_slice %100 {offsets = [0, 48], sizes = [16, 48], strides = [1, 1]} : vector<16x96xf32> to vector<16x48xf32>
    %138 = vector.extract_strided_slice %98 {offsets = [0, 16], sizes = [16, 16], strides = [1, 1]} : vector<16x32xf32> to vector<16x16xf32>
    %139 = vector.extract_strided_slice %106 {offsets = [0, 0], sizes = [16, 16], strides = [1, 1]} : vector<16x48xf32> to vector<16x16xf32>
    %140 = vector.extract_strided_slice %137 {offsets = [0, 0], sizes = [16, 16], strides = [1, 1]} : vector<16x48xf32> to vector<16x16xf32>
    %141 = arith.addf %139, %140 : vector<16x16xf32>
    %142 = arith.negf %141 : vector<16x16xf32>
    %143 = math.exp %142 : vector<16x16xf32>
    %cst_49 = arith.constant 1.000000e+00 : f32
    %144 = vector.broadcast %cst_49 : f32 to vector<16x16xf32>
    %145 = arith.addf %144, %143 : vector<16x16xf32>
    %146 = arith.divf %144, %145 : vector<16x16xf32>
    %147 = vector.extract_strided_slice %106 {offsets = [0, 16], sizes = [16, 16], strides = [1, 1]} : vector<16x48xf32> to vector<16x16xf32>
    %148 = vector.extract_strided_slice %137 {offsets = [0, 16], sizes = [16, 16], strides = [1, 1]} : vector<16x48xf32> to vector<16x16xf32>
    %149 = arith.addf %147, %148 : vector<16x16xf32>
    %150 = arith.negf %149 : vector<16x16xf32>
    %151 = math.exp %150 : vector<16x16xf32>
    %cst_50 = arith.constant 1.000000e+00 : f32
    %152 = vector.broadcast %cst_50 : f32 to vector<16x16xf32>
    %153 = arith.addf %152, %151 : vector<16x16xf32>
    %154 = arith.divf %152, %153 : vector<16x16xf32>
    %155 = vector.extract_strided_slice %106 {offsets = [0, 32], sizes = [16, 16], strides = [1, 1]} : vector<16x48xf32> to vector<16x16xf32>
    %156 = vector.extract_strided_slice %137 {offsets = [0, 32], sizes = [16, 16], strides = [1, 1]} : vector<16x48xf32> to vector<16x16xf32>
    %157 = vector.broadcast %20 : vector<1x16xf32> to vector<16x16xf32>
    %158 = arith.addf %156, %157 : vector<16x16xf32>
    %159 = arith.mulf %146, %158 : vector<16x16xf32>
    %160 = arith.addf %155, %159 : vector<16x16xf32>
    %161 = math.tanh %160 : vector<16x16xf32>
    %cst_51 = arith.constant 1.000000e+00 : f32
    %162 = vector.broadcast %cst_51 : f32 to vector<16x16xf32>
    %163 = arith.subf %162, %154 : vector<16x16xf32>
    %164 = arith.mulf %163, %161 : vector<16x16xf32>
    %165 = arith.mulf %154, %138 : vector<16x16xf32>
    %166 = arith.addf %164, %165 : vector<16x16xf32>
    %167 = arith.index_cast %c1_i32 : i32 to index
    %c0_52 = arith.constant 0 : index
    %c0_53 = arith.constant 0 : index
    %168 = vector.load %arg13[%167, %c0_52, %c0_53] : memref<3x16x32xf32, #tpu.memory_space<vmem>>, vector<1x16x16xf32>
    %169 = vector.shape_cast %168 : vector<1x16x16xf32> to vector<16x16xf32>
    %170 = vector.shape_cast %136 : vector<16x16xf32> to vector<1x16x16xf32>
    tpu.vector_store %arg13[%167, %c0_52, %c0_53], %170 {strides = array<i32>} : memref<3x16x32xf32, #tpu.memory_space<vmem>>, vector<1x16x16xf32>,
    %171 = arith.index_cast %99 : i32 to index
    %c0_54 = arith.constant 0 : index
    %c16_55 = arith.constant 16 : index
    %172 = vector.load %arg13[%171, %c0_54, %c16_55] : memref<3x16x32xf32, #tpu.memory_space<vmem>>, vector<1x16x16xf32>
    %173 = vector.shape_cast %172 : vector<1x16x16xf32> to vector<16x16xf32>
    %174 = vector.shape_cast %166 : vector<16x16xf32> to vector<1x16x16xf32>
    tpu.vector_store %arg13[%171, %c0_54, %c16_55], %174 {strides = array<i32>} : memref<3x16x32xf32, #tpu.memory_space<vmem>>, vector<1x16x16xf32>,
    %175 = tpu.concatenate %136, %166 in 1 : vector<16x16xf32>, vector<16x16xf32> -> vector<16x32xf32>
    %c2_i32_56 = arith.constant 2 : i32
    %c2_i32_57 = arith.constant 2 : i32
    %176 = arith.subi %c2_i32_57, %c2_i32_56 : i32
    %cst_58 = arith.constant dense<0.000000e+00> : vector<16x96xf32>
    %177 = tpu.matmul %175, %16, %cst_58 {dimension_numbers = #tpu.dot_dimension_numbers<[1], [0], [0], [1], [0, 0, 1, 1], [], []>} : vector<16x32xf32>, vector<32x96xf32>, vector<16x96xf32> -> vector<16x96xf32>
    %c0_59 = arith.constant 0 : index
    %178 = arith.index_cast %c2_i32_56 : i32 to index
    %c0_60 = arith.constant 0 : index
    %c0_61 = arith.constant 0 : index
    %179 = vector.load %arg12[%c0_59, %178, %c0_60, %c0_61] : memref<2x3x16x48xf32, #tpu.memory_space<vmem>>, vector<1x1x16x48xf32>
    %180 = vector.shape_cast %179 : vector<1x1x16x48xf32> to vector<16x48xf32>
    %c1_62 = arith.constant 1 : index
    %181 = arith.index_cast %176 : i32 to index
    %c0_63 = arith.constant 0 : index
    %c0_64 = arith.constant 0 : index
    %182 = vector.load %arg12[%c1_62, %181, %c0_63, %c0_64] : memref<2x3x16x48xf32, #tpu.memory_space<vmem>>, vector<1x1x16x48xf32>
    %183 = vector.shape_cast %182 : vector<1x1x16x48xf32> to vector<16x48xf32>
    %184 = vector.extract_strided_slice %177 {offsets = [0, 0], sizes = [16, 48], strides = [1, 1]} : vector<16x96xf32> to vector<16x48xf32>
    %185 = vector.extract_strided_slice %175 {offsets = [0, 0], sizes = [16, 16], strides = [1, 1]} : vector<16x32xf32> to vector<16x16xf32>
    %186 = vector.extract_strided_slice %180 {offsets = [0, 0], sizes = [16, 16], strides = [1, 1]} : vector<16x48xf32> to vector<16x16xf32>
    %187 = vector.extract_strided_slice %184 {offsets = [0, 0], sizes = [16, 16], strides = [1, 1]} : vector<16x48xf32> to vector<16x16xf32>
    %188 = arith.addf %186, %187 : vector<16x16xf32>
    %189 = arith.negf %188 : vector<16x16xf32>
    %190 = math.exp %189 : vector<16x16xf32>
    %cst_65 = arith.constant 1.000000e+00 : f32
    %191 = vector.broadcast %cst_65 : f32 to vector<16x16xf32>
    %192 = arith.addf %191, %190 : vector<16x16xf32>
    %193 = arith.divf %191, %192 : vector<16x16xf32>
    %194 = vector.extract_strided_slice %180 {offsets = [0, 16], sizes = [16, 16], strides = [1, 1]} : vector<16x48xf32> to vector<16x16xf32>
    %195 = vector.extract_strided_slice %184 {offsets = [0, 16], sizes = [16, 16], strides = [1, 1]} : vector<16x48xf32> to vector<16x16xf32>
    %196 = arith.addf %194, %195 : vector<16x16xf32>
    %197 = arith.negf %196 : vector<16x16xf32>
    %198 = math.exp %197 : vector<16x16xf32>
    %cst_66 = arith.constant 1.000000e+00 : f32
    %199 = vector.broadcast %cst_66 : f32 to vector<16x16xf32>
    %200 = arith.addf %199, %198 : vector<16x16xf32>
    %201 = arith.divf %199, %200 : vector<16x16xf32>
    %202 = vector.extract_strided_slice %180 {offsets = [0, 32], sizes = [16, 16], strides = [1, 1]} : vector<16x48xf32> to vector<16x16xf32>
    %203 = vector.extract_strided_slice %184 {offsets = [0, 32], sizes = [16, 16], strides = [1, 1]} : vector<16x48xf32> to vector<16x16xf32>
    %204 = vector.broadcast %18 : vector<1x16xf32> to vector<16x16xf32>
    %205 = arith.addf %203, %204 : vector<16x16xf32>
    %206 = arith.mulf %193, %205 : vector<16x16xf32>
    %207 = arith.addf %202, %206 : vector<16x16xf32>
    %208 = math.tanh %207 : vector<16x16xf32>
    %cst_67 = arith.constant 1.000000e+00 : f32
    %209 = vector.broadcast %cst_67 : f32 to vector<16x16xf32>
    %210 = arith.subf %209, %201 : vector<16x16xf32>
    %211 = arith.mulf %210, %208 : vector<16x16xf32>
    %212 = arith.mulf %201, %185 : vector<16x16xf32>
    %213 = arith.addf %211, %212 : vector<16x16xf32>
    %214 = vector.extract_strided_slice %177 {offsets = [0, 48], sizes = [16, 48], strides = [1, 1]} : vector<16x96xf32> to vector<16x48xf32>
    %215 = vector.extract_strided_slice %175 {offsets = [0, 16], sizes = [16, 16], strides = [1, 1]} : vector<16x32xf32> to vector<16x16xf32>
    %216 = vector.extract_strided_slice %183 {offsets = [0, 0], sizes = [16, 16], strides = [1, 1]} : vector<16x48xf32> to vector<16x16xf32>
    %217 = vector.extract_strided_slice %214 {offsets = [0, 0], sizes = [16, 16], strides = [1, 1]} : vector<16x48xf32> to vector<16x16xf32>
    %218 = arith.addf %216, %217 : vector<16x16xf32>
    %219 = arith.negf %218 : vector<16x16xf32>
    %220 = math.exp %219 : vector<16x16xf32>
    %cst_68 = arith.constant 1.000000e+00 : f32
    %221 = vector.broadcast %cst_68 : f32 to vector<16x16xf32>
    %222 = arith.addf %221, %220 : vector<16x16xf32>
    %223 = arith.divf %221, %222 : vector<16x16xf32>
    %224 = vector.extract_strided_slice %183 {offsets = [0, 16], sizes = [16, 16], strides = [1, 1]} : vector<16x48xf32> to vector<16x16xf32>
    %225 = vector.extract_strided_slice %214 {offsets = [0, 16], sizes = [16, 16], strides = [1, 1]} : vector<16x48xf32> to vector<16x16xf32>
    %226 = arith.addf %224, %225 : vector<16x16xf32>
    %227 = arith.negf %226 : vector<16x16xf32>
    %228 = math.exp %227 : vector<16x16xf32>
    %cst_69 = arith.constant 1.000000e+00 : f32
    %229 = vector.broadcast %cst_69 : f32 to vector<16x16xf32>
    %230 = arith.addf %229, %228 : vector<16x16xf32>
    %231 = arith.divf %229, %230 : vector<16x16xf32>
    %232 = vector.extract_strided_slice %183 {offsets = [0, 32], sizes = [16, 16], strides = [1, 1]} : vector<16x48xf32> to vector<16x16xf32>
    %233 = vector.extract_strided_slice %214 {offsets = [0, 32], sizes = [16, 16], strides = [1, 1]} : vector<16x48xf32> to vector<16x16xf32>
    %234 = vector.broadcast %20 : vector<1x16xf32> to vector<16x16xf32>
    %235 = arith.addf %233, %234 : vector<16x16xf32>
    %236 = arith.mulf %223, %235 : vector<16x16xf32>
    %237 = arith.addf %232, %236 : vector<16x16xf32>
    %238 = math.tanh %237 : vector<16x16xf32>
    %cst_70 = arith.constant 1.000000e+00 : f32
    %239 = vector.broadcast %cst_70 : f32 to vector<16x16xf32>
    %240 = arith.subf %239, %231 : vector<16x16xf32>
    %241 = arith.mulf %240, %238 : vector<16x16xf32>
    %242 = arith.mulf %231, %215 : vector<16x16xf32>
    %243 = arith.addf %241, %242 : vector<16x16xf32>
    %244 = arith.index_cast %c2_i32_56 : i32 to index
    %c0_71 = arith.constant 0 : index
    %c0_72 = arith.constant 0 : index
    %245 = vector.load %arg13[%244, %c0_71, %c0_72] : memref<3x16x32xf32, #tpu.memory_space<vmem>>, vector<1x16x16xf32>
    %246 = vector.shape_cast %245 : vector<1x16x16xf32> to vector<16x16xf32>
    %247 = vector.shape_cast %213 : vector<16x16xf32> to vector<1x16x16xf32>
    tpu.vector_store %arg13[%244, %c0_71, %c0_72], %247 {strides = array<i32>} : memref<3x16x32xf32, #tpu.memory_space<vmem>>, vector<1x16x16xf32>,
    %248 = arith.index_cast %176 : i32 to index
    %c0_73 = arith.constant 0 : index
    %c16_74 = arith.constant 16 : index
    %249 = vector.load %arg13[%248, %c0_73, %c16_74] : memref<3x16x32xf32, #tpu.memory_space<vmem>>, vector<1x16x16xf32>
    %250 = vector.shape_cast %249 : vector<1x16x16xf32> to vector<16x16xf32>
    %251 = vector.shape_cast %243 : vector<16x16xf32> to vector<1x16x16xf32>
    tpu.vector_store %arg13[%248, %c0_73, %c16_74], %251 {strides = array<i32>} : memref<3x16x32xf32, #tpu.memory_space<vmem>>, vector<1x16x16xf32>,
    %252 = tpu.concatenate %213, %243 in 1 : vector<16x16xf32>, vector<16x16xf32> -> vector<16x32xf32>
    %c3_i32 = arith.constant 3 : i32
    %c0_75 = arith.constant 0 : index
    %c0_76 = arith.constant 0 : index
    %c0_77 = arith.constant 0 : index
    %253 = vector.load %arg13[%c0_75, %c0_76, %c0_77] : memref<3x16x32xf32, #tpu.memory_space<vmem>>, vector<3x16x32xf32>
    %254 = vector.shape_cast %253 : vector<3x16x32xf32> to vector<48x32xf32>
    %c0_78 = arith.constant 0 : index
    %c0_79 = arith.constant 0 : index
    %255 = vector.load %arg6[%c0_78, %c0_79] : memref<32x32xf32, #tpu.memory_space<vmem>>, vector<32x32xf32>
    %cst_80 = arith.constant dense<0.000000e+00> : vector<48x32xf32>
    %256 = tpu.matmul %254, %255, %cst_80 {dimension_numbers = #tpu.dot_dimension_numbers<[1], [0], [0], [1], [0, 0, 1, 1], [], []>} : vector<48x32xf32>, vector<32x32xf32>, vector<48x32xf32> -> vector<48x32xf32>
    %c0_81 = arith.constant 0 : index
    %c0_82 = arith.constant 0 : index
    %257 = vector.load %arg7[%c0_81, %c0_82] : memref<1x32xf32, #tpu.memory_space<vmem>>, vector<1x32xf32>
    %258 = vector.broadcast %257 : vector<1x32xf32> to vector<48x32xf32>
    %259 = arith.addf %256, %258 : vector<48x32xf32>
    %260 = math.tanh %259 : vector<48x32xf32>
    %c0_83 = arith.constant 0 : index
    %c0_84 = arith.constant 0 : index
    %261 = vector.load %arg8[%c0_83, %c0_84] : memref<32x1xf32, #tpu.memory_space<vmem>>, vector<32x1xf32>
    %cst_85 = arith.constant dense<0.000000e+00> : vector<48x1xf32>
    %262 = tpu.matmul %260, %261, %cst_85 {dimension_numbers = #tpu.dot_dimension_numbers<[1], [0], [0], [1], [0, 0, 1, 1], [], []>} : vector<48x32xf32>, vector<32x1xf32>, vector<48x1xf32> -> vector<48x1xf32>
    %263 = vector.shape_cast %262 : vector<48x1xf32> to vector<3x16x1xf32>
    %cst_86 = arith.constant dense<0xFF800000> : vector<16x1xf32>
    %264 = vector.multi_reduction <maximumf>, %263, %cst_86 [0] : vector<3x16x1xf32> to vector<16x1xf32>
    %265 = vector.shape_cast %264 : vector<16x1xf32> to vector<1x16x1xf32>
    %266 = vector.broadcast %265 : vector<1x16x1xf32> to vector<3x16x1xf32>
    %267 = arith.subf %263, %266 : vector<3x16x1xf32>
    %268 = math.exp %267 : vector<3x16x1xf32>
    %cst_87 = arith.constant dense<0.000000e+00> : vector<16x1xf32>
    %269 = vector.multi_reduction <add>, %268, %cst_87 [0] : vector<3x16x1xf32> to vector<16x1xf32>
    %270 = vector.shape_cast %269 : vector<16x1xf32> to vector<1x16x1xf32>
    %271 = tpu.reciprocal %270 {approx = true} : vector<1x16x1xf32> -> vector<1x16x1xf32>
    %272 = vector.broadcast %271 : vector<1x16x1xf32> to vector<3x16x1xf32>
    %273 = arith.mulf %268, %272 : vector<3x16x1xf32>
    %274 = vector.broadcast %273 : vector<3x16x1xf32> to vector<3x16x32xf32>
    %275 = arith.mulf %274, %253 : vector<3x16x32xf32>
    %cst_88 = arith.constant dense<0.000000e+00> : vector<16x32xf32>
    %276 = vector.multi_reduction <add>, %275, %cst_88 [0] : vector<3x16x32xf32> to vector<16x32xf32>
    %c0_89 = arith.constant 0 : index
    %c0_90 = arith.constant 0 : index
    %277 = vector.load %arg9[%c0_89, %c0_90] : memref<32x4xf32, #tpu.memory_space<vmem>>, vector<32x4xf32>
    %cst_91 = arith.constant dense<0.000000e+00> : vector<16x4xf32>
    %278 = tpu.matmul %276, %277, %cst_91 {dimension_numbers = #tpu.dot_dimension_numbers<[1], [0], [0], [1], [0, 0, 1, 1], [], []>} : vector<16x32xf32>, vector<32x4xf32>, vector<16x4xf32> -> vector<16x4xf32>
    %c0_92 = arith.constant 0 : index
    %c0_93 = arith.constant 0 : index
    %279 = vector.load %arg10[%c0_92, %c0_93] : memref<1x4xf32, #tpu.memory_space<vmem>>, vector<1x4xf32>
    %280 = vector.broadcast %279 : vector<1x4xf32> to vector<16x4xf32>
    %281 = arith.addf %278, %280 : vector<16x4xf32>
    %c0_94 = arith.constant 0 : index
    %c0_95 = arith.constant 0 : index
    %282 = vector.load %arg11[%c0_94, %c0_95] : memref<16x4xf32, #tpu.memory_space<vmem>>, vector<16x4xf32>
    tpu.vector_store %arg11[%c0_94, %c0_95], %281 {strides = array<i32>} : memref<16x4xf32, #tpu.memory_space<vmem>>, vector<16x4xf32>,
    return
  }
  func.func @transform_0(%arg0: i32) -> (i32, i32, i32) {
    %c0_i32 = arith.constant 0 : i32
    %c0_i32_0 = arith.constant 0 : i32
    %c0_i32_1 = arith.constant 0 : i32
    return %c0_i32, %arg0, %c0_i32_0 : i32, i32, i32
  }
  func.func @transform_1(%arg0: i32) -> (i32, i32) {
    %c0_i32 = arith.constant 0 : i32
    %c0_i32_0 = arith.constant 0 : i32
    %c0_i32_1 = arith.constant 0 : i32
    return %c0_i32, %c0_i32_0 : i32, i32
  }
  func.func @transform_2(%arg0: i32) -> (i32, i32) {
    %c0_i32 = arith.constant 0 : i32
    %c0_i32_0 = arith.constant 0 : i32
    %c0_i32_1 = arith.constant 0 : i32
    return %c0_i32, %c0_i32_0 : i32, i32
  }
  func.func @transform_3(%arg0: i32) -> (i32, i32) {
    %c0_i32 = arith.constant 0 : i32
    %c0_i32_0 = arith.constant 0 : i32
    %c0_i32_1 = arith.constant 0 : i32
    return %c0_i32, %c0_i32_0 : i32, i32
  }
  func.func @transform_4(%arg0: i32) -> (i32, i32, i32) {
    %c0_i32 = arith.constant 0 : i32
    %c0_i32_0 = arith.constant 0 : i32
    %c0_i32_1 = arith.constant 0 : i32
    %c0_i32_2 = arith.constant 0 : i32
    return %c0_i32, %c0_i32_0, %c0_i32_1 : i32, i32, i32
  }
  func.func @transform_5(%arg0: i32) -> (i32, i32) {
    %c0_i32 = arith.constant 0 : i32
    %c0_i32_0 = arith.constant 0 : i32
    %c0_i32_1 = arith.constant 0 : i32
    return %c0_i32, %c0_i32_0 : i32, i32
  }
  func.func @transform_6(%arg0: i32) -> (i32, i32) {
    %c0_i32 = arith.constant 0 : i32
    %c0_i32_0 = arith.constant 0 : i32
    %c0_i32_1 = arith.constant 0 : i32
    return %c0_i32, %c0_i32_0 : i32, i32
  }
  func.func @transform_7(%arg0: i32) -> (i32, i32) {
    %c0_i32 = arith.constant 0 : i32
    %c0_i32_0 = arith.constant 0 : i32
    %c0_i32_1 = arith.constant 0 : i32
    return %c0_i32, %c0_i32_0 : i32, i32
  }
  func.func @transform_8(%arg0: i32) -> (i32, i32) {
    %c0_i32 = arith.constant 0 : i32
    %c0_i32_0 = arith.constant 0 : i32
    %c0_i32_1 = arith.constant 0 : i32
    return %c0_i32, %c0_i32_0 : i32, i32
  }
  func.func @transform_9(%arg0: i32) -> (i32, i32) {
    %c0_i32 = arith.constant 0 : i32
    %c0_i32_0 = arith.constant 0 : i32
    %c0_i32_1 = arith.constant 0 : i32
    return %c0_i32, %c0_i32_0 : i32, i32
  }
  func.func @transform_10(%arg0: i32) -> (i32, i32) {
    %c0_i32 = arith.constant 0 : i32
    %c0_i32_0 = arith.constant 0 : i32
    return %arg0, %c0_i32 : i32, i32
  }
}

module attributes {stable_mosaic.version = 11 : i64} {
  func.func @_bigru_attn_kernel(%arg0: i32, %arg1: memref<8x16x32xf32, #tpu.memory_space<vmem>>, %arg2: memref<32x96xf32, #tpu.memory_space<vmem>>, %arg3: memref<1x96xf32, #tpu.memory_space<vmem>>, %arg4: memref<32x96xf32, #tpu.memory_space<vmem>>, %arg5: memref<2x1x16xf32, #tpu.memory_space<vmem>>, %arg6: memref<32x32xf32, #tpu.memory_space<vmem>>, %arg7: memref<1x32xf32, #tpu.memory_space<vmem>>, %arg8: memref<32x1xf32, #tpu.memory_space<vmem>>, %arg9: memref<16x32xf32, #tpu.memory_space<vmem>>, %arg10: memref<2x8x16x48xf32, #tpu.memory_space<vmem>>, %arg11: memref<8x16x32xf32, #tpu.memory_space<vmem>>) attributes {dimension_semantics = [#tpu.dimension_semantics<parallel>], iteration_bounds = array<i64: 1>, scalar_prefetch = 0 : i64, scratch_operands = 2 : i64, tpu.core_type = #tpu.core_type<tc>, window_params = [{transform_indices = @transform_0, window_bounds = array<i64: 8, 16, 32>}, {pipeline_mode = #tpu.pipeline_mode<synchronous>, transform_indices = @transform_1, window_bounds = array<i64: 32, 96>}, {pipeline_mode = #tpu.pipeline_mode<synchronous>, transform_indices = @transform_2, window_bounds = array<i64: 1, 96>}, {pipeline_mode = #tpu.pipeline_mode<synchronous>, transform_indices = @transform_3, window_bounds = array<i64: 32, 96>}, {pipeline_mode = #tpu.pipeline_mode<synchronous>, transform_indices = @transform_4, window_bounds = array<i64: 2, 1, 16>}, {pipeline_mode = #tpu.pipeline_mode<synchronous>, transform_indices = @transform_5, window_bounds = array<i64: 32, 32>}, {pipeline_mode = #tpu.pipeline_mode<synchronous>, transform_indices = @transform_6, window_bounds = array<i64: 1, 32>}, {pipeline_mode = #tpu.pipeline_mode<synchronous>, transform_indices = @transform_7, window_bounds = array<i64: 32, 1>}, {transform_indices = @transform_8, window_bounds = array<i64: 16, 32>}]} {
    %c0 = arith.constant 0 : index
    %c0_0 = arith.constant 0 : index
    %c0_1 = arith.constant 0 : index
    %0 = vector.load %arg1[%c0, %c0_0, %c0_1] : memref<8x16x32xf32, #tpu.memory_space<vmem>>, vector<8x16x32xf32>
    %1 = vector.shape_cast %0 : vector<8x16x32xf32> to vector<128x32xf32>
    %c0_2 = arith.constant 0 : index
    %c0_3 = arith.constant 0 : index
    %2 = vector.load %arg2[%c0_2, %c0_3] : memref<32x96xf32, #tpu.memory_space<vmem>>, vector<32x96xf32>
    %cst = arith.constant dense<0.000000e+00> : vector<128x96xf32>
    %3 = tpu.matmul %1, %2, %cst {dimension_numbers = #tpu.dot_dimension_numbers<[1], [0], [0], [1], [0, 0, 1, 1], [], []>} : vector<128x32xf32>, vector<32x96xf32>, vector<128x96xf32> -> vector<128x96xf32>
    %c0_4 = arith.constant 0 : index
    %c0_5 = arith.constant 0 : index
    %4 = vector.load %arg3[%c0_4, %c0_5] : memref<1x96xf32, #tpu.memory_space<vmem>>, vector<1x96xf32>
    %5 = vector.broadcast %4 : vector<1x96xf32> to vector<128x96xf32>
    %6 = arith.addf %3, %5 : vector<128x96xf32>
    %7 = vector.shape_cast %6 : vector<128x96xf32> to vector<8x16x96xf32>
    %8 = vector.extract_strided_slice %7 {offsets = [0, 0, 0], sizes = [8, 16, 48], strides = [1, 1, 1]} : vector<8x16x96xf32> to vector<8x16x48xf32>
    %c0_6 = arith.constant 0 : index
    %c0_7 = arith.constant 0 : index
    %c0_8 = arith.constant 0 : index
    %c0_9 = arith.constant 0 : index
    %9 = vector.load %arg10[%c0_6, %c0_7, %c0_8, %c0_9] : memref<2x8x16x48xf32, #tpu.memory_space<vmem>>, vector<1x8x16x48xf32>
    %10 = vector.shape_cast %9 : vector<1x8x16x48xf32> to vector<8x16x48xf32>
    %11 = vector.shape_cast %8 : vector<8x16x48xf32> to vector<1x8x16x48xf32>
    tpu.vector_store %arg10[%c0_6, %c0_7, %c0_8, %c0_9], %11 {strides = array<i32>} : memref<2x8x16x48xf32, #tpu.memory_space<vmem>>, vector<1x8x16x48xf32>,
    %12 = vector.extract_strided_slice %7 {offsets = [0, 0, 48], sizes = [8, 16, 48], strides = [1, 1, 1]} : vector<8x16x96xf32> to vector<8x16x48xf32>
    %c1 = arith.constant 1 : index
    %c0_10 = arith.constant 0 : index
    %c0_11 = arith.constant 0 : index
    %c0_12 = arith.constant 0 : index
    %13 = vector.load %arg10[%c1, %c0_10, %c0_11, %c0_12] : memref<2x8x16x48xf32, #tpu.memory_space<vmem>>, vector<1x8x16x48xf32>
    %14 = vector.shape_cast %13 : vector<1x8x16x48xf32> to vector<8x16x48xf32>
    %15 = vector.shape_cast %12 : vector<8x16x48xf32> to vector<1x8x16x48xf32>
    tpu.vector_store %arg10[%c1, %c0_10, %c0_11, %c0_12], %15 {strides = array<i32>} : memref<2x8x16x48xf32, #tpu.memory_space<vmem>>, vector<1x8x16x48xf32>,
    %c0_13 = arith.constant 0 : index
    %c0_14 = arith.constant 0 : index
    %16 = vector.load %arg4[%c0_13, %c0_14] : memref<32x96xf32, #tpu.memory_space<vmem>>, vector<32x96xf32>
    %c0_15 = arith.constant 0 : index
    %c0_16 = arith.constant 0 : index
    %c0_17 = arith.constant 0 : index
    %17 = vector.load %arg5[%c0_15, %c0_16, %c0_17] : memref<2x1x16xf32, #tpu.memory_space<vmem>>, vector<1x1x16xf32>
    %18 = vector.shape_cast %17 : vector<1x1x16xf32> to vector<1x16xf32>
    %c1_18 = arith.constant 1 : index
    %c0_19 = arith.constant 0 : index
    %c0_20 = arith.constant 0 : index
    %19 = vector.load %arg5[%c1_18, %c0_19, %c0_20] : memref<2x1x16xf32, #tpu.memory_space<vmem>>, vector<1x1x16xf32>
    %20 = vector.shape_cast %19 : vector<1x1x16xf32> to vector<1x16xf32>
    %cst_21 = arith.constant 0.000000e+00 : f32
    %21 = vector.broadcast %cst_21 : f32 to vector<16x32xf32>
    %c0_i32 = arith.constant 0 : i32
    %c7_i32 = arith.constant 7 : i32
    %22 = arith.subi %c7_i32, %c0_i32 : i32
    %cst_22 = arith.constant dense<0.000000e+00> : vector<16x96xf32>
    %23 = tpu.matmul %21, %16, %cst_22 {dimension_numbers = #tpu.dot_dimension_numbers<[1], [0], [0], [1], [0, 0, 1, 1], [], []>} : vector<16x32xf32>, vector<32x96xf32>, vector<16x96xf32> -> vector<16x96xf32>
    %c0_23 = arith.constant 0 : index
    %24 = arith.index_cast %c0_i32 : i32 to index
    %c0_24 = arith.constant 0 : index
    %c0_25 = arith.constant 0 : index
    %25 = vector.load %arg10[%c0_23, %24, %c0_24, %c0_25] : memref<2x8x16x48xf32, #tpu.memory_space<vmem>>, vector<1x1x16x48xf32>
    %26 = vector.shape_cast %25 : vector<1x1x16x48xf32> to vector<16x48xf32>
    %c1_26 = arith.constant 1 : index
    %27 = arith.index_cast %22 : i32 to index
    %c0_27 = arith.constant 0 : index
    %c0_28 = arith.constant 0 : index
    %28 = vector.load %arg10[%c1_26, %27, %c0_27, %c0_28] : memref<2x8x16x48xf32, #tpu.memory_space<vmem>>, vector<1x1x16x48xf32>
    %29 = vector.shape_cast %28 : vector<1x1x16x48xf32> to vector<16x48xf32>
    %30 = vector.extract_strided_slice %23 {offsets = [0, 0], sizes = [16, 48], strides = [1, 1]} : vector<16x96xf32> to vector<16x48xf32>
    %31 = vector.extract_strided_slice %21 {offsets = [0, 0], sizes = [16, 16], strides = [1, 1]} : vector<16x32xf32> to vector<16x16xf32>
    %32 = vector.extract_strided_slice %26 {offsets = [0, 0], sizes = [16, 16], strides = [1, 1]} : vector<16x48xf32> to vector<16x16xf32>
    %33 = vector.extract_strided_slice %30 {offsets = [0, 0], sizes = [16, 16], strides = [1, 1]} : vector<16x48xf32> to vector<16x16xf32>
    %34 = arith.addf %32, %33 : vector<16x16xf32>
    %35 = arith.negf %34 : vector<16x16xf32>
    %36 = math.exp %35 : vector<16x16xf32>
    %cst_29 = arith.constant 1.000000e+00 : f32
    %37 = vector.broadcast %cst_29 : f32 to vector<16x16xf32>
    %38 = arith.addf %37, %36 : vector<16x16xf32>
    %39 = arith.divf %37, %38 : vector<16x16xf32>
    %40 = vector.extract_strided_slice %26 {offsets = [0, 16], sizes = [16, 16], strides = [1, 1]} : vector<16x48xf32> to vector<16x16xf32>
    %41 = vector.extract_strided_slice %30 {offsets = [0, 16], sizes = [16, 16], strides = [1, 1]} : vector<16x48xf32> to vector<16x16xf32>
    %42 = arith.addf %40, %41 : vector<16x16xf32>
    %43 = arith.negf %42 : vector<16x16xf32>
    %44 = math.exp %43 : vector<16x16xf32>
    %cst_30 = arith.constant 1.000000e+00 : f32
    %45 = vector.broadcast %cst_30 : f32 to vector<16x16xf32>
    %46 = arith.addf %45, %44 : vector<16x16xf32>
    %47 = arith.divf %45, %46 : vector<16x16xf32>
    %48 = vector.extract_strided_slice %26 {offsets = [0, 32], sizes = [16, 16], strides = [1, 1]} : vector<16x48xf32> to vector<16x16xf32>
    %49 = vector.extract_strided_slice %30 {offsets = [0, 32], sizes = [16, 16], strides = [1, 1]} : vector<16x48xf32> to vector<16x16xf32>
    %50 = vector.broadcast %18 : vector<1x16xf32> to vector<16x16xf32>
    %51 = arith.addf %49, %50 : vector<16x16xf32>
    %52 = arith.mulf %39, %51 : vector<16x16xf32>
    %53 = arith.addf %48, %52 : vector<16x16xf32>
    %54 = math.tanh %53 : vector<16x16xf32>
    %cst_31 = arith.constant 1.000000e+00 : f32
    %55 = vector.broadcast %cst_31 : f32 to vector<16x16xf32>
    %56 = arith.subf %55, %47 : vector<16x16xf32>
    %57 = arith.mulf %56, %54 : vector<16x16xf32>
    %58 = arith.mulf %47, %31 : vector<16x16xf32>
    %59 = arith.addf %57, %58 : vector<16x16xf32>
    %60 = vector.extract_strided_slice %23 {offsets = [0, 48], sizes = [16, 48], strides = [1, 1]} : vector<16x96xf32> to vector<16x48xf32>
    %61 = vector.extract_strided_slice %21 {offsets = [0, 16], sizes = [16, 16], strides = [1, 1]} : vector<16x32xf32> to vector<16x16xf32>
    %62 = vector.extract_strided_slice %29 {offsets = [0, 0], sizes = [16, 16], strides = [1, 1]} : vector<16x48xf32> to vector<16x16xf32>
    %63 = vector.extract_strided_slice %60 {offsets = [0, 0], sizes = [16, 16], strides = [1, 1]} : vector<16x48xf32> to vector<16x16xf32>
    %64 = arith.addf %62, %63 : vector<16x16xf32>
    %65 = arith.negf %64 : vector<16x16xf32>
    %66 = math.exp %65 : vector<16x16xf32>
    %cst_32 = arith.constant 1.000000e+00 : f32
    %67 = vector.broadcast %cst_32 : f32 to vector<16x16xf32>
    %68 = arith.addf %67, %66 : vector<16x16xf32>
    %69 = arith.divf %67, %68 : vector<16x16xf32>
    %70 = vector.extract_strided_slice %29 {offsets = [0, 16], sizes = [16, 16], strides = [1, 1]} : vector<16x48xf32> to vector<16x16xf32>
    %71 = vector.extract_strided_slice %60 {offsets = [0, 16], sizes = [16, 16], strides = [1, 1]} : vector<16x48xf32> to vector<16x16xf32>
    %72 = arith.addf %70, %71 : vector<16x16xf32>
    %73 = arith.negf %72 : vector<16x16xf32>
    %74 = math.exp %73 : vector<16x16xf32>
    %cst_33 = arith.constant 1.000000e+00 : f32
    %75 = vector.broadcast %cst_33 : f32 to vector<16x16xf32>
    %76 = arith.addf %75, %74 : vector<16x16xf32>
    %77 = arith.divf %75, %76 : vector<16x16xf32>
    %78 = vector.extract_strided_slice %29 {offsets = [0, 32], sizes = [16, 16], strides = [1, 1]} : vector<16x48xf32> to vector<16x16xf32>
    %79 = vector.extract_strided_slice %60 {offsets = [0, 32], sizes = [16, 16], strides = [1, 1]} : vector<16x48xf32> to vector<16x16xf32>
    %80 = vector.broadcast %20 : vector<1x16xf32> to vector<16x16xf32>
    %81 = arith.addf %79, %80 : vector<16x16xf32>
    %82 = arith.mulf %69, %81 : vector<16x16xf32>
    %83 = arith.addf %78, %82 : vector<16x16xf32>
    %84 = math.tanh %83 : vector<16x16xf32>
    %cst_34 = arith.constant 1.000000e+00 : f32
    %85 = vector.broadcast %cst_34 : f32 to vector<16x16xf32>
    %86 = arith.subf %85, %77 : vector<16x16xf32>
    %87 = arith.mulf %86, %84 : vector<16x16xf32>
    %88 = arith.mulf %77, %61 : vector<16x16xf32>
    %89 = arith.addf %87, %88 : vector<16x16xf32>
    %90 = arith.index_cast %c0_i32 : i32 to index
    %c0_35 = arith.constant 0 : index
    %c0_36 = arith.constant 0 : index
    %91 = vector.load %arg11[%90, %c0_35, %c0_36] : memref<8x16x32xf32, #tpu.memory_space<vmem>>, vector<1x16x16xf32>
    %92 = vector.shape_cast %91 : vector<1x16x16xf32> to vector<16x16xf32>
    %93 = vector.shape_cast %59 : vector<16x16xf32> to vector<1x16x16xf32>
    tpu.vector_store %arg11[%90, %c0_35, %c0_36], %93 {strides = array<i32>} : memref<8x16x32xf32, #tpu.memory_space<vmem>>, vector<1x16x16xf32>,
    %94 = arith.index_cast %22 : i32 to index
    %c0_37 = arith.constant 0 : index
    %c16 = arith.constant 16 : index
    %95 = vector.load %arg11[%94, %c0_37, %c16] : memref<8x16x32xf32, #tpu.memory_space<vmem>>, vector<1x16x16xf32>
    %96 = vector.shape_cast %95 : vector<1x16x16xf32> to vector<16x16xf32>
    %97 = vector.shape_cast %89 : vector<16x16xf32> to vector<1x16x16xf32>
    tpu.vector_store %arg11[%94, %c0_37, %c16], %97 {strides = array<i32>} : memref<8x16x32xf32, #tpu.memory_space<vmem>>, vector<1x16x16xf32>,
    %98 = tpu.concatenate %59, %89 in 1 : vector<16x16xf32>, vector<16x16xf32> -> vector<16x32xf32>
    %c1_i32 = arith.constant 1 : i32
    %c7_i32_38 = arith.constant 7 : i32
    %99 = arith.subi %c7_i32_38, %c1_i32 : i32
    %cst_39 = arith.constant dense<0.000000e+00> : vector<16x96xf32>
    %100 = tpu.matmul %98, %16, %cst_39 {dimension_numbers = #tpu.dot_dimension_numbers<[1], [0], [0], [1], [0, 0, 1, 1], [], []>} : vector<16x32xf32>, vector<32x96xf32>, vector<16x96xf32> -> vector<16x96xf32>
    %c0_40 = arith.constant 0 : index
    %101 = arith.index_cast %c1_i32 : i32 to index
    %c0_41 = arith.constant 0 : index
    %c0_42 = arith.constant 0 : index
    %102 = vector.load %arg10[%c0_40, %101, %c0_41, %c0_42] : memref<2x8x16x48xf32, #tpu.memory_space<vmem>>, vector<1x1x16x48xf32>
    %103 = vector.shape_cast %102 : vector<1x1x16x48xf32> to vector<16x48xf32>
    %c1_43 = arith.constant 1 : index
    %104 = arith.index_cast %99 : i32 to index
    %c0_44 = arith.constant 0 : index
    %c0_45 = arith.constant 0 : index
    %105 = vector.load %arg10[%c1_43, %104, %c0_44, %c0_45] : memref<2x8x16x48xf32, #tpu.memory_space<vmem>>, vector<1x1x16x48xf32>
    %106 = vector.shape_cast %105 : vector<1x1x16x48xf32> to vector<16x48xf32>
    %107 = vector.extract_strided_slice %100 {offsets = [0, 0], sizes = [16, 48], strides = [1, 1]} : vector<16x96xf32> to vector<16x48xf32>
    %108 = vector.extract_strided_slice %98 {offsets = [0, 0], sizes = [16, 16], strides = [1, 1]} : vector<16x32xf32> to vector<16x16xf32>
    %109 = vector.extract_strided_slice %103 {offsets = [0, 0], sizes = [16, 16], strides = [1, 1]} : vector<16x48xf32> to vector<16x16xf32>
    %110 = vector.extract_strided_slice %107 {offsets = [0, 0], sizes = [16, 16], strides = [1, 1]} : vector<16x48xf32> to vector<16x16xf32>
    %111 = arith.addf %109, %110 : vector<16x16xf32>
    %112 = arith.negf %111 : vector<16x16xf32>
    %113 = math.exp %112 : vector<16x16xf32>
    %cst_46 = arith.constant 1.000000e+00 : f32
    %114 = vector.broadcast %cst_46 : f32 to vector<16x16xf32>
    %115 = arith.addf %114, %113 : vector<16x16xf32>
    %116 = arith.divf %114, %115 : vector<16x16xf32>
    %117 = vector.extract_strided_slice %103 {offsets = [0, 16], sizes = [16, 16], strides = [1, 1]} : vector<16x48xf32> to vector<16x16xf32>
    %118 = vector.extract_strided_slice %107 {offsets = [0, 16], sizes = [16, 16], strides = [1, 1]} : vector<16x48xf32> to vector<16x16xf32>
    %119 = arith.addf %117, %118 : vector<16x16xf32>
    %120 = arith.negf %119 : vector<16x16xf32>
    %121 = math.exp %120 : vector<16x16xf32>
    %cst_47 = arith.constant 1.000000e+00 : f32
    %122 = vector.broadcast %cst_47 : f32 to vector<16x16xf32>
    %123 = arith.addf %122, %121 : vector<16x16xf32>
    %124 = arith.divf %122, %123 : vector<16x16xf32>
    %125 = vector.extract_strided_slice %103 {offsets = [0, 32], sizes = [16, 16], strides = [1, 1]} : vector<16x48xf32> to vector<16x16xf32>
    %126 = vector.extract_strided_slice %107 {offsets = [0, 32], sizes = [16, 16], strides = [1, 1]} : vector<16x48xf32> to vector<16x16xf32>
    %127 = vector.broadcast %18 : vector<1x16xf32> to vector<16x16xf32>
    %128 = arith.addf %126, %127 : vector<16x16xf32>
    %129 = arith.mulf %116, %128 : vector<16x16xf32>
    %130 = arith.addf %125, %129 : vector<16x16xf32>
    %131 = math.tanh %130 : vector<16x16xf32>
    %cst_48 = arith.constant 1.000000e+00 : f32
    %132 = vector.broadcast %cst_48 : f32 to vector<16x16xf32>
    %133 = arith.subf %132, %124 : vector<16x16xf32>
    %134 = arith.mulf %133, %131 : vector<16x16xf32>
    %135 = arith.mulf %124, %108 : vector<16x16xf32>
    %136 = arith.addf %134, %135 : vector<16x16xf32>
    %137 = vector.extract_strided_slice %100 {offsets = [0, 48], sizes = [16, 48], strides = [1, 1]} : vector<16x96xf32> to vector<16x48xf32>
    %138 = vector.extract_strided_slice %98 {offsets = [0, 16], sizes = [16, 16], strides = [1, 1]} : vector<16x32xf32> to vector<16x16xf32>
    %139 = vector.extract_strided_slice %106 {offsets = [0, 0], sizes = [16, 16], strides = [1, 1]} : vector<16x48xf32> to vector<16x16xf32>
    %140 = vector.extract_strided_slice %137 {offsets = [0, 0], sizes = [16, 16], strides = [1, 1]} : vector<16x48xf32> to vector<16x16xf32>
    %141 = arith.addf %139, %140 : vector<16x16xf32>
    %142 = arith.negf %141 : vector<16x16xf32>
    %143 = math.exp %142 : vector<16x16xf32>
    %cst_49 = arith.constant 1.000000e+00 : f32
    %144 = vector.broadcast %cst_49 : f32 to vector<16x16xf32>
    %145 = arith.addf %144, %143 : vector<16x16xf32>
    %146 = arith.divf %144, %145 : vector<16x16xf32>
    %147 = vector.extract_strided_slice %106 {offsets = [0, 16], sizes = [16, 16], strides = [1, 1]} : vector<16x48xf32> to vector<16x16xf32>
    %148 = vector.extract_strided_slice %137 {offsets = [0, 16], sizes = [16, 16], strides = [1, 1]} : vector<16x48xf32> to vector<16x16xf32>
    %149 = arith.addf %147, %148 : vector<16x16xf32>
    %150 = arith.negf %149 : vector<16x16xf32>
    %151 = math.exp %150 : vector<16x16xf32>
    %cst_50 = arith.constant 1.000000e+00 : f32
    %152 = vector.broadcast %cst_50 : f32 to vector<16x16xf32>
    %153 = arith.addf %152, %151 : vector<16x16xf32>
    %154 = arith.divf %152, %153 : vector<16x16xf32>
    %155 = vector.extract_strided_slice %106 {offsets = [0, 32], sizes = [16, 16], strides = [1, 1]} : vector<16x48xf32> to vector<16x16xf32>
    %156 = vector.extract_strided_slice %137 {offsets = [0, 32], sizes = [16, 16], strides = [1, 1]} : vector<16x48xf32> to vector<16x16xf32>
    %157 = vector.broadcast %20 : vector<1x16xf32> to vector<16x16xf32>
    %158 = arith.addf %156, %157 : vector<16x16xf32>
    %159 = arith.mulf %146, %158 : vector<16x16xf32>
    %160 = arith.addf %155, %159 : vector<16x16xf32>
    %161 = math.tanh %160 : vector<16x16xf32>
    %cst_51 = arith.constant 1.000000e+00 : f32
    %162 = vector.broadcast %cst_51 : f32 to vector<16x16xf32>
    %163 = arith.subf %162, %154 : vector<16x16xf32>
    %164 = arith.mulf %163, %161 : vector<16x16xf32>
    %165 = arith.mulf %154, %138 : vector<16x16xf32>
    %166 = arith.addf %164, %165 : vector<16x16xf32>
    %167 = arith.index_cast %c1_i32 : i32 to index
    %c0_52 = arith.constant 0 : index
    %c0_53 = arith.constant 0 : index
    %168 = vector.load %arg11[%167, %c0_52, %c0_53] : memref<8x16x32xf32, #tpu.memory_space<vmem>>, vector<1x16x16xf32>
    %169 = vector.shape_cast %168 : vector<1x16x16xf32> to vector<16x16xf32>
    %170 = vector.shape_cast %136 : vector<16x16xf32> to vector<1x16x16xf32>
    tpu.vector_store %arg11[%167, %c0_52, %c0_53], %170 {strides = array<i32>} : memref<8x16x32xf32, #tpu.memory_space<vmem>>, vector<1x16x16xf32>,
    %171 = arith.index_cast %99 : i32 to index
    %c0_54 = arith.constant 0 : index
    %c16_55 = arith.constant 16 : index
    %172 = vector.load %arg11[%171, %c0_54, %c16_55] : memref<8x16x32xf32, #tpu.memory_space<vmem>>, vector<1x16x16xf32>
    %173 = vector.shape_cast %172 : vector<1x16x16xf32> to vector<16x16xf32>
    %174 = vector.shape_cast %166 : vector<16x16xf32> to vector<1x16x16xf32>
    tpu.vector_store %arg11[%171, %c0_54, %c16_55], %174 {strides = array<i32>} : memref<8x16x32xf32, #tpu.memory_space<vmem>>, vector<1x16x16xf32>,
    %175 = tpu.concatenate %136, %166 in 1 : vector<16x16xf32>, vector<16x16xf32> -> vector<16x32xf32>
    %c2_i32 = arith.constant 2 : i32
    %c7_i32_56 = arith.constant 7 : i32
    %176 = arith.subi %c7_i32_56, %c2_i32 : i32
    %cst_57 = arith.constant dense<0.000000e+00> : vector<16x96xf32>
    %177 = tpu.matmul %175, %16, %cst_57 {dimension_numbers = #tpu.dot_dimension_numbers<[1], [0], [0], [1], [0, 0, 1, 1], [], []>} : vector<16x32xf32>, vector<32x96xf32>, vector<16x96xf32> -> vector<16x96xf32>
    %c0_58 = arith.constant 0 : index
    %178 = arith.index_cast %c2_i32 : i32 to index
    %c0_59 = arith.constant 0 : index
    %c0_60 = arith.constant 0 : index
    %179 = vector.load %arg10[%c0_58, %178, %c0_59, %c0_60] : memref<2x8x16x48xf32, #tpu.memory_space<vmem>>, vector<1x1x16x48xf32>
    %180 = vector.shape_cast %179 : vector<1x1x16x48xf32> to vector<16x48xf32>
    %c1_61 = arith.constant 1 : index
    %181 = arith.index_cast %176 : i32 to index
    %c0_62 = arith.constant 0 : index
    %c0_63 = arith.constant 0 : index
    %182 = vector.load %arg10[%c1_61, %181, %c0_62, %c0_63] : memref<2x8x16x48xf32, #tpu.memory_space<vmem>>, vector<1x1x16x48xf32>
    %183 = vector.shape_cast %182 : vector<1x1x16x48xf32> to vector<16x48xf32>
    %184 = vector.extract_strided_slice %177 {offsets = [0, 0], sizes = [16, 48], strides = [1, 1]} : vector<16x96xf32> to vector<16x48xf32>
    %185 = vector.extract_strided_slice %175 {offsets = [0, 0], sizes = [16, 16], strides = [1, 1]} : vector<16x32xf32> to vector<16x16xf32>
    %186 = vector.extract_strided_slice %180 {offsets = [0, 0], sizes = [16, 16], strides = [1, 1]} : vector<16x48xf32> to vector<16x16xf32>
    %187 = vector.extract_strided_slice %184 {offsets = [0, 0], sizes = [16, 16], strides = [1, 1]} : vector<16x48xf32> to vector<16x16xf32>
    %188 = arith.addf %186, %187 : vector<16x16xf32>
    %189 = arith.negf %188 : vector<16x16xf32>
    %190 = math.exp %189 : vector<16x16xf32>
    %cst_64 = arith.constant 1.000000e+00 : f32
    %191 = vector.broadcast %cst_64 : f32 to vector<16x16xf32>
    %192 = arith.addf %191, %190 : vector<16x16xf32>
    %193 = arith.divf %191, %192 : vector<16x16xf32>
    %194 = vector.extract_strided_slice %180 {offsets = [0, 16], sizes = [16, 16], strides = [1, 1]} : vector<16x48xf32> to vector<16x16xf32>
    %195 = vector.extract_strided_slice %184 {offsets = [0, 16], sizes = [16, 16], strides = [1, 1]} : vector<16x48xf32> to vector<16x16xf32>
    %196 = arith.addf %194, %195 : vector<16x16xf32>
    %197 = arith.negf %196 : vector<16x16xf32>
    %198 = math.exp %197 : vector<16x16xf32>
    %cst_65 = arith.constant 1.000000e+00 : f32
    %199 = vector.broadcast %cst_65 : f32 to vector<16x16xf32>
    %200 = arith.addf %199, %198 : vector<16x16xf32>
    %201 = arith.divf %199, %200 : vector<16x16xf32>
    %202 = vector.extract_strided_slice %180 {offsets = [0, 32], sizes = [16, 16], strides = [1, 1]} : vector<16x48xf32> to vector<16x16xf32>
    %203 = vector.extract_strided_slice %184 {offsets = [0, 32], sizes = [16, 16], strides = [1, 1]} : vector<16x48xf32> to vector<16x16xf32>
    %204 = vector.broadcast %18 : vector<1x16xf32> to vector<16x16xf32>
    %205 = arith.addf %203, %204 : vector<16x16xf32>
    %206 = arith.mulf %193, %205 : vector<16x16xf32>
    %207 = arith.addf %202, %206 : vector<16x16xf32>
    %208 = math.tanh %207 : vector<16x16xf32>
    %cst_66 = arith.constant 1.000000e+00 : f32
    %209 = vector.broadcast %cst_66 : f32 to vector<16x16xf32>
    %210 = arith.subf %209, %201 : vector<16x16xf32>
    %211 = arith.mulf %210, %208 : vector<16x16xf32>
    %212 = arith.mulf %201, %185 : vector<16x16xf32>
    %213 = arith.addf %211, %212 : vector<16x16xf32>
    %214 = vector.extract_strided_slice %177 {offsets = [0, 48], sizes = [16, 48], strides = [1, 1]} : vector<16x96xf32> to vector<16x48xf32>
    %215 = vector.extract_strided_slice %175 {offsets = [0, 16], sizes = [16, 16], strides = [1, 1]} : vector<16x32xf32> to vector<16x16xf32>
    %216 = vector.extract_strided_slice %183 {offsets = [0, 0], sizes = [16, 16], strides = [1, 1]} : vector<16x48xf32> to vector<16x16xf32>
    %217 = vector.extract_strided_slice %214 {offsets = [0, 0], sizes = [16, 16], strides = [1, 1]} : vector<16x48xf32> to vector<16x16xf32>
    %218 = arith.addf %216, %217 : vector<16x16xf32>
    %219 = arith.negf %218 : vector<16x16xf32>
    %220 = math.exp %219 : vector<16x16xf32>
    %cst_67 = arith.constant 1.000000e+00 : f32
    %221 = vector.broadcast %cst_67 : f32 to vector<16x16xf32>
    %222 = arith.addf %221, %220 : vector<16x16xf32>
    %223 = arith.divf %221, %222 : vector<16x16xf32>
    %224 = vector.extract_strided_slice %183 {offsets = [0, 16], sizes = [16, 16], strides = [1, 1]} : vector<16x48xf32> to vector<16x16xf32>
    %225 = vector.extract_strided_slice %214 {offsets = [0, 16], sizes = [16, 16], strides = [1, 1]} : vector<16x48xf32> to vector<16x16xf32>
    %226 = arith.addf %224, %225 : vector<16x16xf32>
    %227 = arith.negf %226 : vector<16x16xf32>
    %228 = math.exp %227 : vector<16x16xf32>
    %cst_68 = arith.constant 1.000000e+00 : f32
    %229 = vector.broadcast %cst_68 : f32 to vector<16x16xf32>
    %230 = arith.addf %229, %228 : vector<16x16xf32>
    %231 = arith.divf %229, %230 : vector<16x16xf32>
    %232 = vector.extract_strided_slice %183 {offsets = [0, 32], sizes = [16, 16], strides = [1, 1]} : vector<16x48xf32> to vector<16x16xf32>
    %233 = vector.extract_strided_slice %214 {offsets = [0, 32], sizes = [16, 16], strides = [1, 1]} : vector<16x48xf32> to vector<16x16xf32>
    %234 = vector.broadcast %20 : vector<1x16xf32> to vector<16x16xf32>
    %235 = arith.addf %233, %234 : vector<16x16xf32>
    %236 = arith.mulf %223, %235 : vector<16x16xf32>
    %237 = arith.addf %232, %236 : vector<16x16xf32>
    %238 = math.tanh %237 : vector<16x16xf32>
    %cst_69 = arith.constant 1.000000e+00 : f32
    %239 = vector.broadcast %cst_69 : f32 to vector<16x16xf32>
    %240 = arith.subf %239, %231 : vector<16x16xf32>
    %241 = arith.mulf %240, %238 : vector<16x16xf32>
    %242 = arith.mulf %231, %215 : vector<16x16xf32>
    %243 = arith.addf %241, %242 : vector<16x16xf32>
    %244 = arith.index_cast %c2_i32 : i32 to index
    %c0_70 = arith.constant 0 : index
    %c0_71 = arith.constant 0 : index
    %245 = vector.load %arg11[%244, %c0_70, %c0_71] : memref<8x16x32xf32, #tpu.memory_space<vmem>>, vector<1x16x16xf32>
    %246 = vector.shape_cast %245 : vector<1x16x16xf32> to vector<16x16xf32>
    %247 = vector.shape_cast %213 : vector<16x16xf32> to vector<1x16x16xf32>
    tpu.vector_store %arg11[%244, %c0_70, %c0_71], %247 {strides = array<i32>} : memref<8x16x32xf32, #tpu.memory_space<vmem>>, vector<1x16x16xf32>,
    %248 = arith.index_cast %176 : i32 to index
    %c0_72 = arith.constant 0 : index
    %c16_73 = arith.constant 16 : index
    %249 = vector.load %arg11[%248, %c0_72, %c16_73] : memref<8x16x32xf32, #tpu.memory_space<vmem>>, vector<1x16x16xf32>
    %250 = vector.shape_cast %249 : vector<1x16x16xf32> to vector<16x16xf32>
    %251 = vector.shape_cast %243 : vector<16x16xf32> to vector<1x16x16xf32>
    tpu.vector_store %arg11[%248, %c0_72, %c16_73], %251 {strides = array<i32>} : memref<8x16x32xf32, #tpu.memory_space<vmem>>, vector<1x16x16xf32>,
    %252 = tpu.concatenate %213, %243 in 1 : vector<16x16xf32>, vector<16x16xf32> -> vector<16x32xf32>
    %c3_i32 = arith.constant 3 : i32
    %c7_i32_74 = arith.constant 7 : i32
    %253 = arith.subi %c7_i32_74, %c3_i32 : i32
    %cst_75 = arith.constant dense<0.000000e+00> : vector<16x96xf32>
    %254 = tpu.matmul %252, %16, %cst_75 {dimension_numbers = #tpu.dot_dimension_numbers<[1], [0], [0], [1], [0, 0, 1, 1], [], []>} : vector<16x32xf32>, vector<32x96xf32>, vector<16x96xf32> -> vector<16x96xf32>
    %c0_76 = arith.constant 0 : index
    %255 = arith.index_cast %c3_i32 : i32 to index
    %c0_77 = arith.constant 0 : index
    %c0_78 = arith.constant 0 : index
    %256 = vector.load %arg10[%c0_76, %255, %c0_77, %c0_78] : memref<2x8x16x48xf32, #tpu.memory_space<vmem>>, vector<1x1x16x48xf32>
    %257 = vector.shape_cast %256 : vector<1x1x16x48xf32> to vector<16x48xf32>
    %c1_79 = arith.constant 1 : index
    %258 = arith.index_cast %253 : i32 to index
    %c0_80 = arith.constant 0 : index
    %c0_81 = arith.constant 0 : index
    %259 = vector.load %arg10[%c1_79, %258, %c0_80, %c0_81] : memref<2x8x16x48xf32, #tpu.memory_space<vmem>>, vector<1x1x16x48xf32>
    %260 = vector.shape_cast %259 : vector<1x1x16x48xf32> to vector<16x48xf32>
    %261 = vector.extract_strided_slice %254 {offsets = [0, 0], sizes = [16, 48], strides = [1, 1]} : vector<16x96xf32> to vector<16x48xf32>
    %262 = vector.extract_strided_slice %252 {offsets = [0, 0], sizes = [16, 16], strides = [1, 1]} : vector<16x32xf32> to vector<16x16xf32>
    %263 = vector.extract_strided_slice %257 {offsets = [0, 0], sizes = [16, 16], strides = [1, 1]} : vector<16x48xf32> to vector<16x16xf32>
    %264 = vector.extract_strided_slice %261 {offsets = [0, 0], sizes = [16, 16], strides = [1, 1]} : vector<16x48xf32> to vector<16x16xf32>
    %265 = arith.addf %263, %264 : vector<16x16xf32>
    %266 = arith.negf %265 : vector<16x16xf32>
    %267 = math.exp %266 : vector<16x16xf32>
    %cst_82 = arith.constant 1.000000e+00 : f32
    %268 = vector.broadcast %cst_82 : f32 to vector<16x16xf32>
    %269 = arith.addf %268, %267 : vector<16x16xf32>
    %270 = arith.divf %268, %269 : vector<16x16xf32>
    %271 = vector.extract_strided_slice %257 {offsets = [0, 16], sizes = [16, 16], strides = [1, 1]} : vector<16x48xf32> to vector<16x16xf32>
    %272 = vector.extract_strided_slice %261 {offsets = [0, 16], sizes = [16, 16], strides = [1, 1]} : vector<16x48xf32> to vector<16x16xf32>
    %273 = arith.addf %271, %272 : vector<16x16xf32>
    %274 = arith.negf %273 : vector<16x16xf32>
    %275 = math.exp %274 : vector<16x16xf32>
    %cst_83 = arith.constant 1.000000e+00 : f32
    %276 = vector.broadcast %cst_83 : f32 to vector<16x16xf32>
    %277 = arith.addf %276, %275 : vector<16x16xf32>
    %278 = arith.divf %276, %277 : vector<16x16xf32>
    %279 = vector.extract_strided_slice %257 {offsets = [0, 32], sizes = [16, 16], strides = [1, 1]} : vector<16x48xf32> to vector<16x16xf32>
    %280 = vector.extract_strided_slice %261 {offsets = [0, 32], sizes = [16, 16], strides = [1, 1]} : vector<16x48xf32> to vector<16x16xf32>
    %281 = vector.broadcast %18 : vector<1x16xf32> to vector<16x16xf32>
    %282 = arith.addf %280, %281 : vector<16x16xf32>
    %283 = arith.mulf %270, %282 : vector<16x16xf32>
    %284 = arith.addf %279, %283 : vector<16x16xf32>
    %285 = math.tanh %284 : vector<16x16xf32>
    %cst_84 = arith.constant 1.000000e+00 : f32
    %286 = vector.broadcast %cst_84 : f32 to vector<16x16xf32>
    %287 = arith.subf %286, %278 : vector<16x16xf32>
    %288 = arith.mulf %287, %285 : vector<16x16xf32>
    %289 = arith.mulf %278, %262 : vector<16x16xf32>
    %290 = arith.addf %288, %289 : vector<16x16xf32>
    %291 = vector.extract_strided_slice %254 {offsets = [0, 48], sizes = [16, 48], strides = [1, 1]} : vector<16x96xf32> to vector<16x48xf32>
    %292 = vector.extract_strided_slice %252 {offsets = [0, 16], sizes = [16, 16], strides = [1, 1]} : vector<16x32xf32> to vector<16x16xf32>
    %293 = vector.extract_strided_slice %260 {offsets = [0, 0], sizes = [16, 16], strides = [1, 1]} : vector<16x48xf32> to vector<16x16xf32>
    %294 = vector.extract_strided_slice %291 {offsets = [0, 0], sizes = [16, 16], strides = [1, 1]} : vector<16x48xf32> to vector<16x16xf32>
    %295 = arith.addf %293, %294 : vector<16x16xf32>
    %296 = arith.negf %295 : vector<16x16xf32>
    %297 = math.exp %296 : vector<16x16xf32>
    %cst_85 = arith.constant 1.000000e+00 : f32
    %298 = vector.broadcast %cst_85 : f32 to vector<16x16xf32>
    %299 = arith.addf %298, %297 : vector<16x16xf32>
    %300 = arith.divf %298, %299 : vector<16x16xf32>
    %301 = vector.extract_strided_slice %260 {offsets = [0, 16], sizes = [16, 16], strides = [1, 1]} : vector<16x48xf32> to vector<16x16xf32>
    %302 = vector.extract_strided_slice %291 {offsets = [0, 16], sizes = [16, 16], strides = [1, 1]} : vector<16x48xf32> to vector<16x16xf32>
    %303 = arith.addf %301, %302 : vector<16x16xf32>
    %304 = arith.negf %303 : vector<16x16xf32>
    %305 = math.exp %304 : vector<16x16xf32>
    %cst_86 = arith.constant 1.000000e+00 : f32
    %306 = vector.broadcast %cst_86 : f32 to vector<16x16xf32>
    %307 = arith.addf %306, %305 : vector<16x16xf32>
    %308 = arith.divf %306, %307 : vector<16x16xf32>
    %309 = vector.extract_strided_slice %260 {offsets = [0, 32], sizes = [16, 16], strides = [1, 1]} : vector<16x48xf32> to vector<16x16xf32>
    %310 = vector.extract_strided_slice %291 {offsets = [0, 32], sizes = [16, 16], strides = [1, 1]} : vector<16x48xf32> to vector<16x16xf32>
    %311 = vector.broadcast %20 : vector<1x16xf32> to vector<16x16xf32>
    %312 = arith.addf %310, %311 : vector<16x16xf32>
    %313 = arith.mulf %300, %312 : vector<16x16xf32>
    %314 = arith.addf %309, %313 : vector<16x16xf32>
    %315 = math.tanh %314 : vector<16x16xf32>
    %cst_87 = arith.constant 1.000000e+00 : f32
    %316 = vector.broadcast %cst_87 : f32 to vector<16x16xf32>
    %317 = arith.subf %316, %308 : vector<16x16xf32>
    %318 = arith.mulf %317, %315 : vector<16x16xf32>
    %319 = arith.mulf %308, %292 : vector<16x16xf32>
    %320 = arith.addf %318, %319 : vector<16x16xf32>
    %321 = arith.index_cast %c3_i32 : i32 to index
    %c0_88 = arith.constant 0 : index
    %c0_89 = arith.constant 0 : index
    %322 = vector.load %arg11[%321, %c0_88, %c0_89] : memref<8x16x32xf32, #tpu.memory_space<vmem>>, vector<1x16x16xf32>
    %323 = vector.shape_cast %322 : vector<1x16x16xf32> to vector<16x16xf32>
    %324 = vector.shape_cast %290 : vector<16x16xf32> to vector<1x16x16xf32>
    tpu.vector_store %arg11[%321, %c0_88, %c0_89], %324 {strides = array<i32>} : memref<8x16x32xf32, #tpu.memory_space<vmem>>, vector<1x16x16xf32>,
    %325 = arith.index_cast %253 : i32 to index
    %c0_90 = arith.constant 0 : index
    %c16_91 = arith.constant 16 : index
    %326 = vector.load %arg11[%325, %c0_90, %c16_91] : memref<8x16x32xf32, #tpu.memory_space<vmem>>, vector<1x16x16xf32>
    %327 = vector.shape_cast %326 : vector<1x16x16xf32> to vector<16x16xf32>
    %328 = vector.shape_cast %320 : vector<16x16xf32> to vector<1x16x16xf32>
    tpu.vector_store %arg11[%325, %c0_90, %c16_91], %328 {strides = array<i32>} : memref<8x16x32xf32, #tpu.memory_space<vmem>>, vector<1x16x16xf32>,
    %329 = tpu.concatenate %290, %320 in 1 : vector<16x16xf32>, vector<16x16xf32> -> vector<16x32xf32>
    %c4_i32 = arith.constant 4 : i32
    %c7_i32_92 = arith.constant 7 : i32
    %330 = arith.subi %c7_i32_92, %c4_i32 : i32
    %cst_93 = arith.constant dense<0.000000e+00> : vector<16x96xf32>
    %331 = tpu.matmul %329, %16, %cst_93 {dimension_numbers = #tpu.dot_dimension_numbers<[1], [0], [0], [1], [0, 0, 1, 1], [], []>} : vector<16x32xf32>, vector<32x96xf32>, vector<16x96xf32> -> vector<16x96xf32>
    %c0_94 = arith.constant 0 : index
    %332 = arith.index_cast %c4_i32 : i32 to index
    %c0_95 = arith.constant 0 : index
    %c0_96 = arith.constant 0 : index
    %333 = vector.load %arg10[%c0_94, %332, %c0_95, %c0_96] : memref<2x8x16x48xf32, #tpu.memory_space<vmem>>, vector<1x1x16x48xf32>
    %334 = vector.shape_cast %333 : vector<1x1x16x48xf32> to vector<16x48xf32>
    %c1_97 = arith.constant 1 : index
    %335 = arith.index_cast %330 : i32 to index
    %c0_98 = arith.constant 0 : index
    %c0_99 = arith.constant 0 : index
    %336 = vector.load %arg10[%c1_97, %335, %c0_98, %c0_99] : memref<2x8x16x48xf32, #tpu.memory_space<vmem>>, vector<1x1x16x48xf32>
    %337 = vector.shape_cast %336 : vector<1x1x16x48xf32> to vector<16x48xf32>
    %338 = vector.extract_strided_slice %331 {offsets = [0, 0], sizes = [16, 48], strides = [1, 1]} : vector<16x96xf32> to vector<16x48xf32>
    %339 = vector.extract_strided_slice %329 {offsets = [0, 0], sizes = [16, 16], strides = [1, 1]} : vector<16x32xf32> to vector<16x16xf32>
    %340 = vector.extract_strided_slice %334 {offsets = [0, 0], sizes = [16, 16], strides = [1, 1]} : vector<16x48xf32> to vector<16x16xf32>
    %341 = vector.extract_strided_slice %338 {offsets = [0, 0], sizes = [16, 16], strides = [1, 1]} : vector<16x48xf32> to vector<16x16xf32>
    %342 = arith.addf %340, %341 : vector<16x16xf32>
    %343 = arith.negf %342 : vector<16x16xf32>
    %344 = math.exp %343 : vector<16x16xf32>
    %cst_100 = arith.constant 1.000000e+00 : f32
    %345 = vector.broadcast %cst_100 : f32 to vector<16x16xf32>
    %346 = arith.addf %345, %344 : vector<16x16xf32>
    %347 = arith.divf %345, %346 : vector<16x16xf32>
    %348 = vector.extract_strided_slice %334 {offsets = [0, 16], sizes = [16, 16], strides = [1, 1]} : vector<16x48xf32> to vector<16x16xf32>
    %349 = vector.extract_strided_slice %338 {offsets = [0, 16], sizes = [16, 16], strides = [1, 1]} : vector<16x48xf32> to vector<16x16xf32>
    %350 = arith.addf %348, %349 : vector<16x16xf32>
    %351 = arith.negf %350 : vector<16x16xf32>
    %352 = math.exp %351 : vector<16x16xf32>
    %cst_101 = arith.constant 1.000000e+00 : f32
    %353 = vector.broadcast %cst_101 : f32 to vector<16x16xf32>
    %354 = arith.addf %353, %352 : vector<16x16xf32>
    %355 = arith.divf %353, %354 : vector<16x16xf32>
    %356 = vector.extract_strided_slice %334 {offsets = [0, 32], sizes = [16, 16], strides = [1, 1]} : vector<16x48xf32> to vector<16x16xf32>
    %357 = vector.extract_strided_slice %338 {offsets = [0, 32], sizes = [16, 16], strides = [1, 1]} : vector<16x48xf32> to vector<16x16xf32>
    %358 = vector.broadcast %18 : vector<1x16xf32> to vector<16x16xf32>
    %359 = arith.addf %357, %358 : vector<16x16xf32>
    %360 = arith.mulf %347, %359 : vector<16x16xf32>
    %361 = arith.addf %356, %360 : vector<16x16xf32>
    %362 = math.tanh %361 : vector<16x16xf32>
    %cst_102 = arith.constant 1.000000e+00 : f32
    %363 = vector.broadcast %cst_102 : f32 to vector<16x16xf32>
    %364 = arith.subf %363, %355 : vector<16x16xf32>
    %365 = arith.mulf %364, %362 : vector<16x16xf32>
    %366 = arith.mulf %355, %339 : vector<16x16xf32>
    %367 = arith.addf %365, %366 : vector<16x16xf32>
    %368 = vector.extract_strided_slice %331 {offsets = [0, 48], sizes = [16, 48], strides = [1, 1]} : vector<16x96xf32> to vector<16x48xf32>
    %369 = vector.extract_strided_slice %329 {offsets = [0, 16], sizes = [16, 16], strides = [1, 1]} : vector<16x32xf32> to vector<16x16xf32>
    %370 = vector.extract_strided_slice %337 {offsets = [0, 0], sizes = [16, 16], strides = [1, 1]} : vector<16x48xf32> to vector<16x16xf32>
    %371 = vector.extract_strided_slice %368 {offsets = [0, 0], sizes = [16, 16], strides = [1, 1]} : vector<16x48xf32> to vector<16x16xf32>
    %372 = arith.addf %370, %371 : vector<16x16xf32>
    %373 = arith.negf %372 : vector<16x16xf32>
    %374 = math.exp %373 : vector<16x16xf32>
    %cst_103 = arith.constant 1.000000e+00 : f32
    %375 = vector.broadcast %cst_103 : f32 to vector<16x16xf32>
    %376 = arith.addf %375, %374 : vector<16x16xf32>
    %377 = arith.divf %375, %376 : vector<16x16xf32>
    %378 = vector.extract_strided_slice %337 {offsets = [0, 16], sizes = [16, 16], strides = [1, 1]} : vector<16x48xf32> to vector<16x16xf32>
    %379 = vector.extract_strided_slice %368 {offsets = [0, 16], sizes = [16, 16], strides = [1, 1]} : vector<16x48xf32> to vector<16x16xf32>
    %380 = arith.addf %378, %379 : vector<16x16xf32>
    %381 = arith.negf %380 : vector<16x16xf32>
    %382 = math.exp %381 : vector<16x16xf32>
    %cst_104 = arith.constant 1.000000e+00 : f32
    %383 = vector.broadcast %cst_104 : f32 to vector<16x16xf32>
    %384 = arith.addf %383, %382 : vector<16x16xf32>
    %385 = arith.divf %383, %384 : vector<16x16xf32>
    %386 = vector.extract_strided_slice %337 {offsets = [0, 32], sizes = [16, 16], strides = [1, 1]} : vector<16x48xf32> to vector<16x16xf32>
    %387 = vector.extract_strided_slice %368 {offsets = [0, 32], sizes = [16, 16], strides = [1, 1]} : vector<16x48xf32> to vector<16x16xf32>
    %388 = vector.broadcast %20 : vector<1x16xf32> to vector<16x16xf32>
    %389 = arith.addf %387, %388 : vector<16x16xf32>
    %390 = arith.mulf %377, %389 : vector<16x16xf32>
    %391 = arith.addf %386, %390 : vector<16x16xf32>
    %392 = math.tanh %391 : vector<16x16xf32>
    %cst_105 = arith.constant 1.000000e+00 : f32
    %393 = vector.broadcast %cst_105 : f32 to vector<16x16xf32>
    %394 = arith.subf %393, %385 : vector<16x16xf32>
    %395 = arith.mulf %394, %392 : vector<16x16xf32>
    %396 = arith.mulf %385, %369 : vector<16x16xf32>
    %397 = arith.addf %395, %396 : vector<16x16xf32>
    %398 = arith.index_cast %c4_i32 : i32 to index
    %c0_106 = arith.constant 0 : index
    %c0_107 = arith.constant 0 : index
    %399 = vector.load %arg11[%398, %c0_106, %c0_107] : memref<8x16x32xf32, #tpu.memory_space<vmem>>, vector<1x16x16xf32>
    %400 = vector.shape_cast %399 : vector<1x16x16xf32> to vector<16x16xf32>
    %401 = vector.shape_cast %367 : vector<16x16xf32> to vector<1x16x16xf32>
    tpu.vector_store %arg11[%398, %c0_106, %c0_107], %401 {strides = array<i32>} : memref<8x16x32xf32, #tpu.memory_space<vmem>>, vector<1x16x16xf32>,
    %402 = arith.index_cast %330 : i32 to index
    %c0_108 = arith.constant 0 : index
    %c16_109 = arith.constant 16 : index
    %403 = vector.load %arg11[%402, %c0_108, %c16_109] : memref<8x16x32xf32, #tpu.memory_space<vmem>>, vector<1x16x16xf32>
    %404 = vector.shape_cast %403 : vector<1x16x16xf32> to vector<16x16xf32>
    %405 = vector.shape_cast %397 : vector<16x16xf32> to vector<1x16x16xf32>
    tpu.vector_store %arg11[%402, %c0_108, %c16_109], %405 {strides = array<i32>} : memref<8x16x32xf32, #tpu.memory_space<vmem>>, vector<1x16x16xf32>,
    %406 = tpu.concatenate %367, %397 in 1 : vector<16x16xf32>, vector<16x16xf32> -> vector<16x32xf32>
    %c5_i32 = arith.constant 5 : i32
    %c7_i32_110 = arith.constant 7 : i32
    %407 = arith.subi %c7_i32_110, %c5_i32 : i32
    %cst_111 = arith.constant dense<0.000000e+00> : vector<16x96xf32>
    %408 = tpu.matmul %406, %16, %cst_111 {dimension_numbers = #tpu.dot_dimension_numbers<[1], [0], [0], [1], [0, 0, 1, 1], [], []>} : vector<16x32xf32>, vector<32x96xf32>, vector<16x96xf32> -> vector<16x96xf32>
    %c0_112 = arith.constant 0 : index
    %409 = arith.index_cast %c5_i32 : i32 to index
    %c0_113 = arith.constant 0 : index
    %c0_114 = arith.constant 0 : index
    %410 = vector.load %arg10[%c0_112, %409, %c0_113, %c0_114] : memref<2x8x16x48xf32, #tpu.memory_space<vmem>>, vector<1x1x16x48xf32>
    %411 = vector.shape_cast %410 : vector<1x1x16x48xf32> to vector<16x48xf32>
    %c1_115 = arith.constant 1 : index
    %412 = arith.index_cast %407 : i32 to index
    %c0_116 = arith.constant 0 : index
    %c0_117 = arith.constant 0 : index
    %413 = vector.load %arg10[%c1_115, %412, %c0_116, %c0_117] : memref<2x8x16x48xf32, #tpu.memory_space<vmem>>, vector<1x1x16x48xf32>
    %414 = vector.shape_cast %413 : vector<1x1x16x48xf32> to vector<16x48xf32>
    %415 = vector.extract_strided_slice %408 {offsets = [0, 0], sizes = [16, 48], strides = [1, 1]} : vector<16x96xf32> to vector<16x48xf32>
    %416 = vector.extract_strided_slice %406 {offsets = [0, 0], sizes = [16, 16], strides = [1, 1]} : vector<16x32xf32> to vector<16x16xf32>
    %417 = vector.extract_strided_slice %411 {offsets = [0, 0], sizes = [16, 16], strides = [1, 1]} : vector<16x48xf32> to vector<16x16xf32>
    %418 = vector.extract_strided_slice %415 {offsets = [0, 0], sizes = [16, 16], strides = [1, 1]} : vector<16x48xf32> to vector<16x16xf32>
    %419 = arith.addf %417, %418 : vector<16x16xf32>
    %420 = arith.negf %419 : vector<16x16xf32>
    %421 = math.exp %420 : vector<16x16xf32>
    %cst_118 = arith.constant 1.000000e+00 : f32
    %422 = vector.broadcast %cst_118 : f32 to vector<16x16xf32>
    %423 = arith.addf %422, %421 : vector<16x16xf32>
    %424 = arith.divf %422, %423 : vector<16x16xf32>
    %425 = vector.extract_strided_slice %411 {offsets = [0, 16], sizes = [16, 16], strides = [1, 1]} : vector<16x48xf32> to vector<16x16xf32>
    %426 = vector.extract_strided_slice %415 {offsets = [0, 16], sizes = [16, 16], strides = [1, 1]} : vector<16x48xf32> to vector<16x16xf32>
    %427 = arith.addf %425, %426 : vector<16x16xf32>
    %428 = arith.negf %427 : vector<16x16xf32>
    %429 = math.exp %428 : vector<16x16xf32>
    %cst_119 = arith.constant 1.000000e+00 : f32
    %430 = vector.broadcast %cst_119 : f32 to vector<16x16xf32>
    %431 = arith.addf %430, %429 : vector<16x16xf32>
    %432 = arith.divf %430, %431 : vector<16x16xf32>
    %433 = vector.extract_strided_slice %411 {offsets = [0, 32], sizes = [16, 16], strides = [1, 1]} : vector<16x48xf32> to vector<16x16xf32>
    %434 = vector.extract_strided_slice %415 {offsets = [0, 32], sizes = [16, 16], strides = [1, 1]} : vector<16x48xf32> to vector<16x16xf32>
    %435 = vector.broadcast %18 : vector<1x16xf32> to vector<16x16xf32>
    %436 = arith.addf %434, %435 : vector<16x16xf32>
    %437 = arith.mulf %424, %436 : vector<16x16xf32>
    %438 = arith.addf %433, %437 : vector<16x16xf32>
    %439 = math.tanh %438 : vector<16x16xf32>
    %cst_120 = arith.constant 1.000000e+00 : f32
    %440 = vector.broadcast %cst_120 : f32 to vector<16x16xf32>
    %441 = arith.subf %440, %432 : vector<16x16xf32>
    %442 = arith.mulf %441, %439 : vector<16x16xf32>
    %443 = arith.mulf %432, %416 : vector<16x16xf32>
    %444 = arith.addf %442, %443 : vector<16x16xf32>
    %445 = vector.extract_strided_slice %408 {offsets = [0, 48], sizes = [16, 48], strides = [1, 1]} : vector<16x96xf32> to vector<16x48xf32>
    %446 = vector.extract_strided_slice %406 {offsets = [0, 16], sizes = [16, 16], strides = [1, 1]} : vector<16x32xf32> to vector<16x16xf32>
    %447 = vector.extract_strided_slice %414 {offsets = [0, 0], sizes = [16, 16], strides = [1, 1]} : vector<16x48xf32> to vector<16x16xf32>
    %448 = vector.extract_strided_slice %445 {offsets = [0, 0], sizes = [16, 16], strides = [1, 1]} : vector<16x48xf32> to vector<16x16xf32>
    %449 = arith.addf %447, %448 : vector<16x16xf32>
    %450 = arith.negf %449 : vector<16x16xf32>
    %451 = math.exp %450 : vector<16x16xf32>
    %cst_121 = arith.constant 1.000000e+00 : f32
    %452 = vector.broadcast %cst_121 : f32 to vector<16x16xf32>
    %453 = arith.addf %452, %451 : vector<16x16xf32>
    %454 = arith.divf %452, %453 : vector<16x16xf32>
    %455 = vector.extract_strided_slice %414 {offsets = [0, 16], sizes = [16, 16], strides = [1, 1]} : vector<16x48xf32> to vector<16x16xf32>
    %456 = vector.extract_strided_slice %445 {offsets = [0, 16], sizes = [16, 16], strides = [1, 1]} : vector<16x48xf32> to vector<16x16xf32>
    %457 = arith.addf %455, %456 : vector<16x16xf32>
    %458 = arith.negf %457 : vector<16x16xf32>
    %459 = math.exp %458 : vector<16x16xf32>
    %cst_122 = arith.constant 1.000000e+00 : f32
    %460 = vector.broadcast %cst_122 : f32 to vector<16x16xf32>
    %461 = arith.addf %460, %459 : vector<16x16xf32>
    %462 = arith.divf %460, %461 : vector<16x16xf32>
    %463 = vector.extract_strided_slice %414 {offsets = [0, 32], sizes = [16, 16], strides = [1, 1]} : vector<16x48xf32> to vector<16x16xf32>
    %464 = vector.extract_strided_slice %445 {offsets = [0, 32], sizes = [16, 16], strides = [1, 1]} : vector<16x48xf32> to vector<16x16xf32>
    %465 = vector.broadcast %20 : vector<1x16xf32> to vector<16x16xf32>
    %466 = arith.addf %464, %465 : vector<16x16xf32>
    %467 = arith.mulf %454, %466 : vector<16x16xf32>
    %468 = arith.addf %463, %467 : vector<16x16xf32>
    %469 = math.tanh %468 : vector<16x16xf32>
    %cst_123 = arith.constant 1.000000e+00 : f32
    %470 = vector.broadcast %cst_123 : f32 to vector<16x16xf32>
    %471 = arith.subf %470, %462 : vector<16x16xf32>
    %472 = arith.mulf %471, %469 : vector<16x16xf32>
    %473 = arith.mulf %462, %446 : vector<16x16xf32>
    %474 = arith.addf %472, %473 : vector<16x16xf32>
    %475 = arith.index_cast %c5_i32 : i32 to index
    %c0_124 = arith.constant 0 : index
    %c0_125 = arith.constant 0 : index
    %476 = vector.load %arg11[%475, %c0_124, %c0_125] : memref<8x16x32xf32, #tpu.memory_space<vmem>>, vector<1x16x16xf32>
    %477 = vector.shape_cast %476 : vector<1x16x16xf32> to vector<16x16xf32>
    %478 = vector.shape_cast %444 : vector<16x16xf32> to vector<1x16x16xf32>
    tpu.vector_store %arg11[%475, %c0_124, %c0_125], %478 {strides = array<i32>} : memref<8x16x32xf32, #tpu.memory_space<vmem>>, vector<1x16x16xf32>,
    %479 = arith.index_cast %407 : i32 to index
    %c0_126 = arith.constant 0 : index
    %c16_127 = arith.constant 16 : index
    %480 = vector.load %arg11[%479, %c0_126, %c16_127] : memref<8x16x32xf32, #tpu.memory_space<vmem>>, vector<1x16x16xf32>
    %481 = vector.shape_cast %480 : vector<1x16x16xf32> to vector<16x16xf32>
    %482 = vector.shape_cast %474 : vector<16x16xf32> to vector<1x16x16xf32>
    tpu.vector_store %arg11[%479, %c0_126, %c16_127], %482 {strides = array<i32>} : memref<8x16x32xf32, #tpu.memory_space<vmem>>, vector<1x16x16xf32>,
    %483 = tpu.concatenate %444, %474 in 1 : vector<16x16xf32>, vector<16x16xf32> -> vector<16x32xf32>
    %c6_i32 = arith.constant 6 : i32
    %c7_i32_128 = arith.constant 7 : i32
    %484 = arith.subi %c7_i32_128, %c6_i32 : i32
    %cst_129 = arith.constant dense<0.000000e+00> : vector<16x96xf32>
    %485 = tpu.matmul %483, %16, %cst_129 {dimension_numbers = #tpu.dot_dimension_numbers<[1], [0], [0], [1], [0, 0, 1, 1], [], []>} : vector<16x32xf32>, vector<32x96xf32>, vector<16x96xf32> -> vector<16x96xf32>
    %c0_130 = arith.constant 0 : index
    %486 = arith.index_cast %c6_i32 : i32 to index
    %c0_131 = arith.constant 0 : index
    %c0_132 = arith.constant 0 : index
    %487 = vector.load %arg10[%c0_130, %486, %c0_131, %c0_132] : memref<2x8x16x48xf32, #tpu.memory_space<vmem>>, vector<1x1x16x48xf32>
    %488 = vector.shape_cast %487 : vector<1x1x16x48xf32> to vector<16x48xf32>
    %c1_133 = arith.constant 1 : index
    %489 = arith.index_cast %484 : i32 to index
    %c0_134 = arith.constant 0 : index
    %c0_135 = arith.constant 0 : index
    %490 = vector.load %arg10[%c1_133, %489, %c0_134, %c0_135] : memref<2x8x16x48xf32, #tpu.memory_space<vmem>>, vector<1x1x16x48xf32>
    %491 = vector.shape_cast %490 : vector<1x1x16x48xf32> to vector<16x48xf32>
    %492 = vector.extract_strided_slice %485 {offsets = [0, 0], sizes = [16, 48], strides = [1, 1]} : vector<16x96xf32> to vector<16x48xf32>
    %493 = vector.extract_strided_slice %483 {offsets = [0, 0], sizes = [16, 16], strides = [1, 1]} : vector<16x32xf32> to vector<16x16xf32>
    %494 = vector.extract_strided_slice %488 {offsets = [0, 0], sizes = [16, 16], strides = [1, 1]} : vector<16x48xf32> to vector<16x16xf32>
    %495 = vector.extract_strided_slice %492 {offsets = [0, 0], sizes = [16, 16], strides = [1, 1]} : vector<16x48xf32> to vector<16x16xf32>
    %496 = arith.addf %494, %495 : vector<16x16xf32>
    %497 = arith.negf %496 : vector<16x16xf32>
    %498 = math.exp %497 : vector<16x16xf32>
    %cst_136 = arith.constant 1.000000e+00 : f32
    %499 = vector.broadcast %cst_136 : f32 to vector<16x16xf32>
    %500 = arith.addf %499, %498 : vector<16x16xf32>
    %501 = arith.divf %499, %500 : vector<16x16xf32>
    %502 = vector.extract_strided_slice %488 {offsets = [0, 16], sizes = [16, 16], strides = [1, 1]} : vector<16x48xf32> to vector<16x16xf32>
    %503 = vector.extract_strided_slice %492 {offsets = [0, 16], sizes = [16, 16], strides = [1, 1]} : vector<16x48xf32> to vector<16x16xf32>
    %504 = arith.addf %502, %503 : vector<16x16xf32>
    %505 = arith.negf %504 : vector<16x16xf32>
    %506 = math.exp %505 : vector<16x16xf32>
    %cst_137 = arith.constant 1.000000e+00 : f32
    %507 = vector.broadcast %cst_137 : f32 to vector<16x16xf32>
    %508 = arith.addf %507, %506 : vector<16x16xf32>
    %509 = arith.divf %507, %508 : vector<16x16xf32>
    %510 = vector.extract_strided_slice %488 {offsets = [0, 32], sizes = [16, 16], strides = [1, 1]} : vector<16x48xf32> to vector<16x16xf32>
    %511 = vector.extract_strided_slice %492 {offsets = [0, 32], sizes = [16, 16], strides = [1, 1]} : vector<16x48xf32> to vector<16x16xf32>
    %512 = vector.broadcast %18 : vector<1x16xf32> to vector<16x16xf32>
    %513 = arith.addf %511, %512 : vector<16x16xf32>
    %514 = arith.mulf %501, %513 : vector<16x16xf32>
    %515 = arith.addf %510, %514 : vector<16x16xf32>
    %516 = math.tanh %515 : vector<16x16xf32>
    %cst_138 = arith.constant 1.000000e+00 : f32
    %517 = vector.broadcast %cst_138 : f32 to vector<16x16xf32>
    %518 = arith.subf %517, %509 : vector<16x16xf32>
    %519 = arith.mulf %518, %516 : vector<16x16xf32>
    %520 = arith.mulf %509, %493 : vector<16x16xf32>
    %521 = arith.addf %519, %520 : vector<16x16xf32>
    %522 = vector.extract_strided_slice %485 {offsets = [0, 48], sizes = [16, 48], strides = [1, 1]} : vector<16x96xf32> to vector<16x48xf32>
    %523 = vector.extract_strided_slice %483 {offsets = [0, 16], sizes = [16, 16], strides = [1, 1]} : vector<16x32xf32> to vector<16x16xf32>
    %524 = vector.extract_strided_slice %491 {offsets = [0, 0], sizes = [16, 16], strides = [1, 1]} : vector<16x48xf32> to vector<16x16xf32>
    %525 = vector.extract_strided_slice %522 {offsets = [0, 0], sizes = [16, 16], strides = [1, 1]} : vector<16x48xf32> to vector<16x16xf32>
    %526 = arith.addf %524, %525 : vector<16x16xf32>
    %527 = arith.negf %526 : vector<16x16xf32>
    %528 = math.exp %527 : vector<16x16xf32>
    %cst_139 = arith.constant 1.000000e+00 : f32
    %529 = vector.broadcast %cst_139 : f32 to vector<16x16xf32>
    %530 = arith.addf %529, %528 : vector<16x16xf32>
    %531 = arith.divf %529, %530 : vector<16x16xf32>
    %532 = vector.extract_strided_slice %491 {offsets = [0, 16], sizes = [16, 16], strides = [1, 1]} : vector<16x48xf32> to vector<16x16xf32>
    %533 = vector.extract_strided_slice %522 {offsets = [0, 16], sizes = [16, 16], strides = [1, 1]} : vector<16x48xf32> to vector<16x16xf32>
    %534 = arith.addf %532, %533 : vector<16x16xf32>
    %535 = arith.negf %534 : vector<16x16xf32>
    %536 = math.exp %535 : vector<16x16xf32>
    %cst_140 = arith.constant 1.000000e+00 : f32
    %537 = vector.broadcast %cst_140 : f32 to vector<16x16xf32>
    %538 = arith.addf %537, %536 : vector<16x16xf32>
    %539 = arith.divf %537, %538 : vector<16x16xf32>
    %540 = vector.extract_strided_slice %491 {offsets = [0, 32], sizes = [16, 16], strides = [1, 1]} : vector<16x48xf32> to vector<16x16xf32>
    %541 = vector.extract_strided_slice %522 {offsets = [0, 32], sizes = [16, 16], strides = [1, 1]} : vector<16x48xf32> to vector<16x16xf32>
    %542 = vector.broadcast %20 : vector<1x16xf32> to vector<16x16xf32>
    %543 = arith.addf %541, %542 : vector<16x16xf32>
    %544 = arith.mulf %531, %543 : vector<16x16xf32>
    %545 = arith.addf %540, %544 : vector<16x16xf32>
    %546 = math.tanh %545 : vector<16x16xf32>
    %cst_141 = arith.constant 1.000000e+00 : f32
    %547 = vector.broadcast %cst_141 : f32 to vector<16x16xf32>
    %548 = arith.subf %547, %539 : vector<16x16xf32>
    %549 = arith.mulf %548, %546 : vector<16x16xf32>
    %550 = arith.mulf %539, %523 : vector<16x16xf32>
    %551 = arith.addf %549, %550 : vector<16x16xf32>
    %552 = arith.index_cast %c6_i32 : i32 to index
    %c0_142 = arith.constant 0 : index
    %c0_143 = arith.constant 0 : index
    %553 = vector.load %arg11[%552, %c0_142, %c0_143] : memref<8x16x32xf32, #tpu.memory_space<vmem>>, vector<1x16x16xf32>
    %554 = vector.shape_cast %553 : vector<1x16x16xf32> to vector<16x16xf32>
    %555 = vector.shape_cast %521 : vector<16x16xf32> to vector<1x16x16xf32>
    tpu.vector_store %arg11[%552, %c0_142, %c0_143], %555 {strides = array<i32>} : memref<8x16x32xf32, #tpu.memory_space<vmem>>, vector<1x16x16xf32>,
    %556 = arith.index_cast %484 : i32 to index
    %c0_144 = arith.constant 0 : index
    %c16_145 = arith.constant 16 : index
    %557 = vector.load %arg11[%556, %c0_144, %c16_145] : memref<8x16x32xf32, #tpu.memory_space<vmem>>, vector<1x16x16xf32>
    %558 = vector.shape_cast %557 : vector<1x16x16xf32> to vector<16x16xf32>
    %559 = vector.shape_cast %551 : vector<16x16xf32> to vector<1x16x16xf32>
    tpu.vector_store %arg11[%556, %c0_144, %c16_145], %559 {strides = array<i32>} : memref<8x16x32xf32, #tpu.memory_space<vmem>>, vector<1x16x16xf32>,
    %560 = tpu.concatenate %521, %551 in 1 : vector<16x16xf32>, vector<16x16xf32> -> vector<16x32xf32>
    %c7_i32_146 = arith.constant 7 : i32
    %c7_i32_147 = arith.constant 7 : i32
    %561 = arith.subi %c7_i32_147, %c7_i32_146 : i32
    %cst_148 = arith.constant dense<0.000000e+00> : vector<16x96xf32>
    %562 = tpu.matmul %560, %16, %cst_148 {dimension_numbers = #tpu.dot_dimension_numbers<[1], [0], [0], [1], [0, 0, 1, 1], [], []>} : vector<16x32xf32>, vector<32x96xf32>, vector<16x96xf32> -> vector<16x96xf32>
    %c0_149 = arith.constant 0 : index
    %563 = arith.index_cast %c7_i32_146 : i32 to index
    %c0_150 = arith.constant 0 : index
    %c0_151 = arith.constant 0 : index
    %564 = vector.load %arg10[%c0_149, %563, %c0_150, %c0_151] : memref<2x8x16x48xf32, #tpu.memory_space<vmem>>, vector<1x1x16x48xf32>
    %565 = vector.shape_cast %564 : vector<1x1x16x48xf32> to vector<16x48xf32>
    %c1_152 = arith.constant 1 : index
    %566 = arith.index_cast %561 : i32 to index
    %c0_153 = arith.constant 0 : index
    %c0_154 = arith.constant 0 : index
    %567 = vector.load %arg10[%c1_152, %566, %c0_153, %c0_154] : memref<2x8x16x48xf32, #tpu.memory_space<vmem>>, vector<1x1x16x48xf32>
    %568 = vector.shape_cast %567 : vector<1x1x16x48xf32> to vector<16x48xf32>
    %569 = vector.extract_strided_slice %562 {offsets = [0, 0], sizes = [16, 48], strides = [1, 1]} : vector<16x96xf32> to vector<16x48xf32>
    %570 = vector.extract_strided_slice %560 {offsets = [0, 0], sizes = [16, 16], strides = [1, 1]} : vector<16x32xf32> to vector<16x16xf32>
    %571 = vector.extract_strided_slice %565 {offsets = [0, 0], sizes = [16, 16], strides = [1, 1]} : vector<16x48xf32> to vector<16x16xf32>
    %572 = vector.extract_strided_slice %569 {offsets = [0, 0], sizes = [16, 16], strides = [1, 1]} : vector<16x48xf32> to vector<16x16xf32>
    %573 = arith.addf %571, %572 : vector<16x16xf32>
    %574 = arith.negf %573 : vector<16x16xf32>
    %575 = math.exp %574 : vector<16x16xf32>
    %cst_155 = arith.constant 1.000000e+00 : f32
    %576 = vector.broadcast %cst_155 : f32 to vector<16x16xf32>
    %577 = arith.addf %576, %575 : vector<16x16xf32>
    %578 = arith.divf %576, %577 : vector<16x16xf32>
    %579 = vector.extract_strided_slice %565 {offsets = [0, 16], sizes = [16, 16], strides = [1, 1]} : vector<16x48xf32> to vector<16x16xf32>
    %580 = vector.extract_strided_slice %569 {offsets = [0, 16], sizes = [16, 16], strides = [1, 1]} : vector<16x48xf32> to vector<16x16xf32>
    %581 = arith.addf %579, %580 : vector<16x16xf32>
    %582 = arith.negf %581 : vector<16x16xf32>
    %583 = math.exp %582 : vector<16x16xf32>
    %cst_156 = arith.constant 1.000000e+00 : f32
    %584 = vector.broadcast %cst_156 : f32 to vector<16x16xf32>
    %585 = arith.addf %584, %583 : vector<16x16xf32>
    %586 = arith.divf %584, %585 : vector<16x16xf32>
    %587 = vector.extract_strided_slice %565 {offsets = [0, 32], sizes = [16, 16], strides = [1, 1]} : vector<16x48xf32> to vector<16x16xf32>
    %588 = vector.extract_strided_slice %569 {offsets = [0, 32], sizes = [16, 16], strides = [1, 1]} : vector<16x48xf32> to vector<16x16xf32>
    %589 = vector.broadcast %18 : vector<1x16xf32> to vector<16x16xf32>
    %590 = arith.addf %588, %589 : vector<16x16xf32>
    %591 = arith.mulf %578, %590 : vector<16x16xf32>
    %592 = arith.addf %587, %591 : vector<16x16xf32>
    %593 = math.tanh %592 : vector<16x16xf32>
    %cst_157 = arith.constant 1.000000e+00 : f32
    %594 = vector.broadcast %cst_157 : f32 to vector<16x16xf32>
    %595 = arith.subf %594, %586 : vector<16x16xf32>
    %596 = arith.mulf %595, %593 : vector<16x16xf32>
    %597 = arith.mulf %586, %570 : vector<16x16xf32>
    %598 = arith.addf %596, %597 : vector<16x16xf32>
    %599 = vector.extract_strided_slice %562 {offsets = [0, 48], sizes = [16, 48], strides = [1, 1]} : vector<16x96xf32> to vector<16x48xf32>
    %600 = vector.extract_strided_slice %560 {offsets = [0, 16], sizes = [16, 16], strides = [1, 1]} : vector<16x32xf32> to vector<16x16xf32>
    %601 = vector.extract_strided_slice %568 {offsets = [0, 0], sizes = [16, 16], strides = [1, 1]} : vector<16x48xf32> to vector<16x16xf32>
    %602 = vector.extract_strided_slice %599 {offsets = [0, 0], sizes = [16, 16], strides = [1, 1]} : vector<16x48xf32> to vector<16x16xf32>
    %603 = arith.addf %601, %602 : vector<16x16xf32>
    %604 = arith.negf %603 : vector<16x16xf32>
    %605 = math.exp %604 : vector<16x16xf32>
    %cst_158 = arith.constant 1.000000e+00 : f32
    %606 = vector.broadcast %cst_158 : f32 to vector<16x16xf32>
    %607 = arith.addf %606, %605 : vector<16x16xf32>
    %608 = arith.divf %606, %607 : vector<16x16xf32>
    %609 = vector.extract_strided_slice %568 {offsets = [0, 16], sizes = [16, 16], strides = [1, 1]} : vector<16x48xf32> to vector<16x16xf32>
    %610 = vector.extract_strided_slice %599 {offsets = [0, 16], sizes = [16, 16], strides = [1, 1]} : vector<16x48xf32> to vector<16x16xf32>
    %611 = arith.addf %609, %610 : vector<16x16xf32>
    %612 = arith.negf %611 : vector<16x16xf32>
    %613 = math.exp %612 : vector<16x16xf32>
    %cst_159 = arith.constant 1.000000e+00 : f32
    %614 = vector.broadcast %cst_159 : f32 to vector<16x16xf32>
    %615 = arith.addf %614, %613 : vector<16x16xf32>
    %616 = arith.divf %614, %615 : vector<16x16xf32>
    %617 = vector.extract_strided_slice %568 {offsets = [0, 32], sizes = [16, 16], strides = [1, 1]} : vector<16x48xf32> to vector<16x16xf32>
    %618 = vector.extract_strided_slice %599 {offsets = [0, 32], sizes = [16, 16], strides = [1, 1]} : vector<16x48xf32> to vector<16x16xf32>
    %619 = vector.broadcast %20 : vector<1x16xf32> to vector<16x16xf32>
    %620 = arith.addf %618, %619 : vector<16x16xf32>
    %621 = arith.mulf %608, %620 : vector<16x16xf32>
    %622 = arith.addf %617, %621 : vector<16x16xf32>
    %623 = math.tanh %622 : vector<16x16xf32>
    %cst_160 = arith.constant 1.000000e+00 : f32
    %624 = vector.broadcast %cst_160 : f32 to vector<16x16xf32>
    %625 = arith.subf %624, %616 : vector<16x16xf32>
    %626 = arith.mulf %625, %623 : vector<16x16xf32>
    %627 = arith.mulf %616, %600 : vector<16x16xf32>
    %628 = arith.addf %626, %627 : vector<16x16xf32>
    %629 = arith.index_cast %c7_i32_146 : i32 to index
    %c0_161 = arith.constant 0 : index
    %c0_162 = arith.constant 0 : index
    %630 = vector.load %arg11[%629, %c0_161, %c0_162] : memref<8x16x32xf32, #tpu.memory_space<vmem>>, vector<1x16x16xf32>
    %631 = vector.shape_cast %630 : vector<1x16x16xf32> to vector<16x16xf32>
    %632 = vector.shape_cast %598 : vector<16x16xf32> to vector<1x16x16xf32>
    tpu.vector_store %arg11[%629, %c0_161, %c0_162], %632 {strides = array<i32>} : memref<8x16x32xf32, #tpu.memory_space<vmem>>, vector<1x16x16xf32>,
    %633 = arith.index_cast %561 : i32 to index
    %c0_163 = arith.constant 0 : index
    %c16_164 = arith.constant 16 : index
    %634 = vector.load %arg11[%633, %c0_163, %c16_164] : memref<8x16x32xf32, #tpu.memory_space<vmem>>, vector<1x16x16xf32>
    %635 = vector.shape_cast %634 : vector<1x16x16xf32> to vector<16x16xf32>
    %636 = vector.shape_cast %628 : vector<16x16xf32> to vector<1x16x16xf32>
    tpu.vector_store %arg11[%633, %c0_163, %c16_164], %636 {strides = array<i32>} : memref<8x16x32xf32, #tpu.memory_space<vmem>>, vector<1x16x16xf32>,
    %637 = tpu.concatenate %598, %628 in 1 : vector<16x16xf32>, vector<16x16xf32> -> vector<16x32xf32>
    %c8_i32 = arith.constant 8 : i32
    %c0_165 = arith.constant 0 : index
    %c0_166 = arith.constant 0 : index
    %c0_167 = arith.constant 0 : index
    %638 = vector.load %arg11[%c0_165, %c0_166, %c0_167] : memref<8x16x32xf32, #tpu.memory_space<vmem>>, vector<8x16x32xf32>
    %639 = vector.shape_cast %638 : vector<8x16x32xf32> to vector<128x32xf32>
    %c0_168 = arith.constant 0 : index
    %c0_169 = arith.constant 0 : index
    %640 = vector.load %arg6[%c0_168, %c0_169] : memref<32x32xf32, #tpu.memory_space<vmem>>, vector<32x32xf32>
    %cst_170 = arith.constant dense<0.000000e+00> : vector<128x32xf32>
    %641 = tpu.matmul %639, %640, %cst_170 {dimension_numbers = #tpu.dot_dimension_numbers<[1], [0], [0], [1], [0, 0, 1, 1], [], []>} : vector<128x32xf32>, vector<32x32xf32>, vector<128x32xf32> -> vector<128x32xf32>
    %c0_171 = arith.constant 0 : index
    %c0_172 = arith.constant 0 : index
    %642 = vector.load %arg7[%c0_171, %c0_172] : memref<1x32xf32, #tpu.memory_space<vmem>>, vector<1x32xf32>
    %643 = vector.broadcast %642 : vector<1x32xf32> to vector<128x32xf32>
    %644 = arith.addf %641, %643 : vector<128x32xf32>
    %645 = math.tanh %644 : vector<128x32xf32>
    %c0_173 = arith.constant 0 : index
    %c0_174 = arith.constant 0 : index
    %646 = vector.load %arg8[%c0_173, %c0_174] : memref<32x1xf32, #tpu.memory_space<vmem>>, vector<32x1xf32>
    %cst_175 = arith.constant dense<0.000000e+00> : vector<128x1xf32>
    %647 = tpu.matmul %645, %646, %cst_175 {dimension_numbers = #tpu.dot_dimension_numbers<[1], [0], [0], [1], [0, 0, 1, 1], [], []>} : vector<128x32xf32>, vector<32x1xf32>, vector<128x1xf32> -> vector<128x1xf32>
    %648 = vector.shape_cast %647 : vector<128x1xf32> to vector<8x16x1xf32>
    %cst_176 = arith.constant dense<0xFF800000> : vector<16x1xf32>
    %649 = vector.multi_reduction <maximumf>, %648, %cst_176 [0] : vector<8x16x1xf32> to vector<16x1xf32>
    %650 = vector.shape_cast %649 : vector<16x1xf32> to vector<1x16x1xf32>
    %651 = vector.broadcast %650 : vector<1x16x1xf32> to vector<8x16x1xf32>
    %652 = arith.subf %648, %651 : vector<8x16x1xf32>
    %653 = math.exp %652 : vector<8x16x1xf32>
    %cst_177 = arith.constant dense<0.000000e+00> : vector<16x1xf32>
    %654 = vector.multi_reduction <add>, %653, %cst_177 [0] : vector<8x16x1xf32> to vector<16x1xf32>
    %655 = vector.shape_cast %654 : vector<16x1xf32> to vector<1x16x1xf32>
    %656 = tpu.reciprocal %655 {approx = true} : vector<1x16x1xf32> -> vector<1x16x1xf32>
    %657 = vector.broadcast %656 : vector<1x16x1xf32> to vector<8x16x1xf32>
    %658 = arith.mulf %653, %657 : vector<8x16x1xf32>
    %659 = vector.broadcast %658 : vector<8x16x1xf32> to vector<8x16x32xf32>
    %660 = arith.mulf %659, %638 : vector<8x16x32xf32>
    %cst_178 = arith.constant dense<0.000000e+00> : vector<16x32xf32>
    %661 = vector.multi_reduction <add>, %660, %cst_178 [0] : vector<8x16x32xf32> to vector<16x32xf32>
    %c0_179 = arith.constant 0 : index
    %c0_180 = arith.constant 0 : index
    %662 = vector.load %arg9[%c0_179, %c0_180] : memref<16x32xf32, #tpu.memory_space<vmem>>, vector<16x32xf32>
    tpu.vector_store %arg9[%c0_179, %c0_180], %661 {strides = array<i32>} : memref<16x32xf32, #tpu.memory_space<vmem>>, vector<16x32xf32>,
    return
  }
  func.func @transform_0(%arg0: i32) -> (i32, i32, i32) {
    %c0_i32 = arith.constant 0 : i32
    %c0_i32_0 = arith.constant 0 : i32
    %c0_i32_1 = arith.constant 0 : i32
    return %c0_i32, %arg0, %c0_i32_0 : i32, i32, i32
  }
  func.func @transform_1(%arg0: i32) -> (i32, i32) {
    %c0_i32 = arith.constant 0 : i32
    %c0_i32_0 = arith.constant 0 : i32
    %c0_i32_1 = arith.constant 0 : i32
    return %c0_i32, %c0_i32_0 : i32, i32
  }
  func.func @transform_2(%arg0: i32) -> (i32, i32) {
    %c0_i32 = arith.constant 0 : i32
    %c0_i32_0 = arith.constant 0 : i32
    %c0_i32_1 = arith.constant 0 : i32
    return %c0_i32, %c0_i32_0 : i32, i32
  }
  func.func @transform_3(%arg0: i32) -> (i32, i32) {
    %c0_i32 = arith.constant 0 : i32
    %c0_i32_0 = arith.constant 0 : i32
    %c0_i32_1 = arith.constant 0 : i32
    return %c0_i32, %c0_i32_0 : i32, i32
  }
  func.func @transform_4(%arg0: i32) -> (i32, i32, i32) {
    %c0_i32 = arith.constant 0 : i32
    %c0_i32_0 = arith.constant 0 : i32
    %c0_i32_1 = arith.constant 0 : i32
    %c0_i32_2 = arith.constant 0 : i32
    return %c0_i32, %c0_i32_0, %c0_i32_1 : i32, i32, i32
  }
  func.func @transform_5(%arg0: i32) -> (i32, i32) {
    %c0_i32 = arith.constant 0 : i32
    %c0_i32_0 = arith.constant 0 : i32
    %c0_i32_1 = arith.constant 0 : i32
    return %c0_i32, %c0_i32_0 : i32, i32
  }
  func.func @transform_6(%arg0: i32) -> (i32, i32) {
    %c0_i32 = arith.constant 0 : i32
    %c0_i32_0 = arith.constant 0 : i32
    %c0_i32_1 = arith.constant 0 : i32
    return %c0_i32, %c0_i32_0 : i32, i32
  }
  func.func @transform_7(%arg0: i32) -> (i32, i32) {
    %c0_i32 = arith.constant 0 : i32
    %c0_i32_0 = arith.constant 0 : i32
    %c0_i32_1 = arith.constant 0 : i32
    return %c0_i32, %c0_i32_0 : i32, i32
  }
  func.func @transform_8(%arg0: i32) -> (i32, i32) {
    %c0_i32 = arith.constant 0 : i32
    %c0_i32_0 = arith.constant 0 : i32
    return %arg0, %c0_i32 : i32, i32
  }
}

</mosaic_0001>

<llo_original>
// kernel: han_forward.3
$region0: #{han_forward.3}
  #allocation0 [shape = 'u32[]', space=smem, size = 0x4, offset = 0x4, fixed_abs, tag = 'smem constant byte address 0x4 - core index']
  #allocation1 [shape = 'u32[144,128]{1,0:T(1,128)}', space=vmem, size = 0x12000, scoped, tag = 'internal scratch']
  #allocation2 [shape = 'f32[2,3,16,48]{3,2,1,0:T(8,128)}', space=vmem, size = 0xc000, scoped, tag = 'scratch operand']
  #allocation3 [shape = 'f32[3,16,32]{2,1,0:T(8,128)}', space=vmem, size = 0x6000, scoped, tag = 'scratch operand']
  %s0 = inlined_call_operand.vmem [shape: f32[3,16,32], index: 0, kind: input, shape index: {}]
  %s1 = inlined_call_operand.vmem [shape: f32[32,96], index: 1, kind: input, shape index: {}]
  %s2 = inlined_call_operand.vmem [shape: f32[1,96], index: 2, kind: input, shape index: {}]
  %s3 = inlined_call_operand.vmem [shape: f32[32,96], index: 3, kind: input, shape index: {}]
  %s4 = inlined_call_operand.vmem [shape: f32[2,1,16], index: 4, kind: input, shape index: {}]
  %s5 = inlined_call_operand.vmem [shape: f32[32,32], index: 5, kind: input, shape index: {}]
  %s6 = inlined_call_operand.vmem [shape: f32[1,32], index: 6, kind: input, shape index: {}]
  %s7 = inlined_call_operand.vmem [shape: f32[32,1], index: 7, kind: input, shape index: {}]
  %s8 = inlined_call_operand.vmem [shape: f32[32,4], index: 8, kind: input, shape index: {}]
  %s9 = inlined_call_operand.vmem [shape: f32[1,4], index: 9, kind: input, shape index: {}]
  %s10 = inlined_call_operand.vmem [shape: f32[16,4], index: 10, kind: output, shape index: {}]
  %s11 = sld [smem:[#allocation0]]
  $region50: #{han_forward.3} parent=0
    _
  %s13 = ssub.s32 1, %s11
  %s14 = scalar_select 0, %s13, %s11
  // Predicated region
  $region2: #{han_forward.3} parent=0 // pred_check
    _
  $region3: #{han_forward.3} parent=0 // pred_check_branch
    %16 = sbr.rel (0) target = $region5
  $region4: #{han_forward.3} parent=0 // pred_region
    _
  $region5: #{han_forward.3} parent=0 // pred_fallthru
    _
  // Predicated region
  $region6: #{han_forward.3} parent=0 // pred_check
    _
  $region7: #{han_forward.3} parent=0 // pred_check_branch
    %18 = sbr.rel (0) target = $region9
  $region8: #{han_forward.3} parent=0 // pred_region
    _
  $region9: #{han_forward.3} parent=0 // pred_fallthru
    _
  // Predicated region
  $region10: #{han_forward.3} parent=0 // pred_check
    _
  $region11: #{han_forward.3} parent=0 // pred_check_branch
    %20 = sbr.rel (0) target = $region13
  $region12: #{han_forward.3} parent=0 // pred_region
    _
  $region13: #{han_forward.3} parent=0 // pred_fallthru
    _
  // Predicated region
  $region14: #{han_forward.3} parent=0 // pred_check
    _
  $region15: #{han_forward.3} parent=0 // pred_check_branch
    %22 = sbr.rel (0) target = $region17
  $region16: #{han_forward.3} parent=0 // pred_region
    _
  $region17: #{han_forward.3} parent=0 // pred_fallthru
    _
  // Predicated region
  $region18: #{han_forward.3} parent=0 // pred_check
    _
  $region19: #{han_forward.3} parent=0 // pred_check_branch
    %24 = sbr.rel (0) target = $region21
  $region20: #{han_forward.3} parent=0 // pred_region
    _
  $region21: #{han_forward.3} parent=0 // pred_fallthru
    _
  // Predicated region
  $region22: #{han_forward.3} parent=0 // pred_check
    _
  $region23: #{han_forward.3} parent=0 // pred_check_branch
    %26 = sbr.rel (0) target = $region25
  $region24: #{han_forward.3} parent=0 // pred_region
    _
  $region25: #{han_forward.3} parent=0 // pred_fallthru
    _
  // Predicated region
  $region26: #{han_forward.3} parent=0 // pred_check
    _
  $region27: #{han_forward.3} parent=0 // pred_check_branch
    %28 = sbr.rel (0) target = $region29
  $region28: #{han_forward.3} parent=0 // pred_region
    _
  $region29: #{han_forward.3} parent=0 // pred_fallthru
    _
  // Predicated region
  $region30: #{han_forward.3} parent=0 // pred_check
    _
  $region31: #{han_forward.3} parent=0 // pred_check_branch
    %30 = sbr.rel (0) target = $region33
  $region32: #{han_forward.3} parent=0 // pred_region
    _
  $region33: #{han_forward.3} parent=0 // pred_fallthru
    _
  // Predicated region
  $region34: #{han_forward.3} parent=0 // pred_check
    _
  $region35: #{han_forward.3} parent=0 // pred_check_branch
    %32 = sbr.rel (0) target = $region37
  $region36: #{han_forward.3} parent=0 // pred_region
    _
  $region37: #{han_forward.3} parent=0 // pred_fallthru
    _
  // Predicated region
  $region38: #{han_forward.3} parent=0 // pred_check
    _
  $region39: #{han_forward.3} parent=0 // pred_check_branch
    %34 = sbr.rel (0) target = $region41
  $region40: #{han_forward.3} parent=0 // pred_region
    _
  $region41: #{han_forward.3} parent=0 // pred_fallthru
    _
  %v35 = vld [vmem:[%s0] sm:$0xff]
  %v36 = vld [vmem:[%s0 + $0x8] sm:$0xff]
  %v37 = vld [vmem:[%s0 + $0x10] sm:$0xff]
  %v38 = vld [vmem:[%s0 + $0x18] sm:$0xff]
  %v39 = vld [vmem:[%s0 + $0x20] sm:$0xff]
  %v40 = vld [vmem:[%s0 + $0x28] sm:$0xff]
  %v41 = vld [vmem:[%s1] sm:$0xff]
  %v42 = vld [vmem:[%s1 + $0x8] sm:$0xff]
  %v43 = vld [vmem:[%s1 + $0x10] sm:$0xff]
  %v44 = vld [vmem:[%s1 + $0x18] sm:$0xff]
  %v45 = vld [vmem:[%s2] sm:$0x1]
  %v47 = vlaneseq
  %v48 = vshrl.u32 %v47, 7
  %v49 = vsub.s32 0, %v48
  %v50 = vrot.slane %v45, %v49
  %vm52 = vcmask 261120
  %v54 = vsel %vm52, %v35, 0
  %v57 = vsel %vm52, %v36, 0
  %v60 = vsel %vm52, %v37, 0
  %v63 = vsel %vm52, %v38, 0
  %v66 = vsel %vm52, %v39, 0
  %v69 = vsel %vm52, %v40, 0
  %71 = vmatprep.subr.mxu0 0.0
  %72 = vmatpush1.msra.mxu0 0.0
  %73 = vmatprep.subr.mxu0 0.0
  %74 = vmatpush1.msra.mxu0 0.0
  %75 = vmatprep.subr.mxu0 0.0
  %76 = vmatpush1.msra.mxu0 0.0
  %77 = vmatprep.subr.mxu0 0.0
  %78 = vmatpush1.msra.mxu0 0.0
  %79 = vmatprep.subr.mxu0 0.0
  %80 = vmatpush1.msra.mxu0 0.0
  %81 = vmatprep.subr.mxu0 0.0
  %82 = vmatpush1.msra.mxu0 0.0
  %83 = vmatprep.subr.mxu0 0.0
  %84 = vmatpush1.msra.mxu0 0.0
  %85 = vmatprep.subr.mxu0 0.0
  %86 = vmatpush1.msra.mxu0 0.0
  %87 = vmatprep.subr.mxu0 0.0
  %88 = vmatpush1.msra.mxu0 0.0
  %89 = vmatprep.subr.mxu0 0.0
  %90 = vmatpush1.msra.mxu0 0.0
  %91 = vmatprep.subr.mxu0 0.0
  %92 = vmatpush1.msra.mxu0 0.0
  %93 = vmatprep.subr.mxu0 0.0
  %94 = vmatpush1.msra.mxu0 0.0
  %95 = vmatprep.subr.mxu0 0.0
  %96 = vmatpush1.msra.mxu0 %v44
  %97 = vmatprep.subr.mxu0 0.0
  %98 = vmatpush1.msra.mxu0 %v43
  %99 = vmatprep.subr.mxu0 0.0
  %100 = vmatpush1.msra.mxu0 %v42
  %101 = vmatprep.subr.mxu0 0.0
  %102 = vmatpush1.msra.mxu0 %v41
  %103 = vmatprep.subr.mxu0 0.0
  %104 = vmatpush2.msra.mxu0 0.0
  %105 = vmatprep.subr.mxu0 0.0
  %106 = vmatpush2.msra.mxu0 0.0
  %107 = vmatprep.subr.mxu0 0.0
  %108 = vmatpush2.msra.mxu0 0.0
  %109 = vmatprep.subr.mxu0 0.0
  %110 = vmatpush2.msra.mxu0 0.0
  %111 = vmatprep.subr.mxu0 0.0
  %112 = vmatpush2.msra.mxu0 0.0
  %113 = vmatprep.subr.mxu0 0.0
  %114 = vmatpush2.msra.mxu0 0.0
  %115 = vmatprep.subr.mxu0 0.0
  %116 = vmatpush2.msra.mxu0 0.0
  %117 = vmatprep.subr.mxu0 0.0
  %118 = vmatpush2.msra.mxu0 0.0
  %119 = vmatprep.subr.mxu0 0.0
  %120 = vmatpush2.msra.mxu0 0.0
  %121 = vmatprep.subr.mxu0 0.0
  %122 = vmatpush2.msra.mxu0 0.0
  %123 = vmatprep.subr.mxu0 0.0
  %124 = vmatpush2.msra.mxu0 0.0
  %125 = vmatprep.subr.mxu0 0.0
  %126 = vmatpush2.msra.mxu0 0.0
  %127 = vmatprep.subr.mxu0 0.0
  %128 = vmatpush2.msra.mxu0 0.0
  %129 = vmatprep.subr.mxu0 0.0
  %130 = vmatpush2.msra.mxu0 0.0
  %131 = vmatprep.subr.mxu0 0.0
  %132 = vmatpush2.msra.mxu0 0.0
  %133 = vmatprep.subr.mxu0 0.0
  %134 = vmatpush2.msra.mxu0 0.0
  %135 = vmatprep.mubr.f32.mxu0 0.0
  %136 = vmatmul.mubr.f32.gmra.mxu0 %v54
  %v137 = vpop.f32.mrf.mxu0
  %v138 = vadd.f32 %v50, %v137
  %v139 = vpop.f32.mrf.mxu0
  %140 = vmatprep.mubr.f32.mxu0 0.0
  %141 = vmatmul.mubr.f32.gmra.mxu0 %v57
  %v142 = vpop.f32.mrf.mxu0
  %v143 = vadd.f32 %v50, %v142
  %v144 = vpop.f32.mrf.mxu0
  %145 = vmatprep.mubr.f32.mxu0 0.0
  %146 = vmatmul.mubr.f32.gmra.mxu0 %v60
  %v147 = vpop.f32.mrf.mxu0
  %v148 = vadd.f32 %v50, %v147
  %v149 = vpop.f32.mrf.mxu0
  %150 = vmatprep.mubr.f32.mxu0 0.0
  %151 = vmatmul.mubr.f32.gmra.mxu0 %v63
  %v152 = vpop.f32.mrf.mxu0
  %v153 = vadd.f32 %v50, %v152
  %v154 = vpop.f32.mrf.mxu0
  %155 = vmatprep.mubr.f32.mxu0 0.0
  %156 = vmatmul.mubr.f32.gmra.mxu0 %v66
  %v157 = vpop.f32.mrf.mxu0
  %v158 = vadd.f32 %v50, %v157
  %v159 = vpop.f32.mrf.mxu0
  %160 = vmatprep.mubr.f32.mxu0 0.0
  %161 = vmatmul.mubr.f32.gmra.mxu0 %v69
  %v162 = vpop.f32.mrf.mxu0
  %v163 = vadd.f32 %v50, %v162
  %v164 = vpop.f32.mrf.mxu0
  %165 = vdwg.mxu0
  %vm166 = vcmask 392192
  %167 = vst.msk [vmem:[#allocation2] sm:$0xff] %vm166, %v138
  %168 = vst.msk [vmem:[#allocation2 + $0x8] sm:$0xff] %vm166, %v143
  %169 = vst.msk [vmem:[#allocation2 + $0x10] sm:$0xff] %vm166, %v148
  %170 = vst.msk [vmem:[#allocation2 + $0x18] sm:$0xff] %vm166, %v153
  %171 = vst.msk [vmem:[#allocation2 + $0x20] sm:$0xff] %vm166, %v158
  %172 = vst.msk [vmem:[#allocation2 + $0x28] sm:$0xff] %vm166, %v163
  %179 = vrot.lane.b32.xlu0 %v138, 80
  %v180 = vpop.permute.xlu0 %179
  %181 = vrot.lane.b32.xlu0 %v143, 80
  %v182 = vpop.permute.xlu0 %181
  %183 = vrot.lane.b32.xlu0 %v148, 80
  %v184 = vpop.permute.xlu0 %183
  %185 = vrot.lane.b32.xlu0 %v153, 80
  %v186 = vpop.permute.xlu0 %185
  %187 = vrot.lane.b32.xlu0 %v158, 80
  %v188 = vpop.permute.xlu0 %187
  %189 = vrot.lane.b32.xlu0 %v163, 80
  %v190 = vpop.permute.xlu0 %189
  %s197 = scalar_lea.vmem [#allocation2], 48
  %198 = vst.msk [vmem:[%s197] sm:$0xff] %vm166, %v180
  %199 = vst.msk [vmem:[%s197 + $0x8] sm:$0xff] %vm166, %v182
  %200 = vst.msk [vmem:[%s197 + $0x10] sm:$0xff] %vm166, %v184
  %201 = vst.msk [vmem:[%s197 + $0x18] sm:$0xff] %vm166, %v186
  %202 = vst.msk [vmem:[%s197 + $0x20] sm:$0xff] %vm166, %v188
  %203 = vst.msk [vmem:[%s197 + $0x28] sm:$0xff] %vm166, %v190
  %v204 = vld [vmem:[%s3] sm:$0xff]
  %v205 = vld [vmem:[%s3 + $0x8] sm:$0xff]
  %v206 = vld [vmem:[%s3 + $0x10] sm:$0xff]
  %v207 = vld [vmem:[%s3 + $0x18] sm:$0xff]
  %v208 = vld [vmem:[%s4] sm:$0x1]
  %s209 = scalar_lea.vmem %s4, 1
  %v210 = vld [vmem:[%s209] sm:$0x1]
  %v212 = vsel %vm52, 0.0, 0
  %214 = vmatprep.subr.mxu0 0.0
  %215 = vmatpush1.msra.mxu0 0.0
  %216 = vmatprep.subr.mxu0 0.0
  %217 = vmatpush1.msra.mxu0 0.0
  %218 = vmatprep.subr.mxu0 0.0
  %219 = vmatpush1.msra.mxu0 0.0
  %220 = vmatprep.subr.mxu0 0.0
  %221 = vmatpush1.msra.mxu0 0.0
  %222 = vmatprep.subr.mxu0 0.0
  %223 = vmatpush1.msra.mxu0 0.0
  %224 = vmatprep.subr.mxu0 0.0
  %225 = vmatpush1.msra.mxu0 0.0
  %226 = vmatprep.subr.mxu0 0.0
  %227 = vmatpush1.msra.mxu0 0.0
  %228 = vmatprep.subr.mxu0 0.0
  %229 = vmatpush1.msra.mxu0 0.0
  %230 = vmatprep.subr.mxu0 0.0
  %231 = vmatpush1.msra.mxu0 0.0
  %232 = vmatprep.subr.mxu0 0.0
  %233 = vmatpush1.msra.mxu0 0.0
  %234 = vmatprep.subr.mxu0 0.0
  %235 = vmatpush1.msra.mxu0 0.0
  %236 = vmatprep.subr.mxu0 0.0
  %237 = vmatpush1.msra.mxu0 0.0
  %238 = vmatprep.subr.mxu0 0.0
  %239 = vmatpush1.msra.mxu0 %v207
  %240 = vmatprep.subr.mxu0 0.0
  %241 = vmatpush1.msra.mxu0 %v206
  %242 = vmatprep.subr.mxu0 0.0
  %243 = vmatpush1.msra.mxu0 %v205
  %244 = vmatprep.subr.mxu0 0.0
  %245 = vmatpush1.msra.mxu0 %v204
  %246 = vmatprep.subr.mxu0 0.0
  %247 = vmatpush2.msra.mxu0 0.0
  %248 = vmatprep.subr.mxu0 0.0
  %249 = vmatpush2.msra.mxu0 0.0
  %250 = vmatprep.subr.mxu0 0.0
  %251 = vmatpush2.msra.mxu0 0.0
  %252 = vmatprep.subr.mxu0 0.0
  %253 = vmatpush2.msra.mxu0 0.0
  %254 = vmatprep.subr.mxu0 0.0
  %255 = vmatpush2.msra.mxu0 0.0
  %256 = vmatprep.subr.mxu0 0.0
  %257 = vmatpush2.msra.mxu0 0.0
  %258 = vmatprep.subr.mxu0 0.0
  %259 = vmatpush2.msra.mxu0 0.0
  %260 = vmatprep.subr.mxu0 0.0
  %261 = vmatpush2.msra.mxu0 0.0
  %262 = vmatprep.subr.mxu0 0.0
  %263 = vmatpush2.msra.mxu0 0.0
  %264 = vmatprep.subr.mxu0 0.0
  %265 = vmatpush2.msra.mxu0 0.0
  %266 = vmatprep.subr.mxu0 0.0
  %267 = vmatpush2.msra.mxu0 0.0
  %268 = vmatprep.subr.mxu0 0.0
  %269 = vmatpush2.msra.mxu0 0.0
  %270 = vmatprep.subr.mxu0 0.0
  %271 = vmatpush2.msra.mxu0 0.0
  %272 = vmatprep.subr.mxu0 0.0
  %273 = vmatpush2.msra.mxu0 0.0
  %274 = vmatprep.subr.mxu0 0.0
  %275 = vmatpush2.msra.mxu0 0.0
  %276 = vmatprep.subr.mxu0 0.0
  %277 = vmatpush2.msra.mxu0 0.0
  %278 = vmatprep.mubr.f32.mxu0 0.0
  %279 = vmatmul.mubr.f32.gmra.mxu0 %v212
  %v280 = vpop.f32.mrf.mxu0
  %v281 = vadd.f32 0.0, %v280
  %v282 = vpop.f32.mrf.mxu0
  %283 = vmatprep.mubr.f32.mxu0 0.0
  %284 = vmatmul.mubr.f32.gmra.mxu0 %v212
  %v285 = vpop.f32.mrf.mxu0
  %v286 = vadd.f32 0.0, %v285
  %v287 = vpop.f32.mrf.mxu0
  %288 = vdwg.mxu0
  %v289 = vld [vmem:[#allocation2] sm:$0xff]
  %v290 = vld [vmem:[#allocation2 + $0x8] sm:$0xff]
  %s291 = scalar_lea.vmem [#allocation2], 80
  %v292 = vld [vmem:[%s291] sm:$0xff]
  %v293 = vld [vmem:[%s291 + $0x8] sm:$0xff]
  %v294 = vadd.f32 %v289, %v281
  %v295 = vadd.f32 %v290, %v286
  %v296 = vxor.u32 %v294, 2147483648
  %v297 = vxor.u32 %v295, 2147483648
  %v298 = vmul.f32 %v296, 1.442695
  %v299 = vpow.pop %v298
  %v300 = vmul.f32 %v297, 1.442695
  %v301 = vpow.pop %v300
  %v302 = vadd.f32 %v299, 1.0
  %v303 = vadd.f32 %v301, 1.0
  %v304 = vrcp.pop %v302
  %v305 = vmul.f32 1.0, %v304
  %v306 = vrcp.pop %v303
  %v307 = vmul.f32 1.0, %v306
  %v309 = vlaneseq
  %v310 = vshrl.u32 %v309, 7
  %v311 = vsub.s32 0, %v310
  %v312 = vrot.slane %v208, %v311
  %313 = vrot.lane.b32.xlu0 %v312, 32
  %v314 = vpop.permute.xlu0 %313
  %v316 = vadd.f32 %v281, %v314
  %v317 = vadd.f32 %v286, %v314
  %320 = vrot.lane.b32.xlu0 %v316, 96
  %v321 = vpop.permute.xlu0 %320
  %322 = vrot.lane.b32.xlu0 %v317, 96
  %v323 = vpop.permute.xlu0 %322
  %v326 = vmul.f32 %v305, %v321
  %v327 = vmul.f32 %v307, %v323
  %330 = vrot.lane.b32.xlu0 %v326, 32
  %v331 = vpop.permute.xlu0 %330
  %332 = vrot.lane.b32.xlu0 %v327, 32
  %v333 = vpop.permute.xlu0 %332
  %v336 = vadd.f32 %v289, %v331
  %v337 = vadd.f32 %v290, %v333
  %v338 = vtanh.pop %v336
  %v339 = vtanh.pop %v337
  %v340 = vsub.f32 1.0, %v305
  %v341 = vsub.f32 1.0, %v307
  %344 = vrot.lane.b32.xlu0 %v338, 112
  %v345 = vpop.permute.xlu0 %344
  %346 = vrot.lane.b32.xlu0 %v339, 112
  %v347 = vpop.permute.xlu0 %346
  %v350 = vmul.f32 %v340, %v345
  %v351 = vmul.f32 %v341, %v347
  %v352 = vmul.f32 %v305, 0.0
  %v353 = vmul.f32 %v307, 0.0
  %v354 = vadd.f32 %v350, %v352
  %v355 = vadd.f32 %v351, %v353
  %358 = vrot.lane.b32.xlu0 %v281, 80
  %v359 = vpop.permute.xlu0 %358
  %360 = vrot.lane.b32.xlu0 %v286, 80
  %v361 = vpop.permute.xlu0 %360
  %v364 = vadd.f32 %v292, %v359
  %v365 = vadd.f32 %v293, %v361
  %v366 = vxor.u32 %v364, 2147483648
  %v367 = vxor.u32 %v365, 2147483648
  %v368 = vmul.f32 %v366, 1.442695
  %v369 = vpow.pop %v368
  %v370 = vmul.f32 %v367, 1.442695
  %v371 = vpow.pop %v370
  %v372 = vadd.f32 %v369, 1.0
  %v373 = vadd.f32 %v371, 1.0
  %v374 = vrcp.pop %v372
  %v375 = vmul.f32 1.0, %v374
  %v376 = vrcp.pop %v373
  %v377 = vmul.f32 1.0, %v376
  %v379 = vlaneseq
  %v380 = vshrl.u32 %v379, 7
  %v381 = vsub.s32 0, %v380
  %v382 = vrot.slane %v210, %v381
  %383 = vrot.lane.b32.xlu0 %v382, 80
  %v384 = vpop.permute.xlu0 %383
  %v386 = vadd.f32 %v281, %v384
  %v387 = vadd.f32 %v286, %v384
  %390 = vrot.lane.b32.xlu0 %v386, 48
  %v391 = vpop.permute.xlu0 %390
  %392 = vrot.lane.b32.xlu0 %v387, 48
  %v393 = vpop.permute.xlu0 %392
  %v396 = vmul.f32 %v375, %v391
  %v397 = vmul.f32 %v377, %v393
  %400 = vrot.lane.b32.xlu0 %v396, 32
  %v401 = vpop.permute.xlu0 %400
  %402 = vrot.lane.b32.xlu0 %v397, 32
  %v403 = vpop.permute.xlu0 %402
  %v406 = vadd.f32 %v292, %v401
  %v407 = vadd.f32 %v293, %v403
  %v408 = vtanh.pop %v406
  %v409 = vtanh.pop %v407
  %v410 = vsub.f32 1.0, %v375
  %v411 = vsub.f32 1.0, %v377
  %414 = vrot.lane.b32.xlu0 %v408, 112
  %v415 = vpop.permute.xlu0 %414
  %416 = vrot.lane.b32.xlu0 %v409, 112
  %v417 = vpop.permute.xlu0 %416
  %v420 = vmul.f32 %v410, %v415
  %v421 = vmul.f32 %v411, %v417
  %v422 = vmul.f32 %v375, 0.0
  %v423 = vmul.f32 %v377, 0.0
  %v424 = vadd.f32 %v420, %v422
  %v425 = vadd.f32 %v421, %v423
  %428 = vrot.lane.b32.xlu0 %v354, 112
  %v429 = vpop.permute.xlu0 %428
  %430 = vrot.lane.b32.xlu0 %v355, 112
  %v431 = vpop.permute.xlu0 %430
  %vm434 = vcmask 130048
  %435 = vst.msk [vmem:[#allocation3] sm:$0xff] %vm434, %v429
  %436 = vst.msk [vmem:[#allocation3 + $0x8] sm:$0xff] %vm434, %v431
  %s437 = scalar_lea.vmem [#allocation3], 32
  %vm438 = vcmask 261248
  %439 = vst.msk [vmem:[%s437] sm:$0xff] %vm438, %v424
  %440 = vst.msk [vmem:[%s437 + $0x8] sm:$0xff] %vm438, %v425
  %v441 = vsel %vm434, %v429, %v424
  %v442 = vsel %vm434, %v431, %v425
  %v444 = vsel %vm52, %v441, 0
  %v447 = vsel %vm52, %v442, 0
  %449 = vmatprep.subr.mxu0 0.0
  %450 = vmatpush1.msra.mxu0 0.0
  %451 = vmatprep.subr.mxu0 0.0
  %452 = vmatpush1.msra.mxu0 0.0
  %453 = vmatprep.subr.mxu0 0.0
  %454 = vmatpush1.msra.mxu0 0.0
  %455 = vmatprep.subr.mxu0 0.0
  %456 = vmatpush1.msra.mxu0 0.0
  %457 = vmatprep.subr.mxu0 0.0
  %458 = vmatpush1.msra.mxu0 0.0
  %459 = vmatprep.subr.mxu0 0.0
  %460 = vmatpush1.msra.mxu0 0.0
  %461 = vmatprep.subr.mxu0 0.0
  %462 = vmatpush1.msra.mxu0 0.0
  %463 = vmatprep.subr.mxu0 0.0
  %464 = vmatpush1.msra.mxu0 0.0
  %465 = vmatprep.subr.mxu0 0.0
  %466 = vmatpush1.msra.mxu0 0.0
  %467 = vmatprep.subr.mxu0 0.0
  %468 = vmatpush1.msra.mxu0 0.0
  %469 = vmatprep.subr.mxu0 0.0
  %470 = vmatpush1.msra.mxu0 0.0
  %471 = vmatprep.subr.mxu0 0.0
  %472 = vmatpush1.msra.mxu0 0.0
  %473 = vmatprep.subr.mxu0 0.0
  %474 = vmatpush1.msra.mxu0 %v207
  %475 = vmatprep.subr.mxu0 0.0
  %476 = vmatpush1.msra.mxu0 %v206
  %477 = vmatprep.subr.mxu0 0.0
  %478 = vmatpush1.msra.mxu0 %v205
  %479 = vmatprep.subr.mxu0 0.0
  %480 = vmatpush1.msra.mxu0 %v204
  %481 = vmatprep.subr.mxu0 0.0
  %482 = vmatpush2.msra.mxu0 0.0
  %483 = vmatprep.subr.mxu0 0.0
  %484 = vmatpush2.msra.mxu0 0.0
  %485 = vmatprep.subr.mxu0 0.0
  %486 = vmatpush2.msra.mxu0 0.0
  %487 = vmatprep.subr.mxu0 0.0
  %488 = vmatpush2.msra.mxu0 0.0
  %489 = vmatprep.subr.mxu0 0.0
  %490 = vmatpush2.msra.mxu0 0.0
  %491 = vmatprep.subr.mxu0 0.0
  %492 = vmatpush2.msra.mxu0 0.0
  %493 = vmatprep.subr.mxu0 0.0
  %494 = vmatpush2.msra.mxu0 0.0
  %495 = vmatprep.subr.mxu0 0.0
  %496 = vmatpush2.msra.mxu0 0.0
  %497 = vmatprep.subr.mxu0 0.0
  %498 = vmatpush2.msra.mxu0 0.0
  %499 = vmatprep.subr.mxu0 0.0
  %500 = vmatpush2.msra.mxu0 0.0
  %501 = vmatprep.subr.mxu0 0.0
  %502 = vmatpush2.msra.mxu0 0.0
  %503 = vmatprep.subr.mxu0 0.0
  %504 = vmatpush2.msra.mxu0 0.0
  %505 = vmatprep.subr.mxu0 0.0
  %506 = vmatpush2.msra.mxu0 0.0
  %507 = vmatprep.subr.mxu0 0.0
  %508 = vmatpush2.msra.mxu0 0.0
  %509 = vmatprep.subr.mxu0 0.0
  %510 = vmatpush2.msra.mxu0 0.0
  %511 = vmatprep.subr.mxu0 0.0
  %512 = vmatpush2.msra.mxu0 0.0
  %513 = vmatprep.mubr.f32.mxu0 0.0
  %514 = vmatmul.mubr.f32.gmra.mxu0 %v444
  %v515 = vpop.f32.mrf.mxu0
  %v516 = vadd.f32 0.0, %v515
  %v517 = vpop.f32.mrf.mxu0
  %518 = vmatprep.mubr.f32.mxu0 0.0
  %519 = vmatmul.mubr.f32.gmra.mxu0 %v447
  %v520 = vpop.f32.mrf.mxu0
  %v521 = vadd.f32 0.0, %v520
  %v522 = vpop.f32.mrf.mxu0
  %523 = vdwg.mxu0
  %s524 = scalar_lea.vmem [#allocation2], 16
  %v525 = vld [vmem:[%s524] sm:$0xff]
  %v526 = vld [vmem:[%s524 + $0x8] sm:$0xff]
  %s527 = scalar_lea.vmem [#allocation2], 64
  %v528 = vld [vmem:[%s527] sm:$0xff]
  %v529 = vld [vmem:[%s527 + $0x8] sm:$0xff]
  %v530 = vadd.f32 %v525, %v516
  %v531 = vadd.f32 %v526, %v521
  %v532 = vxor.u32 %v530, 2147483648
  %v533 = vxor.u32 %v531, 2147483648
  %v534 = vmul.f32 %v532, 1.442695
  %v535 = vpow.pop %v534
  %v536 = vmul.f32 %v533, 1.442695
  %v537 = vpow.pop %v536
  %v538 = vadd.f32 %v535, 1.0
  %v539 = vadd.f32 %v537, 1.0
  %v540 = vrcp.pop %v538
  %v541 = vmul.f32 1.0, %v540
  %v542 = vrcp.pop %v539
  %v543 = vmul.f32 1.0, %v542
  %v544 = vadd.f32 %v516, %v314
  %v545 = vadd.f32 %v521, %v314
  %548 = vrot.lane.b32.xlu0 %v544, 96
  %v549 = vpop.permute.xlu0 %548
  %550 = vrot.lane.b32.xlu0 %v545, 96
  %v551 = vpop.permute.xlu0 %550
  %v554 = vmul.f32 %v541, %v549
  %v555 = vmul.f32 %v543, %v551
  %558 = vrot.lane.b32.xlu0 %v554, 32
  %v559 = vpop.permute.xlu0 %558
  %560 = vrot.lane.b32.xlu0 %v555, 32
  %v561 = vpop.permute.xlu0 %560
  %v564 = vadd.f32 %v525, %v559
  %v565 = vadd.f32 %v526, %v561
  %v566 = vtanh.pop %v564
  %v567 = vtanh.pop %v565
  %v568 = vsub.f32 1.0, %v541
  %v569 = vsub.f32 1.0, %v543
  %572 = vrot.lane.b32.xlu0 %v566, 112
  %v573 = vpop.permute.xlu0 %572
  %574 = vrot.lane.b32.xlu0 %v567, 112
  %v575 = vpop.permute.xlu0 %574
  %v578 = vmul.f32 %v568, %v573
  %v579 = vmul.f32 %v569, %v575
  %580 = vrot.lane.b32.xlu0 %v441, 16
  %v581 = vpop.permute.xlu0 %580
  %582 = vrot.lane.b32.xlu0 %v442, 16
  %v583 = vpop.permute.xlu0 %582
  %v586 = vmul.f32 %v541, %v581
  %v587 = vmul.f32 %v543, %v583
  %v588 = vadd.f32 %v578, %v586
  %v589 = vadd.f32 %v579, %v587
  %592 = vrot.lane.b32.xlu0 %v516, 80
  %v593 = vpop.permute.xlu0 %592
  %594 = vrot.lane.b32.xlu0 %v521, 80
  %v595 = vpop.permute.xlu0 %594
  %v598 = vadd.f32 %v528, %v593
  %v599 = vadd.f32 %v529, %v595
  %v600 = vxor.u32 %v598, 2147483648
  %v601 = vxor.u32 %v599, 2147483648
  %v602 = vmul.f32 %v600, 1.442695
  %v603 = vpow.pop %v602
  %v604 = vmul.f32 %v601, 1.442695
  %v605 = vpow.pop %v604
  %v606 = vadd.f32 %v603, 1.0
  %v607 = vadd.f32 %v605, 1.0
  %v608 = vrcp.pop %v606
  %v609 = vmul.f32 1.0, %v608
  %v610 = vrcp.pop %v607
  %v611 = vmul.f32 1.0, %v610
  %v612 = vadd.f32 %v516, %v384
  %v613 = vadd.f32 %v521, %v384
  %616 = vrot.lane.b32.xlu0 %v612, 48
  %v617 = vpop.permute.xlu0 %616
  %618 = vrot.lane.b32.xlu0 %v613, 48
  %v619 = vpop.permute.xlu0 %618
  %v622 = vmul.f32 %v609, %v617
  %v623 = vmul.f32 %v611, %v619
  %626 = vrot.lane.b32.xlu0 %v622, 32
  %v627 = vpop.permute.xlu0 %626
  %628 = vrot.lane.b32.xlu0 %v623, 32
  %v629 = vpop.permute.xlu0 %628
  %v632 = vadd.f32 %v528, %v627
  %v633 = vadd.f32 %v529, %v629
  %v634 = vtanh.pop %v632
  %v635 = vtanh.pop %v633
  %v636 = vsub.f32 1.0, %v609
  %v637 = vsub.f32 1.0, %v611
  %640 = vrot.lane.b32.xlu0 %v634, 112
  %v641 = vpop.permute.xlu0 %640
  %642 = vrot.lane.b32.xlu0 %v635, 112
  %v643 = vpop.permute.xlu0 %642
  %v646 = vmul.f32 %v636, %v641
  %v647 = vmul.f32 %v637, %v643
  %v648 = vmul.f32 %v609, %v441
  %v649 = vmul.f32 %v611, %v442
  %v650 = vadd.f32 %v646, %v648
  %v651 = vadd.f32 %v647, %v649
  %654 = vrot.lane.b32.xlu0 %v588, 112
  %v655 = vpop.permute.xlu0 %654
  %656 = vrot.lane.b32.xlu0 %v589, 112
  %v657 = vpop.permute.xlu0 %656
  %s660 = scalar_lea.vmem [#allocation3], 16
  %661 = vst.msk [vmem:[%s660] sm:$0xff] %vm434, %v655
  %662 = vst.msk [vmem:[%s660 + $0x8] sm:$0xff] %vm434, %v657
  %663 = vst.msk [vmem:[%s660] sm:$0xff] %vm438, %v650
  %664 = vst.msk [vmem:[%s660 + $0x8] sm:$0xff] %vm438, %v651
  %v665 = vsel %vm434, %v655, %v650
  %v666 = vsel %vm434, %v657, %v651
  %v668 = vsel %vm52, %v665, 0
  %v671 = vsel %vm52, %v666, 0
  %673 = vmatprep.subr.mxu0 0.0
  %674 = vmatpush1.msra.mxu0 0.0
  %675 = vmatprep.subr.mxu0 0.0
  %676 = vmatpush1.msra.mxu0 0.0
  %677 = vmatprep.subr.mxu0 0.0
  %678 = vmatpush1.msra.mxu0 0.0
  %679 = vmatprep.subr.mxu0 0.0
  %680 = vmatpush1.msra.mxu0 0.0
  %681 = vmatprep.subr.mxu0 0.0
  %682 = vmatpush1.msra.mxu0 0.0
  %683 = vmatprep.subr.mxu0 0.0
  %684 = vmatpush1.msra.mxu0 0.0
  %685 = vmatprep.subr.mxu0 0.0
  %686 = vmatpush1.msra.mxu0 0.0
  %687 = vmatprep.subr.mxu0 0.0
  %688 = vmatpush1.msra.mxu0 0.0
  %689 = vmatprep.subr.mxu0 0.0
  %690 = vmatpush1.msra.mxu0 0.0
  %691 = vmatprep.subr.mxu0 0.0
  %692 = vmatpush1.msra.mxu0 0.0
  %693 = vmatprep.subr.mxu0 0.0
  %694 = vmatpush1.msra.mxu0 0.0
  %695 = vmatprep.subr.mxu0 0.0
  %696 = vmatpush1.msra.mxu0 0.0
  %697 = vmatprep.subr.mxu0 0.0
  %698 = vmatpush1.msra.mxu0 %v207
  %699 = vmatprep.subr.mxu0 0.0
  %700 = vmatpush1.msra.mxu0 %v206
  %701 = vmatprep.subr.mxu0 0.0
  %702 = vmatpush1.msra.mxu0 %v205
  %703 = vmatprep.subr.mxu0 0.0
  %704 = vmatpush1.msra.mxu0 %v204
  %705 = vmatprep.subr.mxu0 0.0
  %706 = vmatpush2.msra.mxu0 0.0
  %707 = vmatprep.subr.mxu0 0.0
  %708 = vmatpush2.msra.mxu0 0.0
  %709 = vmatprep.subr.mxu0 0.0
  %710 = vmatpush2.msra.mxu0 0.0
  %711 = vmatprep.subr.mxu0 0.0
  %712 = vmatpush2.msra.mxu0 0.0
  %713 = vmatprep.subr.mxu0 0.0
  %714 = vmatpush2.msra.mxu0 0.0
  %715 = vmatprep.subr.mxu0 0.0
  %716 = vmatpush2.msra.mxu0 0.0
  %717 = vmatprep.subr.mxu0 0.0
  %718 = vmatpush2.msra.mxu0 0.0
  %719 = vmatprep.subr.mxu0 0.0
  %720 = vmatpush2.msra.mxu0 0.0
  %721 = vmatprep.subr.mxu0 0.0
  %722 = vmatpush2.msra.mxu0 0.0
  %723 = vmatprep.subr.mxu0 0.0
  %724 = vmatpush2.msra.mxu0 0.0
  %725 = vmatprep.subr.mxu0 0.0
  %726 = vmatpush2.msra.mxu0 0.0
  %727 = vmatprep.subr.mxu0 0.0
  %728 = vmatpush2.msra.mxu0 0.0
  %729 = vmatprep.subr.mxu0 0.0
  %730 = vmatpush2.msra.mxu0 0.0
  %731 = vmatprep.subr.mxu0 0.0
  %732 = vmatpush2.msra.mxu0 0.0
  %733 = vmatprep.subr.mxu0 0.0
  %734 = vmatpush2.msra.mxu0 0.0
  %735 = vmatprep.subr.mxu0 0.0
  %736 = vmatpush2.msra.mxu0 0.0
  %737 = vmatprep.mubr.f32.mxu0 0.0
  %738 = vmatmul.mubr.f32.gmra.mxu0 %v668
  %v739 = vpop.f32.mrf.mxu0
  %v740 = vadd.f32 0.0, %v739
  %v741 = vpop.f32.mrf.mxu0
  %742 = vmatprep.mubr.f32.mxu0 0.0
  %743 = vmatmul.mubr.f32.gmra.mxu0 %v671
  %v744 = vpop.f32.mrf.mxu0
  %v745 = vadd.f32 0.0, %v744
  %v746 = vpop.f32.mrf.mxu0
  %747 = vdwg.mxu0
  %s748 = scalar_lea.vmem [#allocation2], 32
  %v749 = vld [vmem:[%s748] sm:$0xff]
  %v750 = vld [vmem:[%s748 + $0x8] sm:$0xff]
  %v751 = vld [vmem:[%s197] sm:$0xff]
  %v752 = vld [vmem:[%s197 + $0x8] sm:$0xff]
  %v753 = vadd.f32 %v749, %v740
  %v754 = vadd.f32 %v750, %v745
  %v755 = vxor.u32 %v753, 2147483648
  %v756 = vxor.u32 %v754, 2147483648
  %v757 = vmul.f32 %v755, 1.442695
  %v758 = vpow.pop %v757
  %v759 = vmul.f32 %v756, 1.442695
  %v760 = vpow.pop %v759
  %v761 = vadd.f32 %v758, 1.0
  %v762 = vadd.f32 %v760, 1.0
  %v763 = vrcp.pop %v761
  %v764 = vmul.f32 1.0, %v763
  %v765 = vrcp.pop %v762
  %v766 = vmul.f32 1.0, %v765
  %v767 = vadd.f32 %v740, %v314
  %v768 = vadd.f32 %v745, %v314
  %771 = vrot.lane.b32.xlu0 %v767, 96
  %v772 = vpop.permute.xlu0 %771
  %773 = vrot.lane.b32.xlu0 %v768, 96
  %v774 = vpop.permute.xlu0 %773
  %v777 = vmul.f32 %v764, %v772
  %v778 = vmul.f32 %v766, %v774
  %781 = vrot.lane.b32.xlu0 %v777, 32
  %v782 = vpop.permute.xlu0 %781
  %783 = vrot.lane.b32.xlu0 %v778, 32
  %v784 = vpop.permute.xlu0 %783
  %v787 = vadd.f32 %v749, %v782
  %v788 = vadd.f32 %v750, %v784
  %v789 = vtanh.pop %v787
  %v790 = vtanh.pop %v788
  %v791 = vsub.f32 1.0, %v764
  %v792 = vsub.f32 1.0, %v766
  %795 = vrot.lane.b32.xlu0 %v789, 112
  %v796 = vpop.permute.xlu0 %795
  %797 = vrot.lane.b32.xlu0 %v790, 112
  %v798 = vpop.permute.xlu0 %797
  %v801 = vmul.f32 %v791, %v796
  %v802 = vmul.f32 %v792, %v798
  %803 = vrot.lane.b32.xlu0 %v665, 16
  %v804 = vpop.permute.xlu0 %803
  %805 = vrot.lane.b32.xlu0 %v666, 16
  %v806 = vpop.permute.xlu0 %805
  %v809 = vmul.f32 %v764, %v804
  %v810 = vmul.f32 %v766, %v806
  %v811 = vadd.f32 %v801, %v809
  %v812 = vadd.f32 %v802, %v810
  %815 = vrot.lane.b32.xlu0 %v740, 80
  %v816 = vpop.permute.xlu0 %815
  %817 = vrot.lane.b32.xlu0 %v745, 80
  %v818 = vpop.permute.xlu0 %817
  %v821 = vadd.f32 %v751, %v816
  %v822 = vadd.f32 %v752, %v818
  %v823 = vxor.u32 %v821, 2147483648
  %v824 = vxor.u32 %v822, 2147483648
  %v825 = vmul.f32 %v823, 1.442695
  %v826 = vpow.pop %v825
  %v827 = vmul.f32 %v824, 1.442695
  %v828 = vpow.pop %v827
  %v829 = vadd.f32 %v826, 1.0
  %v830 = vadd.f32 %v828, 1.0
  %v831 = vrcp.pop %v829
  %v832 = vmul.f32 1.0, %v831
  %v833 = vrcp.pop %v830
  %v834 = vmul.f32 1.0, %v833
  %v835 = vadd.f32 %v740, %v384
  %v836 = vadd.f32 %v745, %v384
  %839 = vrot.lane.b32.xlu0 %v835, 48
  %v840 = vpop.permute.xlu0 %839
  %841 = vrot.lane.b32.xlu0 %v836, 48
  %v842 = vpop.permute.xlu0 %841
  %v845 = vmul.f32 %v832, %v840
  %v846 = vmul.f32 %v834, %v842
  %849 = vrot.lane.b32.xlu0 %v845, 32
  %v850 = vpop.permute.xlu0 %849
  %851 = vrot.lane.b32.xlu0 %v846, 32
  %v852 = vpop.permute.xlu0 %851
  %v855 = vadd.f32 %v751, %v850
  %v856 = vadd.f32 %v752, %v852
  %v857 = vtanh.pop %v855
  %v858 = vtanh.pop %v856
  %v859 = vsub.f32 1.0, %v832
  %v860 = vsub.f32 1.0, %v834
  %863 = vrot.lane.b32.xlu0 %v857, 112
  %v864 = vpop.permute.xlu0 %863
  %865 = vrot.lane.b32.xlu0 %v858, 112
  %v866 = vpop.permute.xlu0 %865
  %v869 = vmul.f32 %v859, %v864
  %v870 = vmul.f32 %v860, %v866
  %v871 = vmul.f32 %v832, %v665
  %v872 = vmul.f32 %v834, %v666
  %v873 = vadd.f32 %v869, %v871
  %v874 = vadd.f32 %v870, %v872
  %877 = vrot.lane.b32.xlu0 %v811, 112
  %v878 = vpop.permute.xlu0 %877
  %879 = vrot.lane.b32.xlu0 %v812, 112
  %v880 = vpop.permute.xlu0 %879
  %883 = vst.msk [vmem:[%s437] sm:$0xff] %vm434, %v878
  %884 = vst.msk [vmem:[%s437 + $0x8] sm:$0xff] %vm434, %v880
  %885 = vst.msk [vmem:[#allocation3] sm:$0xff] %vm438, %v873
  %886 = vst.msk [vmem:[#allocation3 + $0x8] sm:$0xff] %vm438, %v874
  %v887 = vld [vmem:[#allocation3] sm:$0xff]
  %v888 = vld [vmem:[#allocation3 + $0x8] sm:$0xff]
  %v889 = vld [vmem:[#allocation3 + $0x10] sm:$0xff]
  %v890 = vld [vmem:[#allocation3 + $0x18] sm:$0xff]
  %v891 = vld [vmem:[#allocation3 + $0x20] sm:$0xff]
  %v892 = vld [vmem:[#allocation3 + $0x28] sm:$0xff]
  %v893 = vld [vmem:[%s5] sm:$0xff]
  %v894 = vld [vmem:[%s5 + $0x8] sm:$0xff]
  %v895 = vld [vmem:[%s5 + $0x10] sm:$0xff]
  %v896 = vld [vmem:[%s5 + $0x18] sm:$0xff]
  %v897 = vld [vmem:[%s6] sm:$0x1]
  %v899 = vlaneseq
  %v900 = vshrl.u32 %v899, 7
  %v901 = vsub.s32 0, %v900
  %v902 = vrot.slane %v897, %v901
  %v905 = vsel %vm52, %v887, 0
  %v908 = vsel %vm52, %v888, 0
  %v911 = vsel %vm52, %v889, 0
  %v914 = vsel %vm52, %v890, 0
  %v917 = vsel %vm52, %v891, 0
  %v920 = vsel %vm52, %v892, 0
  %922 = vmatprep.subr.mxu0 0.0
  %923 = vmatpush1.msra.mxu0 0.0
  %924 = vmatprep.subr.mxu0 0.0
  %925 = vmatpush1.msra.mxu0 0.0
  %926 = vmatprep.subr.mxu0 0.0
  %927 = vmatpush1.msra.mxu0 0.0
  %928 = vmatprep.subr.mxu0 0.0
  %929 = vmatpush1.msra.mxu0 0.0
  %930 = vmatprep.subr.mxu0 0.0
  %931 = vmatpush1.msra.mxu0 0.0
  %932 = vmatprep.subr.mxu0 0.0
  %933 = vmatpush1.msra.mxu0 0.0
  %934 = vmatprep.subr.mxu0 0.0
  %935 = vmatpush1.msra.mxu0 0.0
  %936 = vmatprep.subr.mxu0 0.0
  %937 = vmatpush1.msra.mxu0 0.0
  %938 = vmatprep.subr.mxu0 0.0
  %939 = vmatpush1.msra.mxu0 0.0
  %940 = vmatprep.subr.mxu0 0.0
  %941 = vmatpush1.msra.mxu0 0.0
  %942 = vmatprep.subr.mxu0 0.0
  %943 = vmatpush1.msra.mxu0 0.0
  %944 = vmatprep.subr.mxu0 0.0
  %945 = vmatpush1.msra.mxu0 0.0
  %946 = vmatprep.subr.mxu0 0.0
  %947 = vmatpush1.msra.mxu0 %v896
  %948 = vmatprep.subr.mxu0 0.0
  %949 = vmatpush1.msra.mxu0 %v895
  %950 = vmatprep.subr.mxu0 0.0
  %951 = vmatpush1.msra.mxu0 %v894
  %952 = vmatprep.subr.mxu0 0.0
  %953 = vmatpush1.msra.mxu0 %v893
  %954 = vmatprep.subr.mxu0 0.0
  %955 = vmatpush2.msra.mxu0 0.0
  %956 = vmatprep.subr.mxu0 0.0
  %957 = vmatpush2.msra.mxu0 0.0
  %958 = vmatprep.subr.mxu0 0.0
  %959 = vmatpush2.msra.mxu0 0.0
  %960 = vmatprep.subr.mxu0 0.0
  %961 = vmatpush2.msra.mxu0 0.0
  %962 = vmatprep.subr.mxu0 0.0
  %963 = vmatpush2.msra.mxu0 0.0
  %964 = vmatprep.subr.mxu0 0.0
  %965 = vmatpush2.msra.mxu0 0.0
  %966 = vmatprep.subr.mxu0 0.0
  %967 = vmatpush2.msra.mxu0 0.0
  %968 = vmatprep.subr.mxu0 0.0
  %969 = vmatpush2.msra.mxu0 0.0
  %970 = vmatprep.subr.mxu0 0.0
  %971 = vmatpush2.msra.mxu0 0.0
  %972 = vmatprep.subr.mxu0 0.0
  %973 = vmatpush2.msra.mxu0 0.0
  %974 = vmatprep.subr.mxu0 0.0
  %975 = vmatpush2.msra.mxu0 0.0
  %976 = vmatprep.subr.mxu0 0.0
  %977 = vmatpush2.msra.mxu0 0.0
  %978 = vmatprep.subr.mxu0 0.0
  %979 = vmatpush2.msra.mxu0 0.0
  %980 = vmatprep.subr.mxu0 0.0
  %981 = vmatpush2.msra.mxu0 0.0
  %982 = vmatprep.subr.mxu0 0.0
  %983 = vmatpush2.msra.mxu0 0.0
  %984 = vmatprep.subr.mxu0 0.0
  %985 = vmatpush2.msra.mxu0 0.0
  %986 = vmatprep.mubr.f32.mxu0 0.0
  %987 = vmatmul.mubr.f32.gmra.mxu0 %v905
  %v988 = vpop.f32.mrf.mxu0
  %v989 = vadd.f32 %v902, %v988
  %v990 = vpop.f32.mrf.mxu0
  %991 = vmatprep.mubr.f32.mxu0 0.0
  %992 = vmatmul.mubr.f32.gmra.mxu0 %v908
  %v993 = vpop.f32.mrf.mxu0
  %v994 = vadd.f32 %v902, %v993
  %v995 = vpop.f32.mrf.mxu0
  %996 = vmatprep.mubr.f32.mxu0 0.0
  %997 = vmatmul.mubr.f32.gmra.mxu0 %v911
  %v998 = vpop.f32.mrf.mxu0
  %v999 = vadd.f32 %v902, %v998
  %v1000 = vpop.f32.mrf.mxu0
  %1001 = vmatprep.mubr.f32.mxu0 0.0
  %1002 = vmatmul.mubr.f32.gmra.mxu0 %v914
  %v1003 = vpop.f32.mrf.mxu0
  %v1004 = vadd.f32 %v902, %v1003
  %v1005 = vpop.f32.mrf.mxu0
  %1006 = vmatprep.mubr.f32.mxu0 0.0
  %1007 = vmatmul.mubr.f32.gmra.mxu0 %v917
  %v1008 = vpop.f32.mrf.mxu0
  %v1009 = vadd.f32 %v902, %v1008
  %v1010 = vpop.f32.mrf.mxu0
  %1011 = vmatprep.mubr.f32.mxu0 0.0
  %1012 = vmatmul.mubr.f32.gmra.mxu0 %v920
  %v1013 = vpop.f32.mrf.mxu0
  %v1014 = vadd.f32 %v902, %v1013
  %v1015 = vpop.f32.mrf.mxu0
  %1016 = vdwg.mxu0
  %v1017 = vtanh.pop %v989
  %v1018 = vtanh.pop %v994
  %v1019 = vtanh.pop %v999
  %v1020 = vtanh.pop %v1004
  %v1021 = vtanh.pop %v1009
  %v1022 = vtanh.pop %v1014
  %v1023 = vld [vmem:[%s7] sm:$0xff]
  %v1024 = vld [vmem:[%s7 + $0x8] sm:$0xff]
  %v1025 = vld [vmem:[%s7 + $0x10] sm:$0xff]
  %v1026 = vld [vmem:[%s7 + $0x18] sm:$0xff]
  %v1028 = vsel %vm52, %v1017, 0
  %v1031 = vsel %vm52, %v1018, 0
  %v1034 = vsel %vm52, %v1019, 0
  %v1037 = vsel %vm52, %v1020, 0
  %v1040 = vsel %vm52, %v1021, 0
  %v1043 = vsel %vm52, %v1022, 0
  %1045 = vmatprep.subr.mxu0 0.0
  %1046 = vmatpush1.msra.mxu0 0.0
  %1047 = vmatprep.subr.mxu0 0.0
  %1048 = vmatpush1.msra.mxu0 0.0
  %1049 = vmatprep.subr.mxu0 0.0
  %1050 = vmatpush1.msra.mxu0 0.0
  %1051 = vmatprep.subr.mxu0 0.0
  %1052 = vmatpush1.msra.mxu0 0.0
  %1053 = vmatprep.subr.mxu0 0.0
  %1054 = vmatpush1.msra.mxu0 0.0
  %1055 = vmatprep.subr.mxu0 0.0
  %1056 = vmatpush1.msra.mxu0 0.0
  %1057 = vmatprep.subr.mxu0 0.0
  %1058 = vmatpush1.msra.mxu0 0.0
  %1059 = vmatprep.subr.mxu0 0.0
  %1060 = vmatpush1.msra.mxu0 0.0
  %1061 = vmatprep.subr.mxu0 0.0
  %1062 = vmatpush1.msra.mxu0 0.0
  %1063 = vmatprep.subr.mxu0 0.0
  %1064 = vmatpush1.msra.mxu0 0.0
  %1065 = vmatprep.subr.mxu0 0.0
  %1066 = vmatpush1.msra.mxu0 0.0
  %1067 = vmatprep.subr.mxu0 0.0
  %1068 = vmatpush1.msra.mxu0 0.0
  %1069 = vmatprep.subr.mxu0 0.0
  %1070 = vmatpush1.msra.mxu0 %v1026
  %1071 = vmatprep.subr.mxu0 0.0
  %1072 = vmatpush1.msra.mxu0 %v1025
  %1073 = vmatprep.subr.mxu0 0.0
  %1074 = vmatpush1.msra.mxu0 %v1024
  %1075 = vmatprep.subr.mxu0 0.0
  %1076 = vmatpush1.msra.mxu0 %v1023
  %1077 = vmatprep.subr.mxu0 0.0
  %1078 = vmatpush2.msra.mxu0 0.0
  %1079 = vmatprep.subr.mxu0 0.0
  %1080 = vmatpush2.msra.mxu0 0.0
  %1081 = vmatprep.subr.mxu0 0.0
  %1082 = vmatpush2.msra.mxu0 0.0
  %1083 = vmatprep.subr.mxu0 0.0
  %1084 = vmatpush2.msra.mxu0 0.0
  %1085 = vmatprep.subr.mxu0 0.0
  %1086 = vmatpush2.msra.mxu0 0.0
  %1087 = vmatprep.subr.mxu0 0.0
  %1088 = vmatpush2.msra.mxu0 0.0
  %1089 = vmatprep.subr.mxu0 0.0
  %1090 = vmatpush2.msra.mxu0 0.0
  %1091 = vmatprep.subr.mxu0 0.0
  %1092 = vmatpush2.msra.mxu0 0.0
  %1093 = vmatprep.subr.mxu0 0.0
  %1094 = vmatpush2.msra.mxu0 0.0
  %1095 = vmatprep.subr.mxu0 0.0
  %1096 = vmatpush2.msra.mxu0 0.0
  %1097 = vmatprep.subr.mxu0 0.0
  %1098 = vmatpush2.msra.mxu0 0.0
  %1099 = vmatprep.subr.mxu0 0.0
  %1100 = vmatpush2.msra.mxu0 0.0
  %1101 = vmatprep.subr.mxu0 0.0
  %1102 = vmatpush2.msra.mxu0 0.0
  %1103 = vmatprep.subr.mxu0 0.0
  %1104 = vmatpush2.msra.mxu0 0.0
  %1105 = vmatprep.subr.mxu0 0.0
  %1106 = vmatpush2.msra.mxu0 0.0
  %1107 = vmatprep.subr.mxu0 0.0
  %1108 = vmatpush2.msra.mxu0 0.0
  %1109 = vmatprep.mubr.f32.mxu0 0.0
  %1110 = vmatmul.mubr.f32.gmra.mxu0 %v1028
  %v1111 = vpop.f32.mrf.mxu0
  %v1112 = vadd.f32 0.0, %v1111
  %v1113 = vpop.f32.mrf.mxu0
  %1114 = vmatprep.mubr.f32.mxu0 0.0
  %1115 = vmatmul.mubr.f32.gmra.mxu0 %v1031
  %v1116 = vpop.f32.mrf.mxu0
  %v1117 = vadd.f32 0.0, %v1116
  %v1118 = vpop.f32.mrf.mxu0
  %1119 = vmatprep.mubr.f32.mxu0 0.0
  %1120 = vmatmul.mubr.f32.gmra.mxu0 %v1034
  %v1121 = vpop.f32.mrf.mxu0
  %v1122 = vadd.f32 0.0, %v1121
  %v1123 = vpop.f32.mrf.mxu0
  %1124 = vmatprep.mubr.f32.mxu0 0.0
  %1125 = vmatmul.mubr.f32.gmra.mxu0 %v1037
  %v1126 = vpop.f32.mrf.mxu0
  %v1127 = vadd.f32 0.0, %v1126
  %v1128 = vpop.f32.mrf.mxu0
  %1129 = vmatprep.mubr.f32.mxu0 0.0
  %1130 = vmatmul.mubr.f32.gmra.mxu0 %v1040
  %v1131 = vpop.f32.mrf.mxu0
  %v1132 = vadd.f32 0.0, %v1131
  %v1133 = vpop.f32.mrf.mxu0
  %1134 = vmatprep.mubr.f32.mxu0 0.0
  %1135 = vmatmul.mubr.f32.gmra.mxu0 %v1043
  %v1136 = vpop.f32.mrf.mxu0
  %v1137 = vadd.f32 0.0, %v1136
  %v1138 = vpop.f32.mrf.mxu0
  %1139 = vdwg.mxu0
  %vm1140 = vcmask 7168
  %v1141 = vsel %vm1140, %v1112, -inf
  %v1142 = vsel %vm1140, %v1122, -inf
  %v1143 = vsel %vm1140, %v1132, -inf
  %v1144 = vmax.f32 %v1141, %v1143
  %v1145 = vmax.f32 %v1144, %v1142
  %v1146 = vsel %vm1140, %v1117, -inf
  %v1147 = vsel %vm1140, %v1127, -inf
  %v1148 = vsel %vm1140, %v1137, -inf
  %v1149 = vmax.f32 %v1146, %v1148
  %v1150 = vmax.f32 %v1149, %v1147
  %v1151 = vsub.f32 %v1112, %v1145
  %v1152 = vsub.f32 %v1117, %v1150
  %v1153 = vsub.f32 %v1122, %v1145
  %v1154 = vsub.f32 %v1127, %v1150
  %v1155 = vsub.f32 %v1132, %v1145
  %v1156 = vsub.f32 %v1137, %v1150
  %v1157 = vmul.f32 %v1151, 1.442695
  %v1158 = vpow.pop %v1157
  %v1159 = vmul.f32 %v1152, 1.442695
  %v1160 = vpow.pop %v1159
  %v1161 = vmul.f32 %v1153, 1.442695
  %v1162 = vpow.pop %v1161
  %v1163 = vmul.f32 %v1154, 1.442695
  %v1164 = vpow.pop %v1163
  %v1165 = vmul.f32 %v1155, 1.442695
  %v1166 = vpow.pop %v1165
  %v1167 = vmul.f32 %v1156, 1.442695
  %v1168 = vpow.pop %v1167
  %v1169 = vsel %vm1140, %v1158, 0.0
  %v1170 = vsel %vm1140, %v1162, 0.0
  %v1171 = vadd.f32 %v1169, %v1170
  %v1172 = vsel %vm1140, %v1166, 0.0
  %v1173 = vadd.f32 %v1171, %v1172
  %v1174 = vsel %vm1140, %v1160, 0.0
  %v1175 = vsel %vm1140, %v1164, 0.0
  %v1176 = vadd.f32 %v1174, %v1175
  %v1177 = vsel %vm1140, %v1168, 0.0
  %v1178 = vadd.f32 %v1176, %v1177
  %v1179 = vrcp.pop %v1173
  %v1180 = vrcp.pop %v1178
  %v1181 = vmul.f32 %v1158, %v1179
  %v1182 = vmul.f32 %v1160, %v1180
  %v1183 = vmul.f32 %v1162, %v1179
  %v1184 = vmul.f32 %v1164, %v1180
  %v1185 = vmul.f32 %v1166, %v1179
  %v1186 = vmul.f32 %v1168, %v1180
  %1188 = vset.pattern.permute.xlu0 0
  %1189 = vperm.xlu0 %1188, %v1181
  %v1190 = vpop.permute.xlu0 %1189
  %1193 = vset.pattern.permute.xlu0 0
  %1194 = vperm.xlu0 %1193, %v1182
  %v1195 = vpop.permute.xlu0 %1194
  %1198 = vset.pattern.permute.xlu0 0
  %1199 = vperm.xlu0 %1198, %v1183
  %v1200 = vpop.permute.xlu0 %1199
  %1203 = vset.pattern.permute.xlu0 0
  %1204 = vperm.xlu0 %1203, %v1184
  %v1205 = vpop.permute.xlu0 %1204
  %1208 = vset.pattern.permute.xlu0 0
  %1209 = vperm.xlu0 %1208, %v1185
  %v1210 = vpop.permute.xlu0 %1209
  %1213 = vset.pattern.permute.xlu0 0
  %1214 = vperm.xlu0 %1213, %v1186
  %v1215 = vpop.permute.xlu0 %1214
  %v1217 = vmul.f32 %v1190, %v887
  %v1218 = vmul.f32 %v1195, %v888
  %v1219 = vmul.f32 %v1200, %v889
  %v1220 = vmul.f32 %v1205, %v890
  %v1221 = vmul.f32 %v1210, %v891
  %v1222 = vmul.f32 %v1215, %v892
  %v1223 = vsel %vm52, %v1217, 0.0
  %v1224 = vsel %vm52, %v1219, 0.0
  %v1225 = vadd.f32 %v1223, %v1224
  %v1226 = vsel %vm52, %v1221, 0.0
  %v1227 = vadd.f32 %v1225, %v1226
  %v1228 = vsel %vm52, %v1218, 0.0
  %v1229 = vsel %vm52, %v1220, 0.0
  %v1230 = vadd.f32 %v1228, %v1229
  %v1231 = vsel %vm52, %v1222, 0.0
  %v1232 = vadd.f32 %v1230, %v1231
  %v1233 = vld [vmem:[%s8] sm:$0xff]
  %v1234 = vld [vmem:[%s8 + $0x8] sm:$0xff]
  %v1235 = vld [vmem:[%s8 + $0x10] sm:$0xff]
  %v1236 = vld [vmem:[%s8 + $0x18] sm:$0xff]
  %v1237 = vld [vmem:[%s9] sm:$0x1]
  %v1239 = vlaneseq
  %v1240 = vshrl.u32 %v1239, 7
  %v1241 = vsub.s32 0, %v1240
  %v1242 = vrot.slane %v1237, %v1241
  %v1245 = vsel %vm52, %v1227, 0
  %v1248 = vsel %vm52, %v1232, 0
  %1250 = vmatprep.subr.mxu0 0.0
  %1251 = vmatpush1.msra.mxu0 0.0
  %1252 = vmatprep.subr.mxu0 0.0
  %1253 = vmatpush1.msra.mxu0 0.0
  %1254 = vmatprep.subr.mxu0 0.0
  %1255 = vmatpush1.msra.mxu0 0.0
  %1256 = vmatprep.subr.mxu0 0.0
  %1257 = vmatpush1.msra.mxu0 0.0
  %1258 = vmatprep.subr.mxu0 0.0
  %1259 = vmatpush1.msra.mxu0 0.0
  %1260 = vmatprep.subr.mxu0 0.0
  %1261 = vmatpush1.msra.mxu0 0.0
  %1262 = vmatprep.subr.mxu0 0.0
  %1263 = vmatpush1.msra.mxu0 0.0
  %1264 = vmatprep.subr.mxu0 0.0
  %1265 = vmatpush1.msra.mxu0 0.0
  %1266 = vmatprep.subr.mxu0 0.0
  %1267 = vmatpush1.msra.mxu0 0.0
  %1268 = vmatprep.subr.mxu0 0.0
  %1269 = vmatpush1.msra.mxu0 0.0
  %1270 = vmatprep.subr.mxu0 0.0
  %1271 = vmatpush1.msra.mxu0 0.0
  %1272 = vmatprep.subr.mxu0 0.0
  %1273 = vmatpush1.msra.mxu0 0.0
  %1274 = vmatprep.subr.mxu0 0.0
  %1275 = vmatpush1.msra.mxu0 %v1236
  %1276 = vmatprep.subr.mxu0 0.0
  %1277 = vmatpush1.msra.mxu0 %v1235
  %1278 = vmatprep.subr.mxu0 0.0
  %1279 = vmatpush1.msra.mxu0 %v1234
  %1280 = vmatprep.subr.mxu0 0.0
  %1281 = vmatpush1.msra.mxu0 %v1233
  %1282 = vmatprep.subr.mxu0 0.0
  %1283 = vmatpush2.msra.mxu0 0.0
  %1284 = vmatprep.subr.mxu0 0.0
  %1285 = vmatpush2.msra.mxu0 0.0
  %1286 = vmatprep.subr.mxu0 0.0
  %1287 = vmatpush2.msra.mxu0 0.0
  %1288 = vmatprep.subr.mxu0 0.0
  %1289 = vmatpush2.msra.mxu0 0.0
  %1290 = vmatprep.subr.mxu0 0.0
  %1291 = vmatpush2.msra.mxu0 0.0
  %1292 = vmatprep.subr.mxu0 0.0
  %1293 = vmatpush2.msra.mxu0 0.0
  %1294 = vmatprep.subr.mxu0 0.0
  %1295 = vmatpush2.msra.mxu0 0.0
  %1296 = vmatprep.subr.mxu0 0.0
  %1297 = vmatpush2.msra.mxu0 0.0
  %1298 = vmatprep.subr.mxu0 0.0
  %1299 = vmatpush2.msra.mxu0 0.0
  %1300 = vmatprep.subr.mxu0 0.0
  %1301 = vmatpush2.msra.mxu0 0.0
  %1302 = vmatprep.subr.mxu0 0.0
  %1303 = vmatpush2.msra.mxu0 0.0
  %1304 = vmatprep.subr.mxu0 0.0
  %1305 = vmatpush2.msra.mxu0 0.0
  %1306 = vmatprep.subr.mxu0 0.0
  %1307 = vmatpush2.msra.mxu0 0.0
  %1308 = vmatprep.subr.mxu0 0.0
  %1309 = vmatpush2.msra.mxu0 0.0
  %1310 = vmatprep.subr.mxu0 0.0
  %1311 = vmatpush2.msra.mxu0 0.0
  %1312 = vmatprep.subr.mxu0 0.0
  %1313 = vmatpush2.msra.mxu0 0.0
  %1314 = vmatprep.mubr.f32.mxu0 0.0
  %1315 = vmatmul.mubr.f32.gmra.mxu0 %v1245
  %v1316 = vpop.f32.mrf.mxu0
  %v1317 = vadd.f32 %v1242, %v1316
  %v1318 = vpop.f32.mrf.mxu0
  %1319 = vmatprep.mubr.f32.mxu0 0.0
  %1320 = vmatmul.mubr.f32.gmra.mxu0 %v1248
  %v1321 = vpop.f32.mrf.mxu0
  %v1322 = vadd.f32 %v1242, %v1321
  %v1323 = vpop.f32.mrf.mxu0
  %1324 = vdwg.mxu0
  %vm1325 = vcmask 31744
  %1326 = vst.msk [vmem:[%s10] sm:$0xff] %vm1325, %v1317
  %1327 = vst.msk [vmem:[%s10 + $0x8] sm:$0xff] %vm1325, %v1322
  // Predicated region
  $region42: #{han_forward.3} parent=0 // pred_check
    _
  $region43: #{han_forward.3} parent=0 // pred_check_branch
    %1329 = sbr.rel (0) target = $region45
  $region44: #{han_forward.3} parent=0 // pred_region
    _
  $region45: #{han_forward.3} parent=0 // pred_fallthru
    _
  // Predicated region
  $region46: #{han_forward.3} parent=0 // pred_check
    _
  $region47: #{han_forward.3} parent=0 // pred_check_branch
    %1331 = sbr.rel (0) target = $region49
  $region48: #{han_forward.3} parent=0 // pred_region
    _
  $region49: #{han_forward.3} parent=0 // pred_fallthru
    _

// kernel: han_forward.2
$region0: #{han_forward.2}
  #allocation0 [shape = 'u32[]', space=smem, size = 0x4, offset = 0x4, fixed_abs, tag = 'smem constant byte address 0x4 - core index']
  #allocation1 [shape = 'u32[144,128]{1,0:T(1,128)}', space=vmem, size = 0x12000, scoped, tag = 'internal scratch']
  #allocation2 [shape = 'f32[2,8,16,48]{3,2,1,0:T(8,128)}', space=vmem, size = 0x20000, scoped, tag = 'scratch operand']
  #allocation3 [shape = 'f32[8,16,32]{2,1,0:T(8,128)}', space=vmem, size = 0x10000, scoped, tag = 'scratch operand']
  %s0 = inlined_call_operand.vmem [shape: f32[8,16,32], index: 0, kind: input, shape index: {}]
  %s1 = inlined_call_operand.vmem [shape: f32[32,96], index: 1, kind: input, shape index: {}]
  %s2 = inlined_call_operand.vmem [shape: f32[1,96], index: 2, kind: input, shape index: {}]
  %s3 = inlined_call_operand.vmem [shape: f32[32,96], index: 3, kind: input, shape index: {}]
  %s4 = inlined_call_operand.vmem [shape: f32[2,1,16], index: 4, kind: input, shape index: {}]
  %s5 = inlined_call_operand.vmem [shape: f32[32,32], index: 5, kind: input, shape index: {}]
  %s6 = inlined_call_operand.vmem [shape: f32[1,32], index: 6, kind: input, shape index: {}]
  %s7 = inlined_call_operand.vmem [shape: f32[32,1], index: 7, kind: input, shape index: {}]
  %s8 = inlined_call_operand.vmem [shape: f32[16,32], index: 8, kind: output, shape index: {}]
  %s9 = sld [smem:[#allocation0]]
  $region42: #{han_forward.2} parent=0
    _
  %s11 = ssub.s32 1, %s9
  %s12 = scalar_select 0, %s11, %s9
  // Predicated region
  $region2: #{han_forward.2} parent=0 // pred_check
    _
  $region3: #{han_forward.2} parent=0 // pred_check_branch
    %14 = sbr.rel (0) target = $region5
  $region4: #{han_forward.2} parent=0 // pred_region
    _
  $region5: #{han_forward.2} parent=0 // pred_fallthru
    _
  // Predicated region
  $region6: #{han_forward.2} parent=0 // pred_check
    _
  $region7: #{han_forward.2} parent=0 // pred_check_branch
    %16 = sbr.rel (0) target = $region9
  $region8: #{han_forward.2} parent=0 // pred_region
    _
  $region9: #{han_forward.2} parent=0 // pred_fallthru
    _
  // Predicated region
  $region10: #{han_forward.2} parent=0 // pred_check
    _
  $region11: #{han_forward.2} parent=0 // pred_check_branch
    %18 = sbr.rel (0) target = $region13
  $region12: #{han_forward.2} parent=0 // pred_region
    _
  $region13: #{han_forward.2} parent=0 // pred_fallthru
    _
  // Predicated region
  $region14: #{han_forward.2} parent=0 // pred_check
    _
  $region15: #{han_forward.2} parent=0 // pred_check_branch
    %20 = sbr.rel (0) target = $region17
  $region16: #{han_forward.2} parent=0 // pred_region
    _
  $region17: #{han_forward.2} parent=0 // pred_fallthru
    _
  // Predicated region
  $region18: #{han_forward.2} parent=0 // pred_check
    _
  $region19: #{han_forward.2} parent=0 // pred_check_branch
    %22 = sbr.rel (0) target = $region21
  $region20: #{han_forward.2} parent=0 // pred_region
    _
  $region21: #{han_forward.2} parent=0 // pred_fallthru
    _
  // Predicated region
  $region22: #{han_forward.2} parent=0 // pred_check
    _
  $region23: #{han_forward.2} parent=0 // pred_check_branch
    %24 = sbr.rel (0) target = $region25
  $region24: #{han_forward.2} parent=0 // pred_region
    _
  $region25: #{han_forward.2} parent=0 // pred_fallthru
    _
  // Predicated region
  $region26: #{han_forward.2} parent=0 // pred_check
    _
  $region27: #{han_forward.2} parent=0 // pred_check_branch
    %26 = sbr.rel (0) target = $region29
  $region28: #{han_forward.2} parent=0 // pred_region
    _
  $region29: #{han_forward.2} parent=0 // pred_fallthru
    _
  // Predicated region
  $region30: #{han_forward.2} parent=0 // pred_check
    _
  $region31: #{han_forward.2} parent=0 // pred_check_branch
    %28 = sbr.rel (0) target = $region33
  $region32: #{han_forward.2} parent=0 // pred_region
    _
  $region33: #{han_forward.2} parent=0 // pred_fallthru
    _
  %v29 = vld [vmem:[%s0] sm:$0xff]
  %v30 = vld [vmem:[%s0 + $0x8] sm:$0xff]
  %v31 = vld [vmem:[%s0 + $0x10] sm:$0xff]
  %v32 = vld [vmem:[%s0 + $0x18] sm:$0xff]
  %v33 = vld [vmem:[%s0 + $0x20] sm:$0xff]
  %v34 = vld [vmem:[%s0 + $0x28] sm:$0xff]
  %v35 = vld [vmem:[%s0 + $0x30] sm:$0xff]
  %v36 = vld [vmem:[%s0 + $0x38] sm:$0xff]
  %v37 = vld [vmem:[%s0 + $0x40] sm:$0xff]
  %v38 = vld [vmem:[%s0 + $0x48] sm:$0xff]
  %v39 = vld [vmem:[%s0 + $0x50] sm:$0xff]
  %v40 = vld [vmem:[%s0 + $0x58] sm:$0xff]
  %v41 = vld [vmem:[%s0 + $0x60] sm:$0xff]
  %v42 = vld [vmem:[%s0 + $0x68] sm:$0xff]
  %v43 = vld [vmem:[%s0 + $0x70] sm:$0xff]
  %v44 = vld [vmem:[%s0 + $0x78] sm:$0xff]
  %v45 = vld [vmem:[%s1] sm:$0xff]
  %v46 = vld [vmem:[%s1 + $0x8] sm:$0xff]
  %v47 = vld [vmem:[%s1 + $0x10] sm:$0xff]
  %v48 = vld [vmem:[%s1 + $0x18] sm:$0xff]
  %v49 = vld [vmem:[%s2] sm:$0x1]
  %v51 = vlaneseq
  %v52 = vshrl.u32 %v51, 7
  %v53 = vsub.s32 0, %v52
  %v54 = vrot.slane %v49, %v53
  %vm56 = vcmask 261120
  %v58 = vsel %vm56, %v29, 0
  %v61 = vsel %vm56, %v30, 0
  %v64 = vsel %vm56, %v31, 0
  %v67 = vsel %vm56, %v32, 0
  %v70 = vsel %vm56, %v33, 0
  %v73 = vsel %vm56, %v34, 0
  %v76 = vsel %vm56, %v35, 0
  %v79 = vsel %vm56, %v36, 0
  %v82 = vsel %vm56, %v37, 0
  %v85 = vsel %vm56, %v38, 0
  %v88 = vsel %vm56, %v39, 0
  %v91 = vsel %vm56, %v40, 0
  %v94 = vsel %vm56, %v41, 0
  %v97 = vsel %vm56, %v42, 0
  %v100 = vsel %vm56, %v43, 0
  %v103 = vsel %vm56, %v44, 0
  %105 = vmatprep.subr.mxu0 0.0
  %106 = vmatpush1.msra.mxu0 0.0
  %107 = vmatprep.subr.mxu0 0.0
  %108 = vmatpush1.msra.mxu0 0.0
  %109 = vmatprep.subr.mxu0 0.0
  %110 = vmatpush1.msra.mxu0 0.0
  %111 = vmatprep.subr.mxu0 0.0
  %112 = vmatpush1.msra.mxu0 0.0
  %113 = vmatprep.subr.mxu0 0.0
  %114 = vmatpush1.msra.mxu0 0.0
  %115 = vmatprep.subr.mxu0 0.0
  %116 = vmatpush1.msra.mxu0 0.0
  %117 = vmatprep.subr.mxu0 0.0
  %118 = vmatpush1.msra.mxu0 0.0
  %119 = vmatprep.subr.mxu0 0.0
  %120 = vmatpush1.msra.mxu0 0.0
  %121 = vmatprep.subr.mxu0 0.0
  %122 = vmatpush1.msra.mxu0 0.0
  %123 = vmatprep.subr.mxu0 0.0
  %124 = vmatpush1.msra.mxu0 0.0
  %125 = vmatprep.subr.mxu0 0.0
  %126 = vmatpush1.msra.mxu0 0.0
  %127 = vmatprep.subr.mxu0 0.0
  %128 = vmatpush1.msra.mxu0 0.0
  %129 = vmatprep.subr.mxu0 0.0
  %130 = vmatpush1.msra.mxu0 %v48
  %131 = vmatprep.subr.mxu0 0.0
  %132 = vmatpush1.msra.mxu0 %v47
  %133 = vmatprep.subr.mxu0 0.0
  %134 = vmatpush1.msra.mxu0 %v46
  %135 = vmatprep.subr.mxu0 0.0
  %136 = vmatpush1.msra.mxu0 %v45
  %137 = vmatprep.subr.mxu0 0.0
  %138 = vmatpush2.msra.mxu0 0.0
  %139 = vmatprep.subr.mxu0 0.0
  %140 = vmatpush2.msra.mxu0 0.0
  %141 = vmatprep.subr.mxu0 0.0
  %142 = vmatpush2.msra.mxu0 0.0
  %143 = vmatprep.subr.mxu0 0.0
  %144 = vmatpush2.msra.mxu0 0.0
  %145 = vmatprep.subr.mxu0 0.0
  %146 = vmatpush2.msra.mxu0 0.0
  %147 = vmatprep.subr.mxu0 0.0
  %148 = vmatpush2.msra.mxu0 0.0
  %149 = vmatprep.subr.mxu0 0.0
  %150 = vmatpush2.msra.mxu0 0.0
  %151 = vmatprep.subr.mxu0 0.0
  %152 = vmatpush2.msra.mxu0 0.0
  %153 = vmatprep.subr.mxu0 0.0
  %154 = vmatpush2.msra.mxu0 0.0
  %155 = vmatprep.subr.mxu0 0.0
  %156 = vmatpush2.msra.mxu0 0.0
  %157 = vmatprep.subr.mxu0 0.0
  %158 = vmatpush2.msra.mxu0 0.0
  %159 = vmatprep.subr.mxu0 0.0
  %160 = vmatpush2.msra.mxu0 0.0
  %161 = vmatprep.subr.mxu0 0.0
  %162 = vmatpush2.msra.mxu0 0.0
  %163 = vmatprep.subr.mxu0 0.0
  %164 = vmatpush2.msra.mxu0 0.0
  %165 = vmatprep.subr.mxu0 0.0
  %166 = vmatpush2.msra.mxu0 0.0
  %167 = vmatprep.subr.mxu0 0.0
  %168 = vmatpush2.msra.mxu0 0.0
  %169 = vmatprep.mubr.f32.mxu0 0.0
  %170 = vmatmul.mubr.f32.gmra.mxu0 %v58
  %v171 = vpop.f32.mrf.mxu0
  %v172 = vadd.f32 %v54, %v171
  %v173 = vpop.f32.mrf.mxu0
  %174 = vmatprep.mubr.f32.mxu0 0.0
  %175 = vmatmul.mubr.f32.gmra.mxu0 %v61
  %v176 = vpop.f32.mrf.mxu0
  %v177 = vadd.f32 %v54, %v176
  %v178 = vpop.f32.mrf.mxu0
  %179 = vmatprep.mubr.f32.mxu0 0.0
  %180 = vmatmul.mubr.f32.gmra.mxu0 %v64
  %v181 = vpop.f32.mrf.mxu0
  %v182 = vadd.f32 %v54, %v181
  %v183 = vpop.f32.mrf.mxu0
  %184 = vmatprep.mubr.f32.mxu0 0.0
  %185 = vmatmul.mubr.f32.gmra.mxu0 %v67
  %v186 = vpop.f32.mrf.mxu0
  %v187 = vadd.f32 %v54, %v186
  %v188 = vpop.f32.mrf.mxu0
  %189 = vmatprep.mubr.f32.mxu0 0.0
  %190 = vmatmul.mubr.f32.gmra.mxu0 %v70
  %v191 = vpop.f32.mrf.mxu0
  %v192 = vadd.f32 %v54, %v191
  %v193 = vpop.f32.mrf.mxu0
  %194 = vmatprep.mubr.f32.mxu0 0.0
  %195 = vmatmul.mubr.f32.gmra.mxu0 %v73
  %v196 = vpop.f32.mrf.mxu0
  %v197 = vadd.f32 %v54, %v196
  %v198 = vpop.f32.mrf.mxu0
  %199 = vmatprep.mubr.f32.mxu0 0.0
  %200 = vmatmul.mubr.f32.gmra.mxu0 %v76
  %v201 = vpop.f32.mrf.mxu0
  %v202 = vadd.f32 %v54, %v201
  %v203 = vpop.f32.mrf.mxu0
  %204 = vmatprep.mubr.f32.mxu0 0.0
  %205 = vmatmul.mubr.f32.gmra.mxu0 %v79
  %v206 = vpop.f32.mrf.mxu0
  %v207 = vadd.f32 %v54, %v206
  %v208 = vpop.f32.mrf.mxu0
  %209 = vmatprep.mubr.f32.mxu0 0.0
  %210 = vmatmul.mubr.f32.gmra.mxu0 %v82
  %v211 = vpop.f32.mrf.mxu0
  %v212 = vadd.f32 %v54, %v211
  %v213 = vpop.f32.mrf.mxu0
  %214 = vmatprep.mubr.f32.mxu0 0.0
  %215 = vmatmul.mubr.f32.gmra.mxu0 %v85
  %v216 = vpop.f32.mrf.mxu0
  %v217 = vadd.f32 %v54, %v216
  %v218 = vpop.f32.mrf.mxu0
  %219 = vmatprep.mubr.f32.mxu0 0.0
  %220 = vmatmul.mubr.f32.gmra.mxu0 %v88
  %v221 = vpop.f32.mrf.mxu0
  %v222 = vadd.f32 %v54, %v221
  %v223 = vpop.f32.mrf.mxu0
  %224 = vmatprep.mubr.f32.mxu0 0.0
  %225 = vmatmul.mubr.f32.gmra.mxu0 %v91
  %v226 = vpop.f32.mrf.mxu0
  %v227 = vadd.f32 %v54, %v226
  %v228 = vpop.f32.mrf.mxu0
  %229 = vmatprep.mubr.f32.mxu0 0.0
  %230 = vmatmul.mubr.f32.gmra.mxu0 %v94
  %v231 = vpop.f32.mrf.mxu0
  %v232 = vadd.f32 %v54, %v231
  %v233 = vpop.f32.mrf.mxu0
  %234 = vmatprep.mubr.f32.mxu0 0.0
  %235 = vmatmul.mubr.f32.gmra.mxu0 %v97
  %v236 = vpop.f32.mrf.mxu0
  %v237 = vadd.f32 %v54, %v236
  %v238 = vpop.f32.mrf.mxu0
  %239 = vmatprep.mubr.f32.mxu0 0.0
  %240 = vmatmul.mubr.f32.gmra.mxu0 %v100
  %v241 = vpop.f32.mrf.mxu0
  %v242 = vadd.f32 %v54, %v241
  %v243 = vpop.f32.mrf.mxu0
  %244 = vmatprep.mubr.f32.mxu0 0.0
  %245 = vmatmul.mubr.f32.gmra.mxu0 %v103
  %v246 = vpop.f32.mrf.mxu0
  %v247 = vadd.f32 %v54, %v246
  %v248 = vpop.f32.mrf.mxu0
  %249 = vdwg.mxu0
  %vm250 = vcmask 392192
  %251 = vst.msk [vmem:[#allocation2] sm:$0xff] %vm250, %v172
  %252 = vst.msk [vmem:[#allocation2 + $0x8] sm:$0xff] %vm250, %v177
  %253 = vst.msk [vmem:[#allocation2 + $0x10] sm:$0xff] %vm250, %v182
  %254 = vst.msk [vmem:[#allocation2 + $0x18] sm:$0xff] %vm250, %v187
  %255 = vst.msk [vmem:[#allocation2 + $0x20] sm:$0xff] %vm250, %v192
  %256 = vst.msk [vmem:[#allocation2 + $0x28] sm:$0xff] %vm250, %v197
  %257 = vst.msk [vmem:[#allocation2 + $0x30] sm:$0xff] %vm250, %v202
  %258 = vst.msk [vmem:[#allocation2 + $0x38] sm:$0xff] %vm250, %v207
  %259 = vst.msk [vmem:[#allocation2 + $0x40] sm:$0xff] %vm250, %v212
  %260 = vst.msk [vmem:[#allocation2 + $0x48] sm:$0xff] %vm250, %v217
  %261 = vst.msk [vmem:[#allocation2 + $0x50] sm:$0xff] %vm250, %v222
  %262 = vst.msk [vmem:[#allocation2 + $0x58] sm:$0xff] %vm250, %v227
  %263 = vst.msk [vmem:[#allocation2 + $0x60] sm:$0xff] %vm250, %v232
  %264 = vst.msk [vmem:[#allocation2 + $0x68] sm:$0xff] %vm250, %v237
  %265 = vst.msk [vmem:[#allocation2 + $0x70] sm:$0xff] %vm250, %v242
  %266 = vst.msk [vmem:[#allocation2 + $0x78] sm:$0xff] %vm250, %v247
  %283 = vrot.lane.b32.xlu0 %v172, 80
  %v284 = vpop.permute.xlu0 %283
  %285 = vrot.lane.b32.xlu0 %v177, 80
  %v286 = vpop.permute.xlu0 %285
  %287 = vrot.lane.b32.xlu0 %v182, 80
  %v288 = vpop.permute.xlu0 %287
  %289 = vrot.lane.b32.xlu0 %v187, 80
  %v290 = vpop.permute.xlu0 %289
  %291 = vrot.lane.b32.xlu0 %v192, 80
  %v292 = vpop.permute.xlu0 %291
  %293 = vrot.lane.b32.xlu0 %v197, 80
  %v294 = vpop.permute.xlu0 %293
  %295 = vrot.lane.b32.xlu0 %v202, 80
  %v296 = vpop.permute.xlu0 %295
  %297 = vrot.lane.b32.xlu0 %v207, 80
  %v298 = vpop.permute.xlu0 %297
  %299 = vrot.lane.b32.xlu0 %v212, 80
  %v300 = vpop.permute.xlu0 %299
  %301 = vrot.lane.b32.xlu0 %v217, 80
  %v302 = vpop.permute.xlu0 %301
  %303 = vrot.lane.b32.xlu0 %v222, 80
  %v304 = vpop.permute.xlu0 %303
  %305 = vrot.lane.b32.xlu0 %v227, 80
  %v306 = vpop.permute.xlu0 %305
  %307 = vrot.lane.b32.xlu0 %v232, 80
  %v308 = vpop.permute.xlu0 %307
  %309 = vrot.lane.b32.xlu0 %v237, 80
  %v310 = vpop.permute.xlu0 %309
  %311 = vrot.lane.b32.xlu0 %v242, 80
  %v312 = vpop.permute.xlu0 %311
  %313 = vrot.lane.b32.xlu0 %v247, 80
  %v314 = vpop.permute.xlu0 %313
  %s331 = scalar_lea.vmem [#allocation2], 128
  %332 = vst.msk [vmem:[%s331] sm:$0xff] %vm250, %v284
  %333 = vst.msk [vmem:[%s331 + $0x8] sm:$0xff] %vm250, %v286
  %334 = vst.msk [vmem:[%s331 + $0x10] sm:$0xff] %vm250, %v288
  %335 = vst.msk [vmem:[%s331 + $0x18] sm:$0xff] %vm250, %v290
  %336 = vst.msk [vmem:[%s331 + $0x20] sm:$0xff] %vm250, %v292
  %337 = vst.msk [vmem:[%s331 + $0x28] sm:$0xff] %vm250, %v294
  %338 = vst.msk [vmem:[%s331 + $0x30] sm:$0xff] %vm250, %v296
  %339 = vst.msk [vmem:[%s331 + $0x38] sm:$0xff] %vm250, %v298
  %340 = vst.msk [vmem:[%s331 + $0x40] sm:$0xff] %vm250, %v300
  %341 = vst.msk [vmem:[%s331 + $0x48] sm:$0xff] %vm250, %v302
  %342 = vst.msk [vmem:[%s331 + $0x50] sm:$0xff] %vm250, %v304
  %343 = vst.msk [vmem:[%s331 + $0x58] sm:$0xff] %vm250, %v306
  %344 = vst.msk [vmem:[%s331 + $0x60] sm:$0xff] %vm250, %v308
  %345 = vst.msk [vmem:[%s331 + $0x68] sm:$0xff] %vm250, %v310
  %346 = vst.msk [vmem:[%s331 + $0x70] sm:$0xff] %vm250, %v312
  %347 = vst.msk [vmem:[%s331 + $0x78] sm:$0xff] %vm250, %v314
  %v348 = vld [vmem:[%s3] sm:$0xff]
  %v349 = vld [vmem:[%s3 + $0x8] sm:$0xff]
  %v350 = vld [vmem:[%s3 + $0x10] sm:$0xff]
  %v351 = vld [vmem:[%s3 + $0x18] sm:$0xff]
  %v352 = vld [vmem:[%s4] sm:$0x1]
  %s353 = scalar_lea.vmem %s4, 1
  %v354 = vld [vmem:[%s353] sm:$0x1]
  %v356 = vsel %vm56, 0.0, 0
  %358 = vmatprep.subr.mxu0 0.0
  %359 = vmatpush1.msra.mxu0 0.0
  %360 = vmatprep.subr.mxu0 0.0
  %361 = vmatpush1.msra.mxu0 0.0
  %362 = vmatprep.subr.mxu0 0.0
  %363 = vmatpush1.msra.mxu0 0.0
  %364 = vmatprep.subr.mxu0 0.0
  %365 = vmatpush1.msra.mxu0 0.0
  %366 = vmatprep.subr.mxu0 0.0
  %367 = vmatpush1.msra.mxu0 0.0
  %368 = vmatprep.subr.mxu0 0.0
  %369 = vmatpush1.msra.mxu0 0.0
  %370 = vmatprep.subr.mxu0 0.0
  %371 = vmatpush1.msra.mxu0 0.0
  %372 = vmatprep.subr.mxu0 0.0
  %373 = vmatpush1.msra.mxu0 0.0
  %374 = vmatprep.subr.mxu0 0.0
  %375 = vmatpush1.msra.mxu0 0.0
  %376 = vmatprep.subr.mxu0 0.0
  %377 = vmatpush1.msra.mxu0 0.0
  %378 = vmatprep.subr.mxu0 0.0
  %379 = vmatpush1.msra.mxu0 0.0
  %380 = vmatprep.subr.mxu0 0.0
  %381 = vmatpush1.msra.mxu0 0.0
  %382 = vmatprep.subr.mxu0 0.0
  %383 = vmatpush1.msra.mxu0 %v351
  %384 = vmatprep.subr.mxu0 0.0
  %385 = vmatpush1.msra.mxu0 %v350
  %386 = vmatprep.subr.mxu0 0.0
  %387 = vmatpush1.msra.mxu0 %v349
  %388 = vmatprep.subr.mxu0 0.0
  %389 = vmatpush1.msra.mxu0 %v348
  %390 = vmatprep.subr.mxu0 0.0
  %391 = vmatpush2.msra.mxu0 0.0
  %392 = vmatprep.subr.mxu0 0.0
  %393 = vmatpush2.msra.mxu0 0.0
  %394 = vmatprep.subr.mxu0 0.0
  %395 = vmatpush2.msra.mxu0 0.0
  %396 = vmatprep.subr.mxu0 0.0
  %397 = vmatpush2.msra.mxu0 0.0
  %398 = vmatprep.subr.mxu0 0.0
  %399 = vmatpush2.msra.mxu0 0.0
  %400 = vmatprep.subr.mxu0 0.0
  %401 = vmatpush2.msra.mxu0 0.0
  %402 = vmatprep.subr.mxu0 0.0
  %403 = vmatpush2.msra.mxu0 0.0
  %404 = vmatprep.subr.mxu0 0.0
  %405 = vmatpush2.msra.mxu0 0.0
  %406 = vmatprep.subr.mxu0 0.0
  %407 = vmatpush2.msra.mxu0 0.0
  %408 = vmatprep.subr.mxu0 0.0
  %409 = vmatpush2.msra.mxu0 0.0
  %410 = vmatprep.subr.mxu0 0.0
  %411 = vmatpush2.msra.mxu0 0.0
  %412 = vmatprep.subr.mxu0 0.0
  %413 = vmatpush2.msra.mxu0 0.0
  %414 = vmatprep.subr.mxu0 0.0
  %415 = vmatpush2.msra.mxu0 0.0
  %416 = vmatprep.subr.mxu0 0.0
  %417 = vmatpush2.msra.mxu0 0.0
  %418 = vmatprep.subr.mxu0 0.0
  %419 = vmatpush2.msra.mxu0 0.0
  %420 = vmatprep.subr.mxu0 0.0
  %421 = vmatpush2.msra.mxu0 0.0
  %422 = vmatprep.mubr.f32.mxu0 0.0
  %423 = vmatmul.mubr.f32.gmra.mxu0 %v356
  %v424 = vpop.f32.mrf.mxu0
  %v425 = vadd.f32 0.0, %v424
  %v426 = vpop.f32.mrf.mxu0
  %427 = vmatprep.mubr.f32.mxu0 0.0
  %428 = vmatmul.mubr.f32.gmra.mxu0 %v356
  %v429 = vpop.f32.mrf.mxu0
  %v430 = vadd.f32 0.0, %v429
  %v431 = vpop.f32.mrf.mxu0
  %432 = vdwg.mxu0
  %v433 = vld [vmem:[#allocation2] sm:$0xff]
  %v434 = vld [vmem:[#allocation2 + $0x8] sm:$0xff]
  %s435 = scalar_lea.vmem [#allocation2], 240
  %v436 = vld [vmem:[%s435] sm:$0xff]
  %v437 = vld [vmem:[%s435 + $0x8] sm:$0xff]
  %v438 = vadd.f32 %v433, %v425
  %v439 = vadd.f32 %v434, %v430
  %v440 = vxor.u32 %v438, 2147483648
  %v441 = vxor.u32 %v439, 2147483648
  %v442 = vmul.f32 %v440, 1.442695
  %v443 = vpow.pop %v442
  %v444 = vmul.f32 %v441, 1.442695
  %v445 = vpow.pop %v444
  %v446 = vadd.f32 %v443, 1.0
  %v447 = vadd.f32 %v445, 1.0
  %v448 = vrcp.pop %v446
  %v449 = vmul.f32 1.0, %v448
  %v450 = vrcp.pop %v447
  %v451 = vmul.f32 1.0, %v450
  %v453 = vlaneseq
  %v454 = vshrl.u32 %v453, 7
  %v455 = vsub.s32 0, %v454
  %v456 = vrot.slane %v352, %v455
  %457 = vrot.lane.b32.xlu0 %v456, 32
  %v458 = vpop.permute.xlu0 %457
  %v460 = vadd.f32 %v425, %v458
  %v461 = vadd.f32 %v430, %v458
  %464 = vrot.lane.b32.xlu0 %v460, 96
  %v465 = vpop.permute.xlu0 %464
  %466 = vrot.lane.b32.xlu0 %v461, 96
  %v467 = vpop.permute.xlu0 %466
  %v470 = vmul.f32 %v449, %v465
  %v471 = vmul.f32 %v451, %v467
  %474 = vrot.lane.b32.xlu0 %v470, 32
  %v475 = vpop.permute.xlu0 %474
  %476 = vrot.lane.b32.xlu0 %v471, 32
  %v477 = vpop.permute.xlu0 %476
  %v480 = vadd.f32 %v433, %v475
  %v481 = vadd.f32 %v434, %v477
  %v482 = vtanh.pop %v480
  %v483 = vtanh.pop %v481
  %v484 = vsub.f32 1.0, %v449
  %v485 = vsub.f32 1.0, %v451
  %488 = vrot.lane.b32.xlu0 %v482, 112
  %v489 = vpop.permute.xlu0 %488
  %490 = vrot.lane.b32.xlu0 %v483, 112
  %v491 = vpop.permute.xlu0 %490
  %v494 = vmul.f32 %v484, %v489
  %v495 = vmul.f32 %v485, %v491
  %v496 = vmul.f32 %v449, 0.0
  %v497 = vmul.f32 %v451, 0.0
  %v498 = vadd.f32 %v494, %v496
  %v499 = vadd.f32 %v495, %v497
  %502 = vrot.lane.b32.xlu0 %v425, 80
  %v503 = vpop.permute.xlu0 %502
  %504 = vrot.lane.b32.xlu0 %v430, 80
  %v505 = vpop.permute.xlu0 %504
  %v508 = vadd.f32 %v436, %v503
  %v509 = vadd.f32 %v437, %v505
  %v510 = vxor.u32 %v508, 2147483648
  %v511 = vxor.u32 %v509, 2147483648
  %v512 = vmul.f32 %v510, 1.442695
  %v513 = vpow.pop %v512
  %v514 = vmul.f32 %v511, 1.442695
  %v515 = vpow.pop %v514
  %v516 = vadd.f32 %v513, 1.0
  %v517 = vadd.f32 %v515, 1.0
  %v518 = vrcp.pop %v516
  %v519 = vmul.f32 1.0, %v518
  %v520 = vrcp.pop %v517
  %v521 = vmul.f32 1.0, %v520
  %v523 = vlaneseq
  %v524 = vshrl.u32 %v523, 7
  %v525 = vsub.s32 0, %v524
  %v526 = vrot.slane %v354, %v525
  %527 = vrot.lane.b32.xlu0 %v526, 80
  %v528 = vpop.permute.xlu0 %527
  %v530 = vadd.f32 %v425, %v528
  %v531 = vadd.f32 %v430, %v528
  %534 = vrot.lane.b32.xlu0 %v530, 48
  %v535 = vpop.permute.xlu0 %534
  %536 = vrot.lane.b32.xlu0 %v531, 48
  %v537 = vpop.permute.xlu0 %536
  %v540 = vmul.f32 %v519, %v535
  %v541 = vmul.f32 %v521, %v537
  %544 = vrot.lane.b32.xlu0 %v540, 32
  %v545 = vpop.permute.xlu0 %544
  %546 = vrot.lane.b32.xlu0 %v541, 32
  %v547 = vpop.permute.xlu0 %546
  %v550 = vadd.f32 %v436, %v545
  %v551 = vadd.f32 %v437, %v547
  %v552 = vtanh.pop %v550
  %v553 = vtanh.pop %v551
  %v554 = vsub.f32 1.0, %v519
  %v555 = vsub.f32 1.0, %v521
  %558 = vrot.lane.b32.xlu0 %v552, 112
  %v559 = vpop.permute.xlu0 %558
  %560 = vrot.lane.b32.xlu0 %v553, 112
  %v561 = vpop.permute.xlu0 %560
  %v564 = vmul.f32 %v554, %v559
  %v565 = vmul.f32 %v555, %v561
  %v566 = vmul.f32 %v519, 0.0
  %v567 = vmul.f32 %v521, 0.0
  %v568 = vadd.f32 %v564, %v566
  %v569 = vadd.f32 %v565, %v567
  %572 = vrot.lane.b32.xlu0 %v498, 112
  %v573 = vpop.permute.xlu0 %572
  %574 = vrot.lane.b32.xlu0 %v499, 112
  %v575 = vpop.permute.xlu0 %574
  %vm578 = vcmask 130048
  %579 = vst.msk [vmem:[#allocation3] sm:$0xff] %vm578, %v573
  %580 = vst.msk [vmem:[#allocation3 + $0x8] sm:$0xff] %vm578, %v575
  %s581 = scalar_lea.vmem [#allocation3], 112
  %vm582 = vcmask 261248
  %583 = vst.msk [vmem:[%s581] sm:$0xff] %vm582, %v568
  %584 = vst.msk [vmem:[%s581 + $0x8] sm:$0xff] %vm582, %v569
  %v585 = vsel %vm578, %v573, %v568
  %v586 = vsel %vm578, %v575, %v569
  %v588 = vsel %vm56, %v585, 0
  %v591 = vsel %vm56, %v586, 0
  %593 = vmatprep.subr.mxu0 0.0
  %594 = vmatpush1.msra.mxu0 0.0
  %595 = vmatprep.subr.mxu0 0.0
  %596 = vmatpush1.msra.mxu0 0.0
  %597 = vmatprep.subr.mxu0 0.0
  %598 = vmatpush1.msra.mxu0 0.0
  %599 = vmatprep.subr.mxu0 0.0
  %600 = vmatpush1.msra.mxu0 0.0
  %601 = vmatprep.subr.mxu0 0.0
  %602 = vmatpush1.msra.mxu0 0.0
  %603 = vmatprep.subr.mxu0 0.0
  %604 = vmatpush1.msra.mxu0 0.0
  %605 = vmatprep.subr.mxu0 0.0
  %606 = vmatpush1.msra.mxu0 0.0
  %607 = vmatprep.subr.mxu0 0.0
  %608 = vmatpush1.msra.mxu0 0.0
  %609 = vmatprep.subr.mxu0 0.0
  %610 = vmatpush1.msra.mxu0 0.0
  %611 = vmatprep.subr.mxu0 0.0
  %612 = vmatpush1.msra.mxu0 0.0
  %613 = vmatprep.subr.mxu0 0.0
  %614 = vmatpush1.msra.mxu0 0.0
  %615 = vmatprep.subr.mxu0 0.0
  %616 = vmatpush1.msra.mxu0 0.0
  %617 = vmatprep.subr.mxu0 0.0
  %618 = vmatpush1.msra.mxu0 %v351
  %619 = vmatprep.subr.mxu0 0.0
  %620 = vmatpush1.msra.mxu0 %v350
  %621 = vmatprep.subr.mxu0 0.0
  %622 = vmatpush1.msra.mxu0 %v349
  %623 = vmatprep.subr.mxu0 0.0
  %624 = vmatpush1.msra.mxu0 %v348
  %625 = vmatprep.subr.mxu0 0.0
  %626 = vmatpush2.msra.mxu0 0.0
  %627 = vmatprep.subr.mxu0 0.0
  %628 = vmatpush2.msra.mxu0 0.0
  %629 = vmatprep.subr.mxu0 0.0
  %630 = vmatpush2.msra.mxu0 0.0
  %631 = vmatprep.subr.mxu0 0.0
  %632 = vmatpush2.msra.mxu0 0.0
  %633 = vmatprep.subr.mxu0 0.0
  %634 = vmatpush2.msra.mxu0 0.0
  %635 = vmatprep.subr.mxu0 0.0
  %636 = vmatpush2.msra.mxu0 0.0
  %637 = vmatprep.subr.mxu0 0.0
  %638 = vmatpush2.msra.mxu0 0.0
  %639 = vmatprep.subr.mxu0 0.0
  %640 = vmatpush2.msra.mxu0 0.0
  %641 = vmatprep.subr.mxu0 0.0
  %642 = vmatpush2.msra.mxu0 0.0
  %643 = vmatprep.subr.mxu0 0.0
  %644 = vmatpush2.msra.mxu0 0.0
  %645 = vmatprep.subr.mxu0 0.0
  %646 = vmatpush2.msra.mxu0 0.0
  %647 = vmatprep.subr.mxu0 0.0
  %648 = vmatpush2.msra.mxu0 0.0
  %649 = vmatprep.subr.mxu0 0.0
  %650 = vmatpush2.msra.mxu0 0.0
  %651 = vmatprep.subr.mxu0 0.0
  %652 = vmatpush2.msra.mxu0 0.0
  %653 = vmatprep.subr.mxu0 0.0
  %654 = vmatpush2.msra.mxu0 0.0
  %655 = vmatprep.subr.mxu0 0.0
  %656 = vmatpush2.msra.mxu0 0.0
  %657 = vmatprep.mubr.f32.mxu0 0.0
  %658 = vmatmul.mubr.f32.gmra.mxu0 %v588
  %v659 = vpop.f32.mrf.mxu0
  %v660 = vadd.f32 0.0, %v659
  %v661 = vpop.f32.mrf.mxu0
  %662 = vmatprep.mubr.f32.mxu0 0.0
  %663 = vmatmul.mubr.f32.gmra.mxu0 %v591
  %v664 = vpop.f32.mrf.mxu0
  %v665 = vadd.f32 0.0, %v664
  %v666 = vpop.f32.mrf.mxu0
  %667 = vdwg.mxu0
  %s668 = scalar_lea.vmem [#allocation2], 16
  %v669 = vld [vmem:[%s668] sm:$0xff]
  %v670 = vld [vmem:[%s668 + $0x8] sm:$0xff]
  %s671 = scalar_lea.vmem [#allocation2], 224
  %v672 = vld [vmem:[%s671] sm:$0xff]
  %v673 = vld [vmem:[%s671 + $0x8] sm:$0xff]
  %v674 = vadd.f32 %v669, %v660
  %v675 = vadd.f32 %v670, %v665
  %v676 = vxor.u32 %v674, 2147483648
  %v677 = vxor.u32 %v675, 2147483648
  %v678 = vmul.f32 %v676, 1.442695
  %v679 = vpow.pop %v678
  %v680 = vmul.f32 %v677, 1.442695
  %v681 = vpow.pop %v680
  %v682 = vadd.f32 %v679, 1.0
  %v683 = vadd.f32 %v681, 1.0
  %v684 = vrcp.pop %v682
  %v685 = vmul.f32 1.0, %v684
  %v686 = vrcp.pop %v683
  %v687 = vmul.f32 1.0, %v686
  %v688 = vadd.f32 %v660, %v458
  %v689 = vadd.f32 %v665, %v458
  %692 = vrot.lane.b32.xlu0 %v688, 96
  %v693 = vpop.permute.xlu0 %692
  %694 = vrot.lane.b32.xlu0 %v689, 96
  %v695 = vpop.permute.xlu0 %694
  %v698 = vmul.f32 %v685, %v693
  %v699 = vmul.f32 %v687, %v695
  %702 = vrot.lane.b32.xlu0 %v698, 32
  %v703 = vpop.permute.xlu0 %702
  %704 = vrot.lane.b32.xlu0 %v699, 32
  %v705 = vpop.permute.xlu0 %704
  %v708 = vadd.f32 %v669, %v703
  %v709 = vadd.f32 %v670, %v705
  %v710 = vtanh.pop %v708
  %v711 = vtanh.pop %v709
  %v712 = vsub.f32 1.0, %v685
  %v713 = vsub.f32 1.0, %v687
  %716 = vrot.lane.b32.xlu0 %v710, 112
  %v717 = vpop.permute.xlu0 %716
  %718 = vrot.lane.b32.xlu0 %v711, 112
  %v719 = vpop.permute.xlu0 %718
  %v722 = vmul.f32 %v712, %v717
  %v723 = vmul.f32 %v713, %v719
  %724 = vrot.lane.b32.xlu0 %v585, 16
  %v725 = vpop.permute.xlu0 %724
  %726 = vrot.lane.b32.xlu0 %v586, 16
  %v727 = vpop.permute.xlu0 %726
  %v730 = vmul.f32 %v685, %v725
  %v731 = vmul.f32 %v687, %v727
  %v732 = vadd.f32 %v722, %v730
  %v733 = vadd.f32 %v723, %v731
  %736 = vrot.lane.b32.xlu0 %v660, 80
  %v737 = vpop.permute.xlu0 %736
  %738 = vrot.lane.b32.xlu0 %v665, 80
  %v739 = vpop.permute.xlu0 %738
  %v742 = vadd.f32 %v672, %v737
  %v743 = vadd.f32 %v673, %v739
  %v744 = vxor.u32 %v742, 2147483648
  %v745 = vxor.u32 %v743, 2147483648
  %v746 = vmul.f32 %v744, 1.442695
  %v747 = vpow.pop %v746
  %v748 = vmul.f32 %v745, 1.442695
  %v749 = vpow.pop %v748
  %v750 = vadd.f32 %v747, 1.0
  %v751 = vadd.f32 %v749, 1.0
  %v752 = vrcp.pop %v750
  %v753 = vmul.f32 1.0, %v752
  %v754 = vrcp.pop %v751
  %v755 = vmul.f32 1.0, %v754
  %v756 = vadd.f32 %v660, %v528
  %v757 = vadd.f32 %v665, %v528
  %760 = vrot.lane.b32.xlu0 %v756, 48
  %v761 = vpop.permute.xlu0 %760
  %762 = vrot.lane.b32.xlu0 %v757, 48
  %v763 = vpop.permute.xlu0 %762
  %v766 = vmul.f32 %v753, %v761
  %v767 = vmul.f32 %v755, %v763
  %770 = vrot.lane.b32.xlu0 %v766, 32
  %v771 = vpop.permute.xlu0 %770
  %772 = vrot.lane.b32.xlu0 %v767, 32
  %v773 = vpop.permute.xlu0 %772
  %v776 = vadd.f32 %v672, %v771
  %v777 = vadd.f32 %v673, %v773
  %v778 = vtanh.pop %v776
  %v779 = vtanh.pop %v777
  %v780 = vsub.f32 1.0, %v753
  %v781 = vsub.f32 1.0, %v755
  %784 = vrot.lane.b32.xlu0 %v778, 112
  %v785 = vpop.permute.xlu0 %784
  %786 = vrot.lane.b32.xlu0 %v779, 112
  %v787 = vpop.permute.xlu0 %786
  %v790 = vmul.f32 %v780, %v785
  %v791 = vmul.f32 %v781, %v787
  %v792 = vmul.f32 %v753, %v585
  %v793 = vmul.f32 %v755, %v586
  %v794 = vadd.f32 %v790, %v792
  %v795 = vadd.f32 %v791, %v793
  %798 = vrot.lane.b32.xlu0 %v732, 112
  %v799 = vpop.permute.xlu0 %798
  %800 = vrot.lane.b32.xlu0 %v733, 112
  %v801 = vpop.permute.xlu0 %800
  %s804 = scalar_lea.vmem [#allocation3], 16
  %805 = vst.msk [vmem:[%s804] sm:$0xff] %vm578, %v799
  %806 = vst.msk [vmem:[%s804 + $0x8] sm:$0xff] %vm578, %v801
  %s807 = scalar_lea.vmem [#allocation3], 96
  %808 = vst.msk [vmem:[%s807] sm:$0xff] %vm582, %v794
  %809 = vst.msk [vmem:[%s807 + $0x8] sm:$0xff] %vm582, %v795
  %v810 = vsel %vm578, %v799, %v794
  %v811 = vsel %vm578, %v801, %v795
  %v813 = vsel %vm56, %v810, 0
  %v816 = vsel %vm56, %v811, 0
  %818 = vmatprep.subr.mxu0 0.0
  %819 = vmatpush1.msra.mxu0 0.0
  %820 = vmatprep.subr.mxu0 0.0
  %821 = vmatpush1.msra.mxu0 0.0
  %822 = vmatprep.subr.mxu0 0.0
  %823 = vmatpush1.msra.mxu0 0.0
  %824 = vmatprep.subr.mxu0 0.0
  %825 = vmatpush1.msra.mxu0 0.0
  %826 = vmatprep.subr.mxu0 0.0
  %827 = vmatpush1.msra.mxu0 0.0
  %828 = vmatprep.subr.mxu0 0.0
  %829 = vmatpush1.msra.mxu0 0.0
  %830 = vmatprep.subr.mxu0 0.0
  %831 = vmatpush1.msra.mxu0 0.0
  %832 = vmatprep.subr.mxu0 0.0
  %833 = vmatpush1.msra.mxu0 0.0
  %834 = vmatprep.subr.mxu0 0.0
  %835 = vmatpush1.msra.mxu0 0.0
  %836 = vmatprep.subr.mxu0 0.0
  %837 = vmatpush1.msra.mxu0 0.0
  %838 = vmatprep.subr.mxu0 0.0
  %839 = vmatpush1.msra.mxu0 0.0
  %840 = vmatprep.subr.mxu0 0.0
  %841 = vmatpush1.msra.mxu0 0.0
  %842 = vmatprep.subr.mxu0 0.0
  %843 = vmatpush1.msra.mxu0 %v351
  %844 = vmatprep.subr.mxu0 0.0
  %845 = vmatpush1.msra.mxu0 %v350
  %846 = vmatprep.subr.mxu0 0.0
  %847 = vmatpush1.msra.mxu0 %v349
  %848 = vmatprep.subr.mxu0 0.0
  %849 = vmatpush1.msra.mxu0 %v348
  %850 = vmatprep.subr.mxu0 0.0
  %851 = vmatpush2.msra.mxu0 0.0
  %852 = vmatprep.subr.mxu0 0.0
  %853 = vmatpush2.msra.mxu0 0.0
  %854 = vmatprep.subr.mxu0 0.0
  %855 = vmatpush2.msra.mxu0 0.0
  %856 = vmatprep.subr.mxu0 0.0
  %857 = vmatpush2.msra.mxu0 0.0
  %858 = vmatprep.subr.mxu0 0.0
  %859 = vmatpush2.msra.mxu0 0.0
  %860 = vmatprep.subr.mxu0 0.0
  %861 = vmatpush2.msra.mxu0 0.0
  %862 = vmatprep.subr.mxu0 0.0
  %863 = vmatpush2.msra.mxu0 0.0
  %864 = vmatprep.subr.mxu0 0.0
  %865 = vmatpush2.msra.mxu0 0.0
  %866 = vmatprep.subr.mxu0 0.0
  %867 = vmatpush2.msra.mxu0 0.0
  %868 = vmatprep.subr.mxu0 0.0
  %869 = vmatpush2.msra.mxu0 0.0
  %870 = vmatprep.subr.mxu0 0.0
  %871 = vmatpush2.msra.mxu0 0.0
  %872 = vmatprep.subr.mxu0 0.0
  %873 = vmatpush2.msra.mxu0 0.0
  %874 = vmatprep.subr.mxu0 0.0
  %875 = vmatpush2.msra.mxu0 0.0
  %876 = vmatprep.subr.mxu0 0.0
  %877 = vmatpush2.msra.mxu0 0.0
  %878 = vmatprep.subr.mxu0 0.0
  %879 = vmatpush2.msra.mxu0 0.0
  %880 = vmatprep.subr.mxu0 0.0
  %881 = vmatpush2.msra.mxu0 0.0
  %882 = vmatprep.mubr.f32.mxu0 0.0
  %883 = vmatmul.mubr.f32.gmra.mxu0 %v813
  %v884 = vpop.f32.mrf.mxu0
  %v885 = vadd.f32 0.0, %v884
  %v886 = vpop.f32.mrf.mxu0
  %887 = vmatprep.mubr.f32.mxu0 0.0
  %888 = vmatmul.mubr.f32.gmra.mxu0 %v816
  %v889 = vpop.f32.mrf.mxu0
  %v890 = vadd.f32 0.0, %v889
  %v891 = vpop.f32.mrf.mxu0
  %892 = vdwg.mxu0
  %s893 = scalar_lea.vmem [#allocation2], 32
  %v894 = vld [vmem:[%s893] sm:$0xff]
  %v895 = vld [vmem:[%s893 + $0x8] sm:$0xff]
  %s896 = scalar_lea.vmem [#allocation2], 208
  %v897 = vld [vmem:[%s896] sm:$0xff]
  %v898 = vld [vmem:[%s896 + $0x8] sm:$0xff]
  %v899 = vadd.f32 %v894, %v885
  %v900 = vadd.f32 %v895, %v890
  %v901 = vxor.u32 %v899, 2147483648
  %v902 = vxor.u32 %v900, 2147483648
  %v903 = vmul.f32 %v901, 1.442695
  %v904 = vpow.pop %v903
  %v905 = vmul.f32 %v902, 1.442695
  %v906 = vpow.pop %v905
  %v907 = vadd.f32 %v904, 1.0
  %v908 = vadd.f32 %v906, 1.0
  %v909 = vrcp.pop %v907
  %v910 = vmul.f32 1.0, %v909
  %v911 = vrcp.pop %v908
  %v912 = vmul.f32 1.0, %v911
  %v913 = vadd.f32 %v885, %v458
  %v914 = vadd.f32 %v890, %v458
  %917 = vrot.lane.b32.xlu0 %v913, 96
  %v918 = vpop.permute.xlu0 %917
  %919 = vrot.lane.b32.xlu0 %v914, 96
  %v920 = vpop.permute.xlu0 %919
  %v923 = vmul.f32 %v910, %v918
  %v924 = vmul.f32 %v912, %v920
  %927 = vrot.lane.b32.xlu0 %v923, 32
  %v928 = vpop.permute.xlu0 %927
  %929 = vrot.lane.b32.xlu0 %v924, 32
  %v930 = vpop.permute.xlu0 %929
  %v933 = vadd.f32 %v894, %v928
  %v934 = vadd.f32 %v895, %v930
  %v935 = vtanh.pop %v933
  %v936 = vtanh.pop %v934
  %v937 = vsub.f32 1.0, %v910
  %v938 = vsub.f32 1.0, %v912
  %941 = vrot.lane.b32.xlu0 %v935, 112
  %v942 = vpop.permute.xlu0 %941
  %943 = vrot.lane.b32.xlu0 %v936, 112
  %v944 = vpop.permute.xlu0 %943
  %v947 = vmul.f32 %v937, %v942
  %v948 = vmul.f32 %v938, %v944
  %949 = vrot.lane.b32.xlu0 %v810, 16
  %v950 = vpop.permute.xlu0 %949
  %951 = vrot.lane.b32.xlu0 %v811, 16
  %v952 = vpop.permute.xlu0 %951
  %v955 = vmul.f32 %v910, %v950
  %v956 = vmul.f32 %v912, %v952
  %v957 = vadd.f32 %v947, %v955
  %v958 = vadd.f32 %v948, %v956
  %961 = vrot.lane.b32.xlu0 %v885, 80
  %v962 = vpop.permute.xlu0 %961
  %963 = vrot.lane.b32.xlu0 %v890, 80
  %v964 = vpop.permute.xlu0 %963
  %v967 = vadd.f32 %v897, %v962
  %v968 = vadd.f32 %v898, %v964
  %v969 = vxor.u32 %v967, 2147483648
  %v970 = vxor.u32 %v968, 2147483648
  %v971 = vmul.f32 %v969, 1.442695
  %v972 = vpow.pop %v971
  %v973 = vmul.f32 %v970, 1.442695
  %v974 = vpow.pop %v973
  %v975 = vadd.f32 %v972, 1.0
  %v976 = vadd.f32 %v974, 1.0
  %v977 = vrcp.pop %v975
  %v978 = vmul.f32 1.0, %v977
  %v979 = vrcp.pop %v976
  %v980 = vmul.f32 1.0, %v979
  %v981 = vadd.f32 %v885, %v528
  %v982 = vadd.f32 %v890, %v528
  %985 = vrot.lane.b32.xlu0 %v981, 48
  %v986 = vpop.permute.xlu0 %985
  %987 = vrot.lane.b32.xlu0 %v982, 48
  %v988 = vpop.permute.xlu0 %987
  %v991 = vmul.f32 %v978, %v986
  %v992 = vmul.f32 %v980, %v988
  %995 = vrot.lane.b32.xlu0 %v991, 32
  %v996 = vpop.permute.xlu0 %995
  %997 = vrot.lane.b32.xlu0 %v992, 32
  %v998 = vpop.permute.xlu0 %997
  %v1001 = vadd.f32 %v897, %v996
  %v1002 = vadd.f32 %v898, %v998
  %v1003 = vtanh.pop %v1001
  %v1004 = vtanh.pop %v1002
  %v1005 = vsub.f32 1.0, %v978
  %v1006 = vsub.f32 1.0, %v980
  %1009 = vrot.lane.b32.xlu0 %v1003, 112
  %v1010 = vpop.permute.xlu0 %1009
  %1011 = vrot.lane.b32.xlu0 %v1004, 112
  %v1012 = vpop.permute.xlu0 %1011
  %v1015 = vmul.f32 %v1005, %v1010
  %v1016 = vmul.f32 %v1006, %v1012
  %v1017 = vmul.f32 %v978, %v810
  %v1018 = vmul.f32 %v980, %v811
  %v1019 = vadd.f32 %v1015, %v1017
  %v1020 = vadd.f32 %v1016, %v1018
  %1023 = vrot.lane.b32.xlu0 %v957, 112
  %v1024 = vpop.permute.xlu0 %1023
  %1025 = vrot.lane.b32.xlu0 %v958, 112
  %v1026 = vpop.permute.xlu0 %1025
  %s1029 = scalar_lea.vmem [#allocation3], 32
  %1030 = vst.msk [vmem:[%s1029] sm:$0xff] %vm578, %v1024
  %1031 = vst.msk [vmem:[%s1029 + $0x8] sm:$0xff] %vm578, %v1026
  %s1032 = scalar_lea.vmem [#allocation3], 80
  %1033 = vst.msk [vmem:[%s1032] sm:$0xff] %vm582, %v1019
  %1034 = vst.msk [vmem:[%s1032 + $0x8] sm:$0xff] %vm582, %v1020
  %v1035 = vsel %vm578, %v1024, %v1019
  %v1036 = vsel %vm578, %v1026, %v1020
  %v1038 = vsel %vm56, %v1035, 0
  %v1041 = vsel %vm56, %v1036, 0
  %1043 = vmatprep.subr.mxu0 0.0
  %1044 = vmatpush1.msra.mxu0 0.0
  %1045 = vmatprep.subr.mxu0 0.0
  %1046 = vmatpush1.msra.mxu0 0.0
  %1047 = vmatprep.subr.mxu0 0.0
  %1048 = vmatpush1.msra.mxu0 0.0
  %1049 = vmatprep.subr.mxu0 0.0
  %1050 = vmatpush1.msra.mxu0 0.0
  %1051 = vmatprep.subr.mxu0 0.0
  %1052 = vmatpush1.msra.mxu0 0.0
  %1053 = vmatprep.subr.mxu0 0.0
  %1054 = vmatpush1.msra.mxu0 0.0
  %1055 = vmatprep.subr.mxu0 0.0
  %1056 = vmatpush1.msra.mxu0 0.0
  %1057 = vmatprep.subr.mxu0 0.0
  %1058 = vmatpush1.msra.mxu0 0.0
  %1059 = vmatprep.subr.mxu0 0.0
  %1060 = vmatpush1.msra.mxu0 0.0
  %1061 = vmatprep.subr.mxu0 0.0
  %1062 = vmatpush1.msra.mxu0 0.0
  %1063 = vmatprep.subr.mxu0 0.0
  %1064 = vmatpush1.msra.mxu0 0.0
  %1065 = vmatprep.subr.mxu0 0.0
  %1066 = vmatpush1.msra.mxu0 0.0
  %1067 = vmatprep.subr.mxu0 0.0
  %1068 = vmatpush1.msra.mxu0 %v351
  %1069 = vmatprep.subr.mxu0 0.0
  %1070 = vmatpush1.msra.mxu0 %v350
  %1071 = vmatprep.subr.mxu0 0.0
  %1072 = vmatpush1.msra.mxu0 %v349
  %1073 = vmatprep.subr.mxu0 0.0
  %1074 = vmatpush1.msra.mxu0 %v348
  %1075 = vmatprep.subr.mxu0 0.0
  %1076 = vmatpush2.msra.mxu0 0.0
  %1077 = vmatprep.subr.mxu0 0.0
  %1078 = vmatpush2.msra.mxu0 0.0
  %1079 = vmatprep.subr.mxu0 0.0
  %1080 = vmatpush2.msra.mxu0 0.0
  %1081 = vmatprep.subr.mxu0 0.0
  %1082 = vmatpush2.msra.mxu0 0.0
  %1083 = vmatprep.subr.mxu0 0.0
  %1084 = vmatpush2.msra.mxu0 0.0
  %1085 = vmatprep.subr.mxu0 0.0
  %1086 = vmatpush2.msra.mxu0 0.0
  %1087 = vmatprep.subr.mxu0 0.0
  %1088 = vmatpush2.msra.mxu0 0.0
  %1089 = vmatprep.subr.mxu0 0.0
  %1090 = vmatpush2.msra.mxu0 0.0
  %1091 = vmatprep.subr.mxu0 0.0
  %1092 = vmatpush2.msra.mxu0 0.0
  %1093 = vmatprep.subr.mxu0 0.0
  %1094 = vmatpush2.msra.mxu0 0.0
  %1095 = vmatprep.subr.mxu0 0.0
  %1096 = vmatpush2.msra.mxu0 0.0
  %1097 = vmatprep.subr.mxu0 0.0
  %1098 = vmatpush2.msra.mxu0 0.0
  %1099 = vmatprep.subr.mxu0 0.0
  %1100 = vmatpush2.msra.mxu0 0.0
  %1101 = vmatprep.subr.mxu0 0.0
  %1102 = vmatpush2.msra.mxu0 0.0
  %1103 = vmatprep.subr.mxu0 0.0
  %1104 = vmatpush2.msra.mxu0 0.0
  %1105 = vmatprep.subr.mxu0 0.0
  %1106 = vmatpush2.msra.mxu0 0.0
  %1107 = vmatprep.mubr.f32.mxu0 0.0
  %1108 = vmatmul.mubr.f32.gmra.mxu0 %v1038
  %v1109 = vpop.f32.mrf.mxu0
  %v1110 = vadd.f32 0.0, %v1109
  %v1111 = vpop.f32.mrf.mxu0
  %1112 = vmatprep.mubr.f32.mxu0 0.0
  %1113 = vmatmul.mubr.f32.gmra.mxu0 %v1041
  %v1114 = vpop.f32.mrf.mxu0
  %v1115 = vadd.f32 0.0, %v1114
  %v1116 = vpop.f32.mrf.mxu0
  %1117 = vdwg.mxu0
  %s1118 = scalar_lea.vmem [#allocation2], 48
  %v1119 = vld [vmem:[%s1118] sm:$0xff]
  %v1120 = vld [vmem:[%s1118 + $0x8] sm:$0xff]
  %s1121 = scalar_lea.vmem [#allocation2], 192
  %v1122 = vld [vmem:[%s1121] sm:$0xff]
  %v1123 = vld [vmem:[%s1121 + $0x8] sm:$0xff]
  %v1124 = vadd.f32 %v1119, %v1110
  %v1125 = vadd.f32 %v1120, %v1115
  %v1126 = vxor.u32 %v1124, 2147483648
  %v1127 = vxor.u32 %v1125, 2147483648
  %v1128 = vmul.f32 %v1126, 1.442695
  %v1129 = vpow.pop %v1128
  %v1130 = vmul.f32 %v1127, 1.442695
  %v1131 = vpow.pop %v1130
  %v1132 = vadd.f32 %v1129, 1.0
  %v1133 = vadd.f32 %v1131, 1.0
  %v1134 = vrcp.pop %v1132
  %v1135 = vmul.f32 1.0, %v1134
  %v1136 = vrcp.pop %v1133
  %v1137 = vmul.f32 1.0, %v1136
  %v1138 = vadd.f32 %v1110, %v458
  %v1139 = vadd.f32 %v1115, %v458
  %1142 = vrot.lane.b32.xlu0 %v1138, 96
  %v1143 = vpop.permute.xlu0 %1142
  %1144 = vrot.lane.b32.xlu0 %v1139, 96
  %v1145 = vpop.permute.xlu0 %1144
  %v1148 = vmul.f32 %v1135, %v1143
  %v1149 = vmul.f32 %v1137, %v1145
  %1152 = vrot.lane.b32.xlu0 %v1148, 32
  %v1153 = vpop.permute.xlu0 %1152
  %1154 = vrot.lane.b32.xlu0 %v1149, 32
  %v1155 = vpop.permute.xlu0 %1154
  %v1158 = vadd.f32 %v1119, %v1153
  %v1159 = vadd.f32 %v1120, %v1155
  %v1160 = vtanh.pop %v1158
  %v1161 = vtanh.pop %v1159
  %v1162 = vsub.f32 1.0, %v1135
  %v1163 = vsub.f32 1.0, %v1137
  %1166 = vrot.lane.b32.xlu0 %v1160, 112
  %v1167 = vpop.permute.xlu0 %1166
  %1168 = vrot.lane.b32.xlu0 %v1161, 112
  %v1169 = vpop.permute.xlu0 %1168
  %v1172 = vmul.f32 %v1162, %v1167
  %v1173 = vmul.f32 %v1163, %v1169
  %1174 = vrot.lane.b32.xlu0 %v1035, 16
  %v1175 = vpop.permute.xlu0 %1174
  %1176 = vrot.lane.b32.xlu0 %v1036, 16
  %v1177 = vpop.permute.xlu0 %1176
  %v1180 = vmul.f32 %v1135, %v1175
  %v1181 = vmul.f32 %v1137, %v1177
  %v1182 = vadd.f32 %v1172, %v1180
  %v1183 = vadd.f32 %v1173, %v1181
  %1186 = vrot.lane.b32.xlu0 %v1110, 80
  %v1187 = vpop.permute.xlu0 %1186
  %1188 = vrot.lane.b32.xlu0 %v1115, 80
  %v1189 = vpop.permute.xlu0 %1188
  %v1192 = vadd.f32 %v1122, %v1187
  %v1193 = vadd.f32 %v1123, %v1189
  %v1194 = vxor.u32 %v1192, 2147483648
  %v1195 = vxor.u32 %v1193, 2147483648
  %v1196 = vmul.f32 %v1194, 1.442695
  %v1197 = vpow.pop %v1196
  %v1198 = vmul.f32 %v1195, 1.442695
  %v1199 = vpow.pop %v1198
  %v1200 = vadd.f32 %v1197, 1.0
  %v1201 = vadd.f32 %v1199, 1.0
  %v1202 = vrcp.pop %v1200
  %v1203 = vmul.f32 1.0, %v1202
  %v1204 = vrcp.pop %v1201
  %v1205 = vmul.f32 1.0, %v1204
  %v1206 = vadd.f32 %v1110, %v528
  %v1207 = vadd.f32 %v1115, %v528
  %1210 = vrot.lane.b32.xlu0 %v1206, 48
  %v1211 = vpop.permute.xlu0 %1210
  %1212 = vrot.lane.b32.xlu0 %v1207, 48
  %v1213 = vpop.permute.xlu0 %1212
  %v1216 = vmul.f32 %v1203, %v1211
  %v1217 = vmul.f32 %v1205, %v1213
  %1220 = vrot.lane.b32.xlu0 %v1216, 32
  %v1221 = vpop.permute.xlu0 %1220
  %1222 = vrot.lane.b32.xlu0 %v1217, 32
  %v1223 = vpop.permute.xlu0 %1222
  %v1226 = vadd.f32 %v1122, %v1221
  %v1227 = vadd.f32 %v1123, %v1223
  %v1228 = vtanh.pop %v1226
  %v1229 = vtanh.pop %v1227
  %v1230 = vsub.f32 1.0, %v1203
  %v1231 = vsub.f32 1.0, %v1205
  %1234 = vrot.lane.b32.xlu0 %v1228, 112
  %v1235 = vpop.permute.xlu0 %1234
  %1236 = vrot.lane.b32.xlu0 %v1229, 112
  %v1237 = vpop.permute.xlu0 %1236
  %v1240 = vmul.f32 %v1230, %v1235
  %v1241 = vmul.f32 %v1231, %v1237
  %v1242 = vmul.f32 %v1203, %v1035
  %v1243 = vmul.f32 %v1205, %v1036
  %v1244 = vadd.f32 %v1240, %v1242
  %v1245 = vadd.f32 %v1241, %v1243
  %1248 = vrot.lane.b32.xlu0 %v1182, 112
  %v1249 = vpop.permute.xlu0 %1248
  %1250 = vrot.lane.b32.xlu0 %v1183, 112
  %v1251 = vpop.permute.xlu0 %1250
  %s1254 = scalar_lea.vmem [#allocation3], 48
  %1255 = vst.msk [vmem:[%s1254] sm:$0xff] %vm578, %v1249
  %1256 = vst.msk [vmem:[%s1254 + $0x8] sm:$0xff] %vm578, %v1251
  %s1257 = scalar_lea.vmem [#allocation3], 64
  %1258 = vst.msk [vmem:[%s1257] sm:$0xff] %vm582, %v1244
  %1259 = vst.msk [vmem:[%s1257 + $0x8] sm:$0xff] %vm582, %v1245
  %v1260 = vsel %vm578, %v1249, %v1244
  %v1261 = vsel %vm578, %v1251, %v1245
  %v1263 = vsel %vm56, %v1260, 0
  %v1266 = vsel %vm56, %v1261, 0
  %1268 = vmatprep.subr.mxu0 0.0
  %1269 = vmatpush1.msra.mxu0 0.0
  %1270 = vmatprep.subr.mxu0 0.0
  %1271 = vmatpush1.msra.mxu0 0.0
  %1272 = vmatprep.subr.mxu0 0.0
  %1273 = vmatpush1.msra.mxu0 0.0
  %1274 = vmatprep.subr.mxu0 0.0
  %1275 = vmatpush1.msra.mxu0 0.0
  %1276 = vmatprep.subr.mxu0 0.0
  %1277 = vmatpush1.msra.mxu0 0.0
  %1278 = vmatprep.subr.mxu0 0.0
  %1279 = vmatpush1.msra.mxu0 0.0
  %1280 = vmatprep.subr.mxu0 0.0
  %1281 = vmatpush1.msra.mxu0 0.0
  %1282 = vmatprep.subr.mxu0 0.0
  %1283 = vmatpush1.msra.mxu0 0.0
  %1284 = vmatprep.subr.mxu0 0.0
  %1285 = vmatpush1.msra.mxu0 0.0
  %1286 = vmatprep.subr.mxu0 0.0
  %1287 = vmatpush1.msra.mxu0 0.0
  %1288 = vmatprep.subr.mxu0 0.0
  %1289 = vmatpush1.msra.mxu0 0.0
  %1290 = vmatprep.subr.mxu0 0.0
  %1291 = vmatpush1.msra.mxu0 0.0
  %1292 = vmatprep.subr.mxu0 0.0
  %1293 = vmatpush1.msra.mxu0 %v351
  %1294 = vmatprep.subr.mxu0 0.0
  %1295 = vmatpush1.msra.mxu0 %v350
  %1296 = vmatprep.subr.mxu0 0.0
  %1297 = vmatpush1.msra.mxu0 %v349
  %1298 = vmatprep.subr.mxu0 0.0
  %1299 = vmatpush1.msra.mxu0 %v348
  %1300 = vmatprep.subr.mxu0 0.0
  %1301 = vmatpush2.msra.mxu0 0.0
  %1302 = vmatprep.subr.mxu0 0.0
  %1303 = vmatpush2.msra.mxu0 0.0
  %1304 = vmatprep.subr.mxu0 0.0
  %1305 = vmatpush2.msra.mxu0 0.0
  %1306 = vmatprep.subr.mxu0 0.0
  %1307 = vmatpush2.msra.mxu0 0.0
  %1308 = vmatprep.subr.mxu0 0.0
  %1309 = vmatpush2.msra.mxu0 0.0
  %1310 = vmatprep.subr.mxu0 0.0
  %1311 = vmatpush2.msra.mxu0 0.0
  %1312 = vmatprep.subr.mxu0 0.0
  %1313 = vmatpush2.msra.mxu0 0.0
  %1314 = vmatprep.subr.mxu0 0.0
  %1315 = vmatpush2.msra.mxu0 0.0
  %1316 = vmatprep.subr.mxu0 0.0
  %1317 = vmatpush2.msra.mxu0 0.0
  %1318 = vmatprep.subr.mxu0 0.0
  %1319 = vmatpush2.msra.mxu0 0.0
  %1320 = vmatprep.subr.mxu0 0.0
  %1321 = vmatpush2.msra.mxu0 0.0
  %1322 = vmatprep.subr.mxu0 0.0
  %1323 = vmatpush2.msra.mxu0 0.0
  %1324 = vmatprep.subr.mxu0 0.0
  %1325 = vmatpush2.msra.mxu0 0.0
  %1326 = vmatprep.subr.mxu0 0.0
  %1327 = vmatpush2.msra.mxu0 0.0
  %1328 = vmatprep.subr.mxu0 0.0
  %1329 = vmatpush2.msra.mxu0 0.0
  %1330 = vmatprep.subr.mxu0 0.0
  %1331 = vmatpush2.msra.mxu0 0.0
  %1332 = vmatprep.mubr.f32.mxu0 0.0
  %1333 = vmatmul.mubr.f32.gmra.mxu0 %v1263
  %v1334 = vpop.f32.mrf.mxu0
  %v1335 = vadd.f32 0.0, %v1334
  %v1336 = vpop.f32.mrf.mxu0
  %1337 = vmatprep.mubr.f32.mxu0 0.0
  %1338 = vmatmul.mubr.f32.gmra.mxu0 %v1266
  %v1339 = vpop.f32.mrf.mxu0
  %v1340 = vadd.f32 0.0, %v1339
  %v1341 = vpop.f32.mrf.mxu0
  %1342 = vdwg.mxu0
  %s1343 = scalar_lea.vmem [#allocation2], 64
  %v1344 = vld [vmem:[%s1343] sm:$0xff]
  %v1345 = vld [vmem:[%s1343 + $0x8] sm:$0xff]
  %s1346 = scalar_lea.vmem [#allocation2], 176
  %v1347 = vld [vmem:[%s1346] sm:$0xff]
  %v1348 = vld [vmem:[%s1346 + $0x8] sm:$0xff]
  %v1349 = vadd.f32 %v1344, %v1335
  %v1350 = vadd.f32 %v1345, %v1340
  %v1351 = vxor.u32 %v1349, 2147483648
  %v1352 = vxor.u32 %v1350, 2147483648
  %v1353 = vmul.f32 %v1351, 1.442695
  %v1354 = vpow.pop %v1353
  %v1355 = vmul.f32 %v1352, 1.442695
  %v1356 = vpow.pop %v1355
  %v1357 = vadd.f32 %v1354, 1.0
  %v1358 = vadd.f32 %v1356, 1.0
  %v1359 = vrcp.pop %v1357
  %v1360 = vmul.f32 1.0, %v1359
  %v1361 = vrcp.pop %v1358
  %v1362 = vmul.f32 1.0, %v1361
  %v1363 = vadd.f32 %v1335, %v458
  %v1364 = vadd.f32 %v1340, %v458
  %1367 = vrot.lane.b32.xlu0 %v1363, 96
  %v1368 = vpop.permute.xlu0 %1367
  %1369 = vrot.lane.b32.xlu0 %v1364, 96
  %v1370 = vpop.permute.xlu0 %1369
  %v1373 = vmul.f32 %v1360, %v1368
  %v1374 = vmul.f32 %v1362, %v1370
  %1377 = vrot.lane.b32.xlu0 %v1373, 32
  %v1378 = vpop.permute.xlu0 %1377
  %1379 = vrot.lane.b32.xlu0 %v1374, 32
  %v1380 = vpop.permute.xlu0 %1379
  %v1383 = vadd.f32 %v1344, %v1378
  %v1384 = vadd.f32 %v1345, %v1380
  %v1385 = vtanh.pop %v1383
  %v1386 = vtanh.pop %v1384
  %v1387 = vsub.f32 1.0, %v1360
  %v1388 = vsub.f32 1.0, %v1362
  %1391 = vrot.lane.b32.xlu0 %v1385, 112
  %v1392 = vpop.permute.xlu0 %1391
  %1393 = vrot.lane.b32.xlu0 %v1386, 112
  %v1394 = vpop.permute.xlu0 %1393
  %v1397 = vmul.f32 %v1387, %v1392
  %v1398 = vmul.f32 %v1388, %v1394
  %1399 = vrot.lane.b32.xlu0 %v1260, 16
  %v1400 = vpop.permute.xlu0 %1399
  %1401 = vrot.lane.b32.xlu0 %v1261, 16
  %v1402 = vpop.permute.xlu0 %1401
  %v1405 = vmul.f32 %v1360, %v1400
  %v1406 = vmul.f32 %v1362, %v1402
  %v1407 = vadd.f32 %v1397, %v1405
  %v1408 = vadd.f32 %v1398, %v1406
  %1411 = vrot.lane.b32.xlu0 %v1335, 80
  %v1412 = vpop.permute.xlu0 %1411
  %1413 = vrot.lane.b32.xlu0 %v1340, 80
  %v1414 = vpop.permute.xlu0 %1413
  %v1417 = vadd.f32 %v1347, %v1412
  %v1418 = vadd.f32 %v1348, %v1414
  %v1419 = vxor.u32 %v1417, 2147483648
  %v1420 = vxor.u32 %v1418, 2147483648
  %v1421 = vmul.f32 %v1419, 1.442695
  %v1422 = vpow.pop %v1421
  %v1423 = vmul.f32 %v1420, 1.442695
  %v1424 = vpow.pop %v1423
  %v1425 = vadd.f32 %v1422, 1.0
  %v1426 = vadd.f32 %v1424, 1.0
  %v1427 = vrcp.pop %v1425
  %v1428 = vmul.f32 1.0, %v1427
  %v1429 = vrcp.pop %v1426
  %v1430 = vmul.f32 1.0, %v1429
  %v1431 = vadd.f32 %v1335, %v528
  %v1432 = vadd.f32 %v1340, %v528
  %1435 = vrot.lane.b32.xlu0 %v1431, 48
  %v1436 = vpop.permute.xlu0 %1435
  %1437 = vrot.lane.b32.xlu0 %v1432, 48
  %v1438 = vpop.permute.xlu0 %1437
  %v1441 = vmul.f32 %v1428, %v1436
  %v1442 = vmul.f32 %v1430, %v1438
  %1445 = vrot.lane.b32.xlu0 %v1441, 32
  %v1446 = vpop.permute.xlu0 %1445
  %1447 = vrot.lane.b32.xlu0 %v1442, 32
  %v1448 = vpop.permute.xlu0 %1447
  %v1451 = vadd.f32 %v1347, %v1446
  %v1452 = vadd.f32 %v1348, %v1448
  %v1453 = vtanh.pop %v1451
  %v1454 = vtanh.pop %v1452
  %v1455 = vsub.f32 1.0, %v1428
  %v1456 = vsub.f32 1.0, %v1430
  %1459 = vrot.lane.b32.xlu0 %v1453, 112
  %v1460 = vpop.permute.xlu0 %1459
  %1461 = vrot.lane.b32.xlu0 %v1454, 112
  %v1462 = vpop.permute.xlu0 %1461
  %v1465 = vmul.f32 %v1455, %v1460
  %v1466 = vmul.f32 %v1456, %v1462
  %v1467 = vmul.f32 %v1428, %v1260
  %v1468 = vmul.f32 %v1430, %v1261
  %v1469 = vadd.f32 %v1465, %v1467
  %v1470 = vadd.f32 %v1466, %v1468
  %1473 = vrot.lane.b32.xlu0 %v1407, 112
  %v1474 = vpop.permute.xlu0 %1473
  %1475 = vrot.lane.b32.xlu0 %v1408, 112
  %v1476 = vpop.permute.xlu0 %1475
  %1479 = vst.msk [vmem:[%s1257] sm:$0xff] %vm578, %v1474
  %1480 = vst.msk [vmem:[%s1257 + $0x8] sm:$0xff] %vm578, %v1476
  %1481 = vst.msk [vmem:[%s1254] sm:$0xff] %vm582, %v1469
  %1482 = vst.msk [vmem:[%s1254 + $0x8] sm:$0xff] %vm582, %v1470
  %v1483 = vsel %vm578, %v1474, %v1469
  %v1484 = vsel %vm578, %v1476, %v1470
  %v1486 = vsel %vm56, %v1483, 0
  %v1489 = vsel %vm56, %v1484, 0
  %1491 = vmatprep.subr.mxu0 0.0
  %1492 = vmatpush1.msra.mxu0 0.0
  %1493 = vmatprep.subr.mxu0 0.0
  %1494 = vmatpush1.msra.mxu0 0.0
  %1495 = vmatprep.subr.mxu0 0.0
  %1496 = vmatpush1.msra.mxu0 0.0
  %1497 = vmatprep.subr.mxu0 0.0
  %1498 = vmatpush1.msra.mxu0 0.0
  %1499 = vmatprep.subr.mxu0 0.0
  %1500 = vmatpush1.msra.mxu0 0.0
  %1501 = vmatprep.subr.mxu0 0.0
  %1502 = vmatpush1.msra.mxu0 0.0
  %1503 = vmatprep.subr.mxu0 0.0
  %1504 = vmatpush1.msra.mxu0 0.0
  %1505 = vmatprep.subr.mxu0 0.0
  %1506 = vmatpush1.msra.mxu0 0.0
  %1507 = vmatprep.subr.mxu0 0.0
  %1508 = vmatpush1.msra.mxu0 0.0
  %1509 = vmatprep.subr.mxu0 0.0
  %1510 = vmatpush1.msra.mxu0 0.0
  %1511 = vmatprep.subr.mxu0 0.0
  %1512 = vmatpush1.msra.mxu0 0.0
  %1513 = vmatprep.subr.mxu0 0.0
  %1514 = vmatpush1.msra.mxu0 0.0
  %1515 = vmatprep.subr.mxu0 0.0
  %1516 = vmatpush1.msra.mxu0 %v351
  %1517 = vmatprep.subr.mxu0 0.0
  %1518 = vmatpush1.msra.mxu0 %v350
  %1519 = vmatprep.subr.mxu0 0.0
  %1520 = vmatpush1.msra.mxu0 %v349
  %1521 = vmatprep.subr.mxu0 0.0
  %1522 = vmatpush1.msra.mxu0 %v348
  %1523 = vmatprep.subr.mxu0 0.0
  %1524 = vmatpush2.msra.mxu0 0.0
  %1525 = vmatprep.subr.mxu0 0.0
  %1526 = vmatpush2.msra.mxu0 0.0
  %1527 = vmatprep.subr.mxu0 0.0
  %1528 = vmatpush2.msra.mxu0 0.0
  %1529 = vmatprep.subr.mxu0 0.0
  %1530 = vmatpush2.msra.mxu0 0.0
  %1531 = vmatprep.subr.mxu0 0.0
  %1532 = vmatpush2.msra.mxu0 0.0
  %1533 = vmatprep.subr.mxu0 0.0
  %1534 = vmatpush2.msra.mxu0 0.0
  %1535 = vmatprep.subr.mxu0 0.0
  %1536 = vmatpush2.msra.mxu0 0.0
  %1537 = vmatprep.subr.mxu0 0.0
  %1538 = vmatpush2.msra.mxu0 0.0
  %1539 = vmatprep.subr.mxu0 0.0
  %1540 = vmatpush2.msra.mxu0 0.0
  %1541 = vmatprep.subr.mxu0 0.0
  %1542 = vmatpush2.msra.mxu0 0.0
  %1543 = vmatprep.subr.mxu0 0.0
  %1544 = vmatpush2.msra.mxu0 0.0
  %1545 = vmatprep.subr.mxu0 0.0
  %1546 = vmatpush2.msra.mxu0 0.0
  %1547 = vmatprep.subr.mxu0 0.0
  %1548 = vmatpush2.msra.mxu0 0.0
  %1549 = vmatprep.subr.mxu0 0.0
  %1550 = vmatpush2.msra.mxu0 0.0
  %1551 = vmatprep.subr.mxu0 0.0
  %1552 = vmatpush2.msra.mxu0 0.0
  %1553 = vmatprep.subr.mxu0 0.0
  %1554 = vmatpush2.msra.mxu0 0.0
  %1555 = vmatprep.mubr.f32.mxu0 0.0
  %1556 = vmatmul.mubr.f32.gmra.mxu0 %v1486
  %v1557 = vpop.f32.mrf.mxu0
  %v1558 = vadd.f32 0.0, %v1557
  %v1559 = vpop.f32.mrf.mxu0
  %1560 = vmatprep.mubr.f32.mxu0 0.0
  %1561 = vmatmul.mubr.f32.gmra.mxu0 %v1489
  %v1562 = vpop.f32.mrf.mxu0
  %v1563 = vadd.f32 0.0, %v1562
  %v1564 = vpop.f32.mrf.mxu0
  %1565 = vdwg.mxu0
  %s1566 = scalar_lea.vmem [#allocation2], 80
  %v1567 = vld [vmem:[%s1566] sm:$0xff]
  %v1568 = vld [vmem:[%s1566 + $0x8] sm:$0xff]
  %s1569 = scalar_lea.vmem [#allocation2], 160
  %v1570 = vld [vmem:[%s1569] sm:$0xff]
  %v1571 = vld [vmem:[%s1569 + $0x8] sm:$0xff]
  %v1572 = vadd.f32 %v1567, %v1558
  %v1573 = vadd.f32 %v1568, %v1563
  %v1574 = vxor.u32 %v1572, 2147483648
  %v1575 = vxor.u32 %v1573, 2147483648
  %v1576 = vmul.f32 %v1574, 1.442695
  %v1577 = vpow.pop %v1576
  %v1578 = vmul.f32 %v1575, 1.442695
  %v1579 = vpow.pop %v1578
  %v1580 = vadd.f32 %v1577, 1.0
  %v1581 = vadd.f32 %v1579, 1.0
  %v1582 = vrcp.pop %v1580
  %v1583 = vmul.f32 1.0, %v1582
  %v1584 = vrcp.pop %v1581
  %v1585 = vmul.f32 1.0, %v1584
  %v1586 = vadd.f32 %v1558, %v458
  %v1587 = vadd.f32 %v1563, %v458
  %1590 = vrot.lane.b32.xlu0 %v1586, 96
  %v1591 = vpop.permute.xlu0 %1590
  %1592 = vrot.lane.b32.xlu0 %v1587, 96
  %v1593 = vpop.permute.xlu0 %1592
  %v1596 = vmul.f32 %v1583, %v1591
  %v1597 = vmul.f32 %v1585, %v1593
  %1600 = vrot.lane.b32.xlu0 %v1596, 32
  %v1601 = vpop.permute.xlu0 %1600
  %1602 = vrot.lane.b32.xlu0 %v1597, 32
  %v1603 = vpop.permute.xlu0 %1602
  %v1606 = vadd.f32 %v1567, %v1601
  %v1607 = vadd.f32 %v1568, %v1603
  %v1608 = vtanh.pop %v1606
  %v1609 = vtanh.pop %v1607
  %v1610 = vsub.f32 1.0, %v1583
  %v1611 = vsub.f32 1.0, %v1585
  %1614 = vrot.lane.b32.xlu0 %v1608, 112
  %v1615 = vpop.permute.xlu0 %1614
  %1616 = vrot.lane.b32.xlu0 %v1609, 112
  %v1617 = vpop.permute.xlu0 %1616
  %v1620 = vmul.f32 %v1610, %v1615
  %v1621 = vmul.f32 %v1611, %v1617
  %1622 = vrot.lane.b32.xlu0 %v1483, 16
  %v1623 = vpop.permute.xlu0 %1622
  %1624 = vrot.lane.b32.xlu0 %v1484, 16
  %v1625 = vpop.permute.xlu0 %1624
  %v1628 = vmul.f32 %v1583, %v1623
  %v1629 = vmul.f32 %v1585, %v1625
  %v1630 = vadd.f32 %v1620, %v1628
  %v1631 = vadd.f32 %v1621, %v1629
  %1634 = vrot.lane.b32.xlu0 %v1558, 80
  %v1635 = vpop.permute.xlu0 %1634
  %1636 = vrot.lane.b32.xlu0 %v1563, 80
  %v1637 = vpop.permute.xlu0 %1636
  %v1640 = vadd.f32 %v1570, %v1635
  %v1641 = vadd.f32 %v1571, %v1637
  %v1642 = vxor.u32 %v1640, 2147483648
  %v1643 = vxor.u32 %v1641, 2147483648
  %v1644 = vmul.f32 %v1642, 1.442695
  %v1645 = vpow.pop %v1644
  %v1646 = vmul.f32 %v1643, 1.442695
  %v1647 = vpow.pop %v1646
  %v1648 = vadd.f32 %v1645, 1.0
  %v1649 = vadd.f32 %v1647, 1.0
  %v1650 = vrcp.pop %v1648
  %v1651 = vmul.f32 1.0, %v1650
  %v1652 = vrcp.pop %v1649
  %v1653 = vmul.f32 1.0, %v1652
  %v1654 = vadd.f32 %v1558, %v528
  %v1655 = vadd.f32 %v1563, %v528
  %1658 = vrot.lane.b32.xlu0 %v1654, 48
  %v1659 = vpop.permute.xlu0 %1658
  %1660 = vrot.lane.b32.xlu0 %v1655, 48
  %v1661 = vpop.permute.xlu0 %1660
  %v1664 = vmul.f32 %v1651, %v1659
  %v1665 = vmul.f32 %v1653, %v1661
  %1668 = vrot.lane.b32.xlu0 %v1664, 32
  %v1669 = vpop.permute.xlu0 %1668
  %1670 = vrot.lane.b32.xlu0 %v1665, 32
  %v1671 = vpop.permute.xlu0 %1670
  %v1674 = vadd.f32 %v1570, %v1669
  %v1675 = vadd.f32 %v1571, %v1671
  %v1676 = vtanh.pop %v1674
  %v1677 = vtanh.pop %v1675
  %v1678 = vsub.f32 1.0, %v1651
  %v1679 = vsub.f32 1.0, %v1653
  %1682 = vrot.lane.b32.xlu0 %v1676, 112
  %v1683 = vpop.permute.xlu0 %1682
  %1684 = vrot.lane.b32.xlu0 %v1677, 112
  %v1685 = vpop.permute.xlu0 %1684
  %v1688 = vmul.f32 %v1678, %v1683
  %v1689 = vmul.f32 %v1679, %v1685
  %v1690 = vmul.f32 %v1651, %v1483
  %v1691 = vmul.f32 %v1653, %v1484
  %v1692 = vadd.f32 %v1688, %v1690
  %v1693 = vadd.f32 %v1689, %v1691
  %1696 = vrot.lane.b32.xlu0 %v1630, 112
  %v1697 = vpop.permute.xlu0 %1696
  %1698 = vrot.lane.b32.xlu0 %v1631, 112
  %v1699 = vpop.permute.xlu0 %1698
  %1702 = vst.msk [vmem:[%s1032] sm:$0xff] %vm578, %v1697
  %1703 = vst.msk [vmem:[%s1032 + $0x8] sm:$0xff] %vm578, %v1699
  %1704 = vst.msk [vmem:[%s1029] sm:$0xff] %vm582, %v1692
  %1705 = vst.msk [vmem:[%s1029 + $0x8] sm:$0xff] %vm582, %v1693
  %v1706 = vsel %vm578, %v1697, %v1692
  %v1707 = vsel %vm578, %v1699, %v1693
  %v1709 = vsel %vm56, %v1706, 0
  %v1712 = vsel %vm56, %v1707, 0
  %1714 = vmatprep.subr.mxu0 0.0
  %1715 = vmatpush1.msra.mxu0 0.0
  %1716 = vmatprep.subr.mxu0 0.0
  %1717 = vmatpush1.msra.mxu0 0.0
  %1718 = vmatprep.subr.mxu0 0.0
  %1719 = vmatpush1.msra.mxu0 0.0
  %1720 = vmatprep.subr.mxu0 0.0
  %1721 = vmatpush1.msra.mxu0 0.0
  %1722 = vmatprep.subr.mxu0 0.0
  %1723 = vmatpush1.msra.mxu0 0.0
  %1724 = vmatprep.subr.mxu0 0.0
  %1725 = vmatpush1.msra.mxu0 0.0
  %1726 = vmatprep.subr.mxu0 0.0
  %1727 = vmatpush1.msra.mxu0 0.0
  %1728 = vmatprep.subr.mxu0 0.0
  %1729 = vmatpush1.msra.mxu0 0.0
  %1730 = vmatprep.subr.mxu0 0.0
  %1731 = vmatpush1.msra.mxu0 0.0
  %1732 = vmatprep.subr.mxu0 0.0
  %1733 = vmatpush1.msra.mxu0 0.0
  %1734 = vmatprep.subr.mxu0 0.0
  %1735 = vmatpush1.msra.mxu0 0.0
  %1736 = vmatprep.subr.mxu0 0.0
  %1737 = vmatpush1.msra.mxu0 0.0
  %1738 = vmatprep.subr.mxu0 0.0
  %1739 = vmatpush1.msra.mxu0 %v351
  %1740 = vmatprep.subr.mxu0 0.0
  %1741 = vmatpush1.msra.mxu0 %v350
  %1742 = vmatprep.subr.mxu0 0.0
  %1743 = vmatpush1.msra.mxu0 %v349
  %1744 = vmatprep.subr.mxu0 0.0
  %1745 = vmatpush1.msra.mxu0 %v348
  %1746 = vmatprep.subr.mxu0 0.0
  %1747 = vmatpush2.msra.mxu0 0.0
  %1748 = vmatprep.subr.mxu0 0.0
  %1749 = vmatpush2.msra.mxu0 0.0
  %1750 = vmatprep.subr.mxu0 0.0
  %1751 = vmatpush2.msra.mxu0 0.0
  %1752 = vmatprep.subr.mxu0 0.0
  %1753 = vmatpush2.msra.mxu0 0.0
  %1754 = vmatprep.subr.mxu0 0.0
  %1755 = vmatpush2.msra.mxu0 0.0
  %1756 = vmatprep.subr.mxu0 0.0
  %1757 = vmatpush2.msra.mxu0 0.0
  %1758 = vmatprep.subr.mxu0 0.0
  %1759 = vmatpush2.msra.mxu0 0.0
  %1760 = vmatprep.subr.mxu0 0.0
  %1761 = vmatpush2.msra.mxu0 0.0
  %1762 = vmatprep.subr.mxu0 0.0
  %1763 = vmatpush2.msra.mxu0 0.0
  %1764 = vmatprep.subr.mxu0 0.0
  %1765 = vmatpush2.msra.mxu0 0.0
  %1766 = vmatprep.subr.mxu0 0.0
  %1767 = vmatpush2.msra.mxu0 0.0
  %1768 = vmatprep.subr.mxu0 0.0
  %1769 = vmatpush2.msra.mxu0 0.0
  %1770 = vmatprep.subr.mxu0 0.0
  %1771 = vmatpush2.msra.mxu0 0.0
  %1772 = vmatprep.subr.mxu0 0.0
  %1773 = vmatpush2.msra.mxu0 0.0
  %1774 = vmatprep.subr.mxu0 0.0
  %1775 = vmatpush2.msra.mxu0 0.0
  %1776 = vmatprep.subr.mxu0 0.0
  %1777 = vmatpush2.msra.mxu0 0.0
  %1778 = vmatprep.mubr.f32.mxu0 0.0
  %1779 = vmatmul.mubr.f32.gmra.mxu0 %v1709
  %v1780 = vpop.f32.mrf.mxu0
  %v1781 = vadd.f32 0.0, %v1780
  %v1782 = vpop.f32.mrf.mxu0
  %1783 = vmatprep.mubr.f32.mxu0 0.0
  %1784 = vmatmul.mubr.f32.gmra.mxu0 %v1712
  %v1785 = vpop.f32.mrf.mxu0
  %v1786 = vadd.f32 0.0, %v1785
  %v1787 = vpop.f32.mrf.mxu0
  %1788 = vdwg.mxu0
  %s1789 = scalar_lea.vmem [#allocation2], 96
  %v1790 = vld [vmem:[%s1789] sm:$0xff]
  %v1791 = vld [vmem:[%s1789 + $0x8] sm:$0xff]
  %s1792 = scalar_lea.vmem [#allocation2], 144
  %v1793 = vld [vmem:[%s1792] sm:$0xff]
  %v1794 = vld [vmem:[%s1792 + $0x8] sm:$0xff]
  %v1795 = vadd.f32 %v1790, %v1781
  %v1796 = vadd.f32 %v1791, %v1786
  %v1797 = vxor.u32 %v1795, 2147483648
  %v1798 = vxor.u32 %v1796, 2147483648
  %v1799 = vmul.f32 %v1797, 1.442695
  %v1800 = vpow.pop %v1799
  %v1801 = vmul.f32 %v1798, 1.442695
  %v1802 = vpow.pop %v1801
  %v1803 = vadd.f32 %v1800, 1.0
  %v1804 = vadd.f32 %v1802, 1.0
  %v1805 = vrcp.pop %v1803
  %v1806 = vmul.f32 1.0, %v1805
  %v1807 = vrcp.pop %v1804
  %v1808 = vmul.f32 1.0, %v1807
  %v1809 = vadd.f32 %v1781, %v458
  %v1810 = vadd.f32 %v1786, %v458
  %1813 = vrot.lane.b32.xlu0 %v1809, 96
  %v1814 = vpop.permute.xlu0 %1813
  %1815 = vrot.lane.b32.xlu0 %v1810, 96
  %v1816 = vpop.permute.xlu0 %1815
  %v1819 = vmul.f32 %v1806, %v1814
  %v1820 = vmul.f32 %v1808, %v1816
  %1823 = vrot.lane.b32.xlu0 %v1819, 32
  %v1824 = vpop.permute.xlu0 %1823
  %1825 = vrot.lane.b32.xlu0 %v1820, 32
  %v1826 = vpop.permute.xlu0 %1825
  %v1829 = vadd.f32 %v1790, %v1824
  %v1830 = vadd.f32 %v1791, %v1826
  %v1831 = vtanh.pop %v1829
  %v1832 = vtanh.pop %v1830
  %v1833 = vsub.f32 1.0, %v1806
  %v1834 = vsub.f32 1.0, %v1808
  %1837 = vrot.lane.b32.xlu0 %v1831, 112
  %v1838 = vpop.permute.xlu0 %1837
  %1839 = vrot.lane.b32.xlu0 %v1832, 112
  %v1840 = vpop.permute.xlu0 %1839
  %v1843 = vmul.f32 %v1833, %v1838
  %v1844 = vmul.f32 %v1834, %v1840
  %1845 = vrot.lane.b32.xlu0 %v1706, 16
  %v1846 = vpop.permute.xlu0 %1845
  %1847 = vrot.lane.b32.xlu0 %v1707, 16
  %v1848 = vpop.permute.xlu0 %1847
  %v1851 = vmul.f32 %v1806, %v1846
  %v1852 = vmul.f32 %v1808, %v1848
  %v1853 = vadd.f32 %v1843, %v1851
  %v1854 = vadd.f32 %v1844, %v1852
  %1857 = vrot.lane.b32.xlu0 %v1781, 80
  %v1858 = vpop.permute.xlu0 %1857
  %1859 = vrot.lane.b32.xlu0 %v1786, 80
  %v1860 = vpop.permute.xlu0 %1859
  %v1863 = vadd.f32 %v1793, %v1858
  %v1864 = vadd.f32 %v1794, %v1860
  %v1865 = vxor.u32 %v1863, 2147483648
  %v1866 = vxor.u32 %v1864, 2147483648
  %v1867 = vmul.f32 %v1865, 1.442695
  %v1868 = vpow.pop %v1867
  %v1869 = vmul.f32 %v1866, 1.442695
  %v1870 = vpow.pop %v1869
  %v1871 = vadd.f32 %v1868, 1.0
  %v1872 = vadd.f32 %v1870, 1.0
  %v1873 = vrcp.pop %v1871
  %v1874 = vmul.f32 1.0, %v1873
  %v1875 = vrcp.pop %v1872
  %v1876 = vmul.f32 1.0, %v1875
  %v1877 = vadd.f32 %v1781, %v528
  %v1878 = vadd.f32 %v1786, %v528
  %1881 = vrot.lane.b32.xlu0 %v1877, 48
  %v1882 = vpop.permute.xlu0 %1881
  %1883 = vrot.lane.b32.xlu0 %v1878, 48
  %v1884 = vpop.permute.xlu0 %1883
  %v1887 = vmul.f32 %v1874, %v1882
  %v1888 = vmul.f32 %v1876, %v1884
  %1891 = vrot.lane.b32.xlu0 %v1887, 32
  %v1892 = vpop.permute.xlu0 %1891
  %1893 = vrot.lane.b32.xlu0 %v1888, 32
  %v1894 = vpop.permute.xlu0 %1893
  %v1897 = vadd.f32 %v1793, %v1892
  %v1898 = vadd.f32 %v1794, %v1894
  %v1899 = vtanh.pop %v1897
  %v1900 = vtanh.pop %v1898
  %v1901 = vsub.f32 1.0, %v1874
  %v1902 = vsub.f32 1.0, %v1876
  %1905 = vrot.lane.b32.xlu0 %v1899, 112
  %v1906 = vpop.permute.xlu0 %1905
  %1907 = vrot.lane.b32.xlu0 %v1900, 112
  %v1908 = vpop.permute.xlu0 %1907
  %v1911 = vmul.f32 %v1901, %v1906
  %v1912 = vmul.f32 %v1902, %v1908
  %v1913 = vmul.f32 %v1874, %v1706
  %v1914 = vmul.f32 %v1876, %v1707
  %v1915 = vadd.f32 %v1911, %v1913
  %v1916 = vadd.f32 %v1912, %v1914
  %1919 = vrot.lane.b32.xlu0 %v1853, 112
  %v1920 = vpop.permute.xlu0 %1919
  %1921 = vrot.lane.b32.xlu0 %v1854, 112
  %v1922 = vpop.permute.xlu0 %1921
  %1925 = vst.msk [vmem:[%s807] sm:$0xff] %vm578, %v1920
  %1926 = vst.msk [vmem:[%s807 + $0x8] sm:$0xff] %vm578, %v1922
  %1927 = vst.msk [vmem:[%s804] sm:$0xff] %vm582, %v1915
  %1928 = vst.msk [vmem:[%s804 + $0x8] sm:$0xff] %vm582, %v1916
  %v1929 = vsel %vm578, %v1920, %v1915
  %v1930 = vsel %vm578, %v1922, %v1916
  %v1932 = vsel %vm56, %v1929, 0
  %v1935 = vsel %vm56, %v1930, 0
  %1937 = vmatprep.subr.mxu0 0.0
  %1938 = vmatpush1.msra.mxu0 0.0
  %1939 = vmatprep.subr.mxu0 0.0
  %1940 = vmatpush1.msra.mxu0 0.0
  %1941 = vmatprep.subr.mxu0 0.0
  %1942 = vmatpush1.msra.mxu0 0.0
  %1943 = vmatprep.subr.mxu0 0.0
  %1944 = vmatpush1.msra.mxu0 0.0
  %1945 = vmatprep.subr.mxu0 0.0
  %1946 = vmatpush1.msra.mxu0 0.0
  %1947 = vmatprep.subr.mxu0 0.0
  %1948 = vmatpush1.msra.mxu0 0.0
  %1949 = vmatprep.subr.mxu0 0.0
  %1950 = vmatpush1.msra.mxu0 0.0
  %1951 = vmatprep.subr.mxu0 0.0
  %1952 = vmatpush1.msra.mxu0 0.0
  %1953 = vmatprep.subr.mxu0 0.0
  %1954 = vmatpush1.msra.mxu0 0.0
  %1955 = vmatprep.subr.mxu0 0.0
  %1956 = vmatpush1.msra.mxu0 0.0
  %1957 = vmatprep.subr.mxu0 0.0
  %1958 = vmatpush1.msra.mxu0 0.0
  %1959 = vmatprep.subr.mxu0 0.0
  %1960 = vmatpush1.msra.mxu0 0.0
  %1961 = vmatprep.subr.mxu0 0.0
  %1962 = vmatpush1.msra.mxu0 %v351
  %1963 = vmatprep.subr.mxu0 0.0
  %1964 = vmatpush1.msra.mxu0 %v350
  %1965 = vmatprep.subr.mxu0 0.0
  %1966 = vmatpush1.msra.mxu0 %v349
  %1967 = vmatprep.subr.mxu0 0.0
  %1968 = vmatpush1.msra.mxu0 %v348
  %1969 = vmatprep.subr.mxu0 0.0
  %1970 = vmatpush2.msra.mxu0 0.0
  %1971 = vmatprep.subr.mxu0 0.0
  %1972 = vmatpush2.msra.mxu0 0.0
  %1973 = vmatprep.subr.mxu0 0.0
  %1974 = vmatpush2.msra.mxu0 0.0
  %1975 = vmatprep.subr.mxu0 0.0
  %1976 = vmatpush2.msra.mxu0 0.0
  %1977 = vmatprep.subr.mxu0 0.0
  %1978 = vmatpush2.msra.mxu0 0.0
  %1979 = vmatprep.subr.mxu0 0.0
  %1980 = vmatpush2.msra.mxu0 0.0
  %1981 = vmatprep.subr.mxu0 0.0
  %1982 = vmatpush2.msra.mxu0 0.0
  %1983 = vmatprep.subr.mxu0 0.0
  %1984 = vmatpush2.msra.mxu0 0.0
  %1985 = vmatprep.subr.mxu0 0.0
  %1986 = vmatpush2.msra.mxu0 0.0
  %1987 = vmatprep.subr.mxu0 0.0
  %1988 = vmatpush2.msra.mxu0 0.0
  %1989 = vmatprep.subr.mxu0 0.0
  %1990 = vmatpush2.msra.mxu0 0.0
  %1991 = vmatprep.subr.mxu0 0.0
  %1992 = vmatpush2.msra.mxu0 0.0
  %1993 = vmatprep.subr.mxu0 0.0
  %1994 = vmatpush2.msra.mxu0 0.0
  %1995 = vmatprep.subr.mxu0 0.0
  %1996 = vmatpush2.msra.mxu0 0.0
  %1997 = vmatprep.subr.mxu0 0.0
  %1998 = vmatpush2.msra.mxu0 0.0
  %1999 = vmatprep.subr.mxu0 0.0
  %2000 = vmatpush2.msra.mxu0 0.0
  %2001 = vmatprep.mubr.f32.mxu0 0.0
  %2002 = vmatmul.mubr.f32.gmra.mxu0 %v1932
  %v2003 = vpop.f32.mrf.mxu0
  %v2004 = vadd.f32 0.0, %v2003
  %v2005 = vpop.f32.mrf.mxu0
  %2006 = vmatprep.mubr.f32.mxu0 0.0
  %2007 = vmatmul.mubr.f32.gmra.mxu0 %v1935
  %v2008 = vpop.f32.mrf.mxu0
  %v2009 = vadd.f32 0.0, %v2008
  %v2010 = vpop.f32.mrf.mxu0
  %2011 = vdwg.mxu0
  %s2012 = scalar_lea.vmem [#allocation2], 112
  %v2013 = vld [vmem:[%s2012] sm:$0xff]
  %v2014 = vld [vmem:[%s2012 + $0x8] sm:$0xff]
  %v2015 = vld [vmem:[%s331] sm:$0xff]
  %v2016 = vld [vmem:[%s331 + $0x8] sm:$0xff]
  %v2017 = vadd.f32 %v2013, %v2004
  %v2018 = vadd.f32 %v2014, %v2009
  %v2019 = vxor.u32 %v2017, 2147483648
  %v2020 = vxor.u32 %v2018, 2147483648
  %v2021 = vmul.f32 %v2019, 1.442695
  %v2022 = vpow.pop %v2021
  %v2023 = vmul.f32 %v2020, 1.442695
  %v2024 = vpow.pop %v2023
  %v2025 = vadd.f32 %v2022, 1.0
  %v2026 = vadd.f32 %v2024, 1.0
  %v2027 = vrcp.pop %v2025
  %v2028 = vmul.f32 1.0, %v2027
  %v2029 = vrcp.pop %v2026
  %v2030 = vmul.f32 1.0, %v2029
  %v2031 = vadd.f32 %v2004, %v458
  %v2032 = vadd.f32 %v2009, %v458
  %2035 = vrot.lane.b32.xlu0 %v2031, 96
  %v2036 = vpop.permute.xlu0 %2035
  %2037 = vrot.lane.b32.xlu0 %v2032, 96
  %v2038 = vpop.permute.xlu0 %2037
  %v2041 = vmul.f32 %v2028, %v2036
  %v2042 = vmul.f32 %v2030, %v2038
  %2045 = vrot.lane.b32.xlu0 %v2041, 32
  %v2046 = vpop.permute.xlu0 %2045
  %2047 = vrot.lane.b32.xlu0 %v2042, 32
  %v2048 = vpop.permute.xlu0 %2047
  %v2051 = vadd.f32 %v2013, %v2046
  %v2052 = vadd.f32 %v2014, %v2048
  %v2053 = vtanh.pop %v2051
  %v2054 = vtanh.pop %v2052
  %v2055 = vsub.f32 1.0, %v2028
  %v2056 = vsub.f32 1.0, %v2030
  %2059 = vrot.lane.b32.xlu0 %v2053, 112
  %v2060 = vpop.permute.xlu0 %2059
  %2061 = vrot.lane.b32.xlu0 %v2054, 112
  %v2062 = vpop.permute.xlu0 %2061
  %v2065 = vmul.f32 %v2055, %v2060
  %v2066 = vmul.f32 %v2056, %v2062
  %2067 = vrot.lane.b32.xlu0 %v1929, 16
  %v2068 = vpop.permute.xlu0 %2067
  %2069 = vrot.lane.b32.xlu0 %v1930, 16
  %v2070 = vpop.permute.xlu0 %2069
  %v2073 = vmul.f32 %v2028, %v2068
  %v2074 = vmul.f32 %v2030, %v2070
  %v2075 = vadd.f32 %v2065, %v2073
  %v2076 = vadd.f32 %v2066, %v2074
  %2079 = vrot.lane.b32.xlu0 %v2004, 80
  %v2080 = vpop.permute.xlu0 %2079
  %2081 = vrot.lane.b32.xlu0 %v2009, 80
  %v2082 = vpop.permute.xlu0 %2081
  %v2085 = vadd.f32 %v2015, %v2080
  %v2086 = vadd.f32 %v2016, %v2082
  %v2087 = vxor.u32 %v2085, 2147483648
  %v2088 = vxor.u32 %v2086, 2147483648
  %v2089 = vmul.f32 %v2087, 1.442695
  %v2090 = vpow.pop %v2089
  %v2091 = vmul.f32 %v2088, 1.442695
  %v2092 = vpow.pop %v2091
  %v2093 = vadd.f32 %v2090, 1.0
  %v2094 = vadd.f32 %v2092, 1.0
  %v2095 = vrcp.pop %v2093
  %v2096 = vmul.f32 1.0, %v2095
  %v2097 = vrcp.pop %v2094
  %v2098 = vmul.f32 1.0, %v2097
  %v2099 = vadd.f32 %v2004, %v528
  %v2100 = vadd.f32 %v2009, %v528
  %2103 = vrot.lane.b32.xlu0 %v2099, 48
  %v2104 = vpop.permute.xlu0 %2103
  %2105 = vrot.lane.b32.xlu0 %v2100, 48
  %v2106 = vpop.permute.xlu0 %2105
  %v2109 = vmul.f32 %v2096, %v2104
  %v2110 = vmul.f32 %v2098, %v2106
  %2113 = vrot.lane.b32.xlu0 %v2109, 32
  %v2114 = vpop.permute.xlu0 %2113
  %2115 = vrot.lane.b32.xlu0 %v2110, 32
  %v2116 = vpop.permute.xlu0 %2115
  %v2119 = vadd.f32 %v2015, %v2114
  %v2120 = vadd.f32 %v2016, %v2116
  %v2121 = vtanh.pop %v2119
  %v2122 = vtanh.pop %v2120
  %v2123 = vsub.f32 1.0, %v2096
  %v2124 = vsub.f32 1.0, %v2098
  %2127 = vrot.lane.b32.xlu0 %v2121, 112
  %v2128 = vpop.permute.xlu0 %2127
  %2129 = vrot.lane.b32.xlu0 %v2122, 112
  %v2130 = vpop.permute.xlu0 %2129
  %v2133 = vmul.f32 %v2123, %v2128
  %v2134 = vmul.f32 %v2124, %v2130
  %v2135 = vmul.f32 %v2096, %v1929
  %v2136 = vmul.f32 %v2098, %v1930
  %v2137 = vadd.f32 %v2133, %v2135
  %v2138 = vadd.f32 %v2134, %v2136
  %2141 = vrot.lane.b32.xlu0 %v2075, 112
  %v2142 = vpop.permute.xlu0 %2141
  %2143 = vrot.lane.b32.xlu0 %v2076, 112
  %v2144 = vpop.permute.xlu0 %2143
  %2147 = vst.msk [vmem:[%s581] sm:$0xff] %vm578, %v2142
  %2148 = vst.msk [vmem:[%s581 + $0x8] sm:$0xff] %vm578, %v2144
  %2149 = vst.msk [vmem:[#allocation3] sm:$0xff] %vm582, %v2137
  %2150 = vst.msk [vmem:[#allocation3 + $0x8] sm:$0xff] %vm582, %v2138
  %v2151 = vld [vmem:[#allocation3] sm:$0xff]
  %v2152 = vld [vmem:[#allocation3 + $0x8] sm:$0xff]
  %v2153 = vld [vmem:[#allocation3 + $0x10] sm:$0xff]
  %v2154 = vld [vmem:[#allocation3 + $0x18] sm:$0xff]
  %v2155 = vld [vmem:[#allocation3 + $0x20] sm:$0xff]
  %v2156 = vld [vmem:[#allocation3 + $0x28] sm:$0xff]
  %v2157 = vld [vmem:[#allocation3 + $0x30] sm:$0xff]
  %v2158 = vld [vmem:[#allocation3 + $0x38] sm:$0xff]
  %v2159 = vld [vmem:[#allocation3 + $0x40] sm:$0xff]
  %v2160 = vld [vmem:[#allocation3 + $0x48] sm:$0xff]
  %v2161 = vld [vmem:[#allocation3 + $0x50] sm:$0xff]
  %v2162 = vld [vmem:[#allocation3 + $0x58] sm:$0xff]
  %v2163 = vld [vmem:[#allocation3 + $0x60] sm:$0xff]
  %v2164 = vld [vmem:[#allocation3 + $0x68] sm:$0xff]
  %v2165 = vld [vmem:[#allocation3 + $0x70] sm:$0xff]
  %v2166 = vld [vmem:[#allocation3 + $0x78] sm:$0xff]
  %v2167 = vld [vmem:[%s5] sm:$0xff]
  %v2168 = vld [vmem:[%s5 + $0x8] sm:$0xff]
  %v2169 = vld [vmem:[%s5 + $0x10] sm:$0xff]
  %v2170 = vld [vmem:[%s5 + $0x18] sm:$0xff]
  %v2171 = vld [vmem:[%s6] sm:$0x1]
  %v2173 = vlaneseq
  %v2174 = vshrl.u32 %v2173, 7
  %v2175 = vsub.s32 0, %v2174
  %v2176 = vrot.slane %v2171, %v2175
  %v2179 = vsel %vm56, %v2151, 0
  %v2182 = vsel %vm56, %v2152, 0
  %v2185 = vsel %vm56, %v2153, 0
  %v2188 = vsel %vm56, %v2154, 0
  %v2191 = vsel %vm56, %v2155, 0
  %v2194 = vsel %vm56, %v2156, 0
  %v2197 = vsel %vm56, %v2157, 0
  %v2200 = vsel %vm56, %v2158, 0
  %v2203 = vsel %vm56, %v2159, 0
  %v2206 = vsel %vm56, %v2160, 0
  %v2209 = vsel %vm56, %v2161, 0
  %v2212 = vsel %vm56, %v2162, 0
  %v2215 = vsel %vm56, %v2163, 0
  %v2218 = vsel %vm56, %v2164, 0
  %v2221 = vsel %vm56, %v2165, 0
  %v2224 = vsel %vm56, %v2166, 0
  %2226 = vmatprep.subr.mxu0 0.0
  %2227 = vmatpush1.msra.mxu0 0.0
  %2228 = vmatprep.subr.mxu0 0.0
  %2229 = vmatpush1.msra.mxu0 0.0
  %2230 = vmatprep.subr.mxu0 0.0
  %2231 = vmatpush1.msra.mxu0 0.0
  %2232 = vmatprep.subr.mxu0 0.0
  %2233 = vmatpush1.msra.mxu0 0.0
  %2234 = vmatprep.subr.mxu0 0.0
  %2235 = vmatpush1.msra.mxu0 0.0
  %2236 = vmatprep.subr.mxu0 0.0
  %2237 = vmatpush1.msra.mxu0 0.0
  %2238 = vmatprep.subr.mxu0 0.0
  %2239 = vmatpush1.msra.mxu0 0.0
  %2240 = vmatprep.subr.mxu0 0.0
  %2241 = vmatpush1.msra.mxu0 0.0
  %2242 = vmatprep.subr.mxu0 0.0
  %2243 = vmatpush1.msra.mxu0 0.0
  %2244 = vmatprep.subr.mxu0 0.0
  %2245 = vmatpush1.msra.mxu0 0.0
  %2246 = vmatprep.subr.mxu0 0.0
  %2247 = vmatpush1.msra.mxu0 0.0
  %2248 = vmatprep.subr.mxu0 0.0
  %2249 = vmatpush1.msra.mxu0 0.0
  %2250 = vmatprep.subr.mxu0 0.0
  %2251 = vmatpush1.msra.mxu0 %v2170
  %2252 = vmatprep.subr.mxu0 0.0
  %2253 = vmatpush1.msra.mxu0 %v2169
  %2254 = vmatprep.subr.mxu0 0.0
  %2255 = vmatpush1.msra.mxu0 %v2168
  %2256 = vmatprep.subr.mxu0 0.0
  %2257 = vmatpush1.msra.mxu0 %v2167
  %2258 = vmatprep.subr.mxu0 0.0
  %2259 = vmatpush2.msra.mxu0 0.0
  %2260 = vmatprep.subr.mxu0 0.0
  %2261 = vmatpush2.msra.mxu0 0.0
  %2262 = vmatprep.subr.mxu0 0.0
  %2263 = vmatpush2.msra.mxu0 0.0
  %2264 = vmatprep.subr.mxu0 0.0
  %2265 = vmatpush2.msra.mxu0 0.0
  %2266 = vmatprep.subr.mxu0 0.0
  %2267 = vmatpush2.msra.mxu0 0.0
  %2268 = vmatprep.subr.mxu0 0.0
  %2269 = vmatpush2.msra.mxu0 0.0
  %2270 = vmatprep.subr.mxu0 0.0
  %2271 = vmatpush2.msra.mxu0 0.0
  %2272 = vmatprep.subr.mxu0 0.0
  %2273 = vmatpush2.msra.mxu0 0.0
  %2274 = vmatprep.subr.mxu0 0.0
  %2275 = vmatpush2.msra.mxu0 0.0
  %2276 = vmatprep.subr.mxu0 0.0
  %2277 = vmatpush2.msra.mxu0 0.0
  %2278 = vmatprep.subr.mxu0 0.0
  %2279 = vmatpush2.msra.mxu0 0.0
  %2280 = vmatprep.subr.mxu0 0.0
  %2281 = vmatpush2.msra.mxu0 0.0
  %2282 = vmatprep.subr.mxu0 0.0
  %2283 = vmatpush2.msra.mxu0 0.0
  %2284 = vmatprep.subr.mxu0 0.0
  %2285 = vmatpush2.msra.mxu0 0.0
  %2286 = vmatprep.subr.mxu0 0.0
  %2287 = vmatpush2.msra.mxu0 0.0
  %2288 = vmatprep.subr.mxu0 0.0
  %2289 = vmatpush2.msra.mxu0 0.0
  %2290 = vmatprep.mubr.f32.mxu0 0.0
  %2291 = vmatmul.mubr.f32.gmra.mxu0 %v2179
  %v2292 = vpop.f32.mrf.mxu0
  %v2293 = vadd.f32 %v2176, %v2292
  %v2294 = vpop.f32.mrf.mxu0
  %2295 = vmatprep.mubr.f32.mxu0 0.0
  %2296 = vmatmul.mubr.f32.gmra.mxu0 %v2182
  %v2297 = vpop.f32.mrf.mxu0
  %v2298 = vadd.f32 %v2176, %v2297
  %v2299 = vpop.f32.mrf.mxu0
  %2300 = vmatprep.mubr.f32.mxu0 0.0
  %2301 = vmatmul.mubr.f32.gmra.mxu0 %v2185
  %v2302 = vpop.f32.mrf.mxu0
  %v2303 = vadd.f32 %v2176, %v2302
  %v2304 = vpop.f32.mrf.mxu0
  %2305 = vmatprep.mubr.f32.mxu0 0.0
  %2306 = vmatmul.mubr.f32.gmra.mxu0 %v2188
  %v2307 = vpop.f32.mrf.mxu0
  %v2308 = vadd.f32 %v2176, %v2307
  %v2309 = vpop.f32.mrf.mxu0
  %2310 = vmatprep.mubr.f32.mxu0 0.0
  %2311 = vmatmul.mubr.f32.gmra.mxu0 %v2191
  %v2312 = vpop.f32.mrf.mxu0
  %v2313 = vadd.f32 %v2176, %v2312
  %v2314 = vpop.f32.mrf.mxu0
  %2315 = vmatprep.mubr.f32.mxu0 0.0
  %2316 = vmatmul.mubr.f32.gmra.mxu0 %v2194
  %v2317 = vpop.f32.mrf.mxu0
  %v2318 = vadd.f32 %v2176, %v2317
  %v2319 = vpop.f32.mrf.mxu0
  %2320 = vmatprep.mubr.f32.mxu0 0.0
  %2321 = vmatmul.mubr.f32.gmra.mxu0 %v2197
  %v2322 = vpop.f32.mrf.mxu0
  %v2323 = vadd.f32 %v2176, %v2322
  %v2324 = vpop.f32.mrf.mxu0
  %2325 = vmatprep.mubr.f32.mxu0 0.0
  %2326 = vmatmul.mubr.f32.gmra.mxu0 %v2200
  %v2327 = vpop.f32.mrf.mxu0
  %v2328 = vadd.f32 %v2176, %v2327
  %v2329 = vpop.f32.mrf.mxu0
  %2330 = vmatprep.mubr.f32.mxu0 0.0
  %2331 = vmatmul.mubr.f32.gmra.mxu0 %v2203
  %v2332 = vpop.f32.mrf.mxu0
  %v2333 = vadd.f32 %v2176, %v2332
  %v2334 = vpop.f32.mrf.mxu0
  %2335 = vmatprep.mubr.f32.mxu0 0.0
  %2336 = vmatmul.mubr.f32.gmra.mxu0 %v2206
  %v2337 = vpop.f32.mrf.mxu0
  %v2338 = vadd.f32 %v2176, %v2337
  %v2339 = vpop.f32.mrf.mxu0
  %2340 = vmatprep.mubr.f32.mxu0 0.0
  %2341 = vmatmul.mubr.f32.gmra.mxu0 %v2209
  %v2342 = vpop.f32.mrf.mxu0
  %v2343 = vadd.f32 %v2176, %v2342
  %v2344 = vpop.f32.mrf.mxu0
  %2345 = vmatprep.mubr.f32.mxu0 0.0
  %2346 = vmatmul.mubr.f32.gmra.mxu0 %v2212
  %v2347 = vpop.f32.mrf.mxu0
  %v2348 = vadd.f32 %v2176, %v2347
  %v2349 = vpop.f32.mrf.mxu0
  %2350 = vmatprep.mubr.f32.mxu0 0.0
  %2351 = vmatmul.mubr.f32.gmra.mxu0 %v2215
  %v2352 = vpop.f32.mrf.mxu0
  %v2353 = vadd.f32 %v2176, %v2352
  %v2354 = vpop.f32.mrf.mxu0
  %2355 = vmatprep.mubr.f32.mxu0 0.0
  %2356 = vmatmul.mubr.f32.gmra.mxu0 %v2218
  %v2357 = vpop.f32.mrf.mxu0
  %v2358 = vadd.f32 %v2176, %v2357
  %v2359 = vpop.f32.mrf.mxu0
  %2360 = vmatprep.mubr.f32.mxu0 0.0
  %2361 = vmatmul.mubr.f32.gmra.mxu0 %v2221
  %v2362 = vpop.f32.mrf.mxu0
  %v2363 = vadd.f32 %v2176, %v2362
  %v2364 = vpop.f32.mrf.mxu0
  %2365 = vmatprep.mubr.f32.mxu0 0.0
  %2366 = vmatmul.mubr.f32.gmra.mxu0 %v2224
  %v2367 = vpop.f32.mrf.mxu0
  %v2368 = vadd.f32 %v2176, %v2367
  %v2369 = vpop.f32.mrf.mxu0
  %2370 = vdwg.mxu0
  %v2371 = vtanh.pop %v2293
  %v2372 = vtanh.pop %v2298
  %v2373 = vtanh.pop %v2303
  %v2374 = vtanh.pop %v2308
  %v2375 = vtanh.pop %v2313
  %v2376 = vtanh.pop %v2318
  %v2377 = vtanh.pop %v2323
  %v2378 = vtanh.pop %v2328
  %v2379 = vtanh.pop %v2333
  %v2380 = vtanh.pop %v2338
  %v2381 = vtanh.pop %v2343
  %v2382 = vtanh.pop %v2348
  %v2383 = vtanh.pop %v2353
  %v2384 = vtanh.pop %v2358
  %v2385 = vtanh.pop %v2363
  %v2386 = vtanh.pop %v2368
  %v2387 = vld [vmem:[%s7] sm:$0xff]
  %v2388 = vld [vmem:[%s7 + $0x8] sm:$0xff]
  %v2389 = vld [vmem:[%s7 + $0x10] sm:$0xff]
  %v2390 = vld [vmem:[%s7 + $0x18] sm:$0xff]
  %v2392 = vsel %vm56, %v2371, 0
  %v2395 = vsel %vm56, %v2372, 0
  %v2398 = vsel %vm56, %v2373, 0
  %v2401 = vsel %vm56, %v2374, 0
  %v2404 = vsel %vm56, %v2375, 0
  %v2407 = vsel %vm56, %v2376, 0
  %v2410 = vsel %vm56, %v2377, 0
  %v2413 = vsel %vm56, %v2378, 0
  %v2416 = vsel %vm56, %v2379, 0
  %v2419 = vsel %vm56, %v2380, 0
  %v2422 = vsel %vm56, %v2381, 0
  %v2425 = vsel %vm56, %v2382, 0
  %v2428 = vsel %vm56, %v2383, 0
  %v2431 = vsel %vm56, %v2384, 0
  %v2434 = vsel %vm56, %v2385, 0
  %v2437 = vsel %vm56, %v2386, 0
  %2439 = vmatprep.subr.mxu0 0.0
  %2440 = vmatpush1.msra.mxu0 0.0
  %2441 = vmatprep.subr.mxu0 0.0
  %2442 = vmatpush1.msra.mxu0 0.0
  %2443 = vmatprep.subr.mxu0 0.0
  %2444 = vmatpush1.msra.mxu0 0.0
  %2445 = vmatprep.subr.mxu0 0.0
  %2446 = vmatpush1.msra.mxu0 0.0
  %2447 = vmatprep.subr.mxu0 0.0
  %2448 = vmatpush1.msra.mxu0 0.0
  %2449 = vmatprep.subr.mxu0 0.0
  %2450 = vmatpush1.msra.mxu0 0.0
  %2451 = vmatprep.subr.mxu0 0.0
  %2452 = vmatpush1.msra.mxu0 0.0
  %2453 = vmatprep.subr.mxu0 0.0
  %2454 = vmatpush1.msra.mxu0 0.0
  %2455 = vmatprep.subr.mxu0 0.0
  %2456 = vmatpush1.msra.mxu0 0.0
  %2457 = vmatprep.subr.mxu0 0.0
  %2458 = vmatpush1.msra.mxu0 0.0
  %2459 = vmatprep.subr.mxu0 0.0
  %2460 = vmatpush1.msra.mxu0 0.0
  %2461 = vmatprep.subr.mxu0 0.0
  %2462 = vmatpush1.msra.mxu0 0.0
  %2463 = vmatprep.subr.mxu0 0.0
  %2464 = vmatpush1.msra.mxu0 %v2390
  %2465 = vmatprep.subr.mxu0 0.0
  %2466 = vmatpush1.msra.mxu0 %v2389
  %2467 = vmatprep.subr.mxu0 0.0
  %2468 = vmatpush1.msra.mxu0 %v2388
  %2469 = vmatprep.subr.mxu0 0.0
  %2470 = vmatpush1.msra.mxu0 %v2387
  %2471 = vmatprep.subr.mxu0 0.0
  %2472 = vmatpush2.msra.mxu0 0.0
  %2473 = vmatprep.subr.mxu0 0.0
  %2474 = vmatpush2.msra.mxu0 0.0
  %2475 = vmatprep.subr.mxu0 0.0
  %2476 = vmatpush2.msra.mxu0 0.0
  %2477 = vmatprep.subr.mxu0 0.0
  %2478 = vmatpush2.msra.mxu0 0.0
  %2479 = vmatprep.subr.mxu0 0.0
  %2480 = vmatpush2.msra.mxu0 0.0
  %2481 = vmatprep.subr.mxu0 0.0
  %2482 = vmatpush2.msra.mxu0 0.0
  %2483 = vmatprep.subr.mxu0 0.0
  %2484 = vmatpush2.msra.mxu0 0.0
  %2485 = vmatprep.subr.mxu0 0.0
  %2486 = vmatpush2.msra.mxu0 0.0
  %2487 = vmatprep.subr.mxu0 0.0
  %2488 = vmatpush2.msra.mxu0 0.0
  %2489 = vmatprep.subr.mxu0 0.0
  %2490 = vmatpush2.msra.mxu0 0.0
  %2491 = vmatprep.subr.mxu0 0.0
  %2492 = vmatpush2.msra.mxu0 0.0
  %2493 = vmatprep.subr.mxu0 0.0
  %2494 = vmatpush2.msra.mxu0 0.0
  %2495 = vmatprep.subr.mxu0 0.0
  %2496 = vmatpush2.msra.mxu0 0.0
  %2497 = vmatprep.subr.mxu0 0.0
  %2498 = vmatpush2.msra.mxu0 0.0
  %2499 = vmatprep.subr.mxu0 0.0
  %2500 = vmatpush2.msra.mxu0 0.0
  %2501 = vmatprep.subr.mxu0 0.0
  %2502 = vmatpush2.msra.mxu0 0.0
  %2503 = vmatprep.mubr.f32.mxu0 0.0
  %2504 = vmatmul.mubr.f32.gmra.mxu0 %v2392
  %v2505 = vpop.f32.mrf.mxu0
  %v2506 = vadd.f32 0.0, %v2505
  %v2507 = vpop.f32.mrf.mxu0
  %2508 = vmatprep.mubr.f32.mxu0 0.0
  %2509 = vmatmul.mubr.f32.gmra.mxu0 %v2395
  %v2510 = vpop.f32.mrf.mxu0
  %v2511 = vadd.f32 0.0, %v2510
  %v2512 = vpop.f32.mrf.mxu0
  %2513 = vmatprep.mubr.f32.mxu0 0.0
  %2514 = vmatmul.mubr.f32.gmra.mxu0 %v2398
  %v2515 = vpop.f32.mrf.mxu0
  %v2516 = vadd.f32 0.0, %v2515
  %v2517 = vpop.f32.mrf.mxu0
  %2518 = vmatprep.mubr.f32.mxu0 0.0
  %2519 = vmatmul.mubr.f32.gmra.mxu0 %v2401
  %v2520 = vpop.f32.mrf.mxu0
  %v2521 = vadd.f32 0.0, %v2520
  %v2522 = vpop.f32.mrf.mxu0
  %2523 = vmatprep.mubr.f32.mxu0 0.0
  %2524 = vmatmul.mubr.f32.gmra.mxu0 %v2404
  %v2525 = vpop.f32.mrf.mxu0
  %v2526 = vadd.f32 0.0, %v2525
  %v2527 = vpop.f32.mrf.mxu0
  %2528 = vmatprep.mubr.f32.mxu0 0.0
  %2529 = vmatmul.mubr.f32.gmra.mxu0 %v2407
  %v2530 = vpop.f32.mrf.mxu0
  %v2531 = vadd.f32 0.0, %v2530
  %v2532 = vpop.f32.mrf.mxu0
  %2533 = vmatprep.mubr.f32.mxu0 0.0
  %2534 = vmatmul.mubr.f32.gmra.mxu0 %v2410
  %v2535 = vpop.f32.mrf.mxu0
  %v2536 = vadd.f32 0.0, %v2535
  %v2537 = vpop.f32.mrf.mxu0
  %2538 = vmatprep.mubr.f32.mxu0 0.0
  %2539 = vmatmul.mubr.f32.gmra.mxu0 %v2413
  %v2540 = vpop.f32.mrf.mxu0
  %v2541 = vadd.f32 0.0, %v2540
  %v2542 = vpop.f32.mrf.mxu0
  %2543 = vmatprep.mubr.f32.mxu0 0.0
  %2544 = vmatmul.mubr.f32.gmra.mxu0 %v2416
  %v2545 = vpop.f32.mrf.mxu0
  %v2546 = vadd.f32 0.0, %v2545
  %v2547 = vpop.f32.mrf.mxu0
  %2548 = vmatprep.mubr.f32.mxu0 0.0
  %2549 = vmatmul.mubr.f32.gmra.mxu0 %v2419
  %v2550 = vpop.f32.mrf.mxu0
  %v2551 = vadd.f32 0.0, %v2550
  %v2552 = vpop.f32.mrf.mxu0
  %2553 = vmatprep.mubr.f32.mxu0 0.0
  %2554 = vmatmul.mubr.f32.gmra.mxu0 %v2422
  %v2555 = vpop.f32.mrf.mxu0
  %v2556 = vadd.f32 0.0, %v2555
  %v2557 = vpop.f32.mrf.mxu0
  %2558 = vmatprep.mubr.f32.mxu0 0.0
  %2559 = vmatmul.mubr.f32.gmra.mxu0 %v2425
  %v2560 = vpop.f32.mrf.mxu0
  %v2561 = vadd.f32 0.0, %v2560
  %v2562 = vpop.f32.mrf.mxu0
  %2563 = vmatprep.mubr.f32.mxu0 0.0
  %2564 = vmatmul.mubr.f32.gmra.mxu0 %v2428
  %v2565 = vpop.f32.mrf.mxu0
  %v2566 = vadd.f32 0.0, %v2565
  %v2567 = vpop.f32.mrf.mxu0
  %2568 = vmatprep.mubr.f32.mxu0 0.0
  %2569 = vmatmul.mubr.f32.gmra.mxu0 %v2431
  %v2570 = vpop.f32.mrf.mxu0
  %v2571 = vadd.f32 0.0, %v2570
  %v2572 = vpop.f32.mrf.mxu0
  %2573 = vmatprep.mubr.f32.mxu0 0.0
  %2574 = vmatmul.mubr.f32.gmra.mxu0 %v2434
  %v2575 = vpop.f32.mrf.mxu0
  %v2576 = vadd.f32 0.0, %v2575
  %v2577 = vpop.f32.mrf.mxu0
  %2578 = vmatprep.mubr.f32.mxu0 0.0
  %2579 = vmatmul.mubr.f32.gmra.mxu0 %v2437
  %v2580 = vpop.f32.mrf.mxu0
  %v2581 = vadd.f32 0.0, %v2580
  %v2582 = vpop.f32.mrf.mxu0
  %2583 = vdwg.mxu0
  %vm2584 = vcmask 7168
  %v2585 = vsel %vm2584, %v2506, -inf
  %v2586 = vsel %vm2584, %v2516, -inf
  %v2587 = vsel %vm2584, %v2526, -inf
  %v2588 = vmax.f32 %v2585, %v2587
  %v2589 = vsel %vm2584, %v2536, -inf
  %v2590 = vmax.f32 %v2586, %v2589
  %v2591 = vsel %vm2584, %v2546, -inf
  %v2592 = vmax.f32 %v2588, %v2591
  %v2593 = vsel %vm2584, %v2556, -inf
  %v2594 = vmax.f32 %v2590, %v2593
  %v2595 = vsel %vm2584, %v2566, -inf
  %v2596 = vmax.f32 %v2592, %v2595
  %v2597 = vsel %vm2584, %v2576, -inf
  %v2598 = vmax.f32 %v2594, %v2597
  %v2599 = vmax.f32 %v2596, %v2598
  %v2600 = vsel %vm2584, %v2511, -inf
  %v2601 = vsel %vm2584, %v2521, -inf
  %v2602 = vsel %vm2584, %v2531, -inf
  %v2603 = vmax.f32 %v2600, %v2602
  %v2604 = vsel %vm2584, %v2541, -inf
  %v2605 = vmax.f32 %v2601, %v2604
  %v2606 = vsel %vm2584, %v2551, -inf
  %v2607 = vmax.f32 %v2603, %v2606
  %v2608 = vsel %vm2584, %v2561, -inf
  %v2609 = vmax.f32 %v2605, %v2608
  %v2610 = vsel %vm2584, %v2571, -inf
  %v2611 = vmax.f32 %v2607, %v2610
  %v2612 = vsel %vm2584, %v2581, -inf
  %v2613 = vmax.f32 %v2609, %v2612
  %v2614 = vmax.f32 %v2611, %v2613
  %v2615 = vsub.f32 %v2506, %v2599
  %v2616 = vsub.f32 %v2511, %v2614
  %v2617 = vsub.f32 %v2516, %v2599
  %v2618 = vsub.f32 %v2521, %v2614
  %v2619 = vsub.f32 %v2526, %v2599
  %v2620 = vsub.f32 %v2531, %v2614
  %v2621 = vsub.f32 %v2536, %v2599
  %v2622 = vsub.f32 %v2541, %v2614
  %v2623 = vsub.f32 %v2546, %v2599
  %v2624 = vsub.f32 %v2551, %v2614
  %v2625 = vsub.f32 %v2556, %v2599
  %v2626 = vsub.f32 %v2561, %v2614
  %v2627 = vsub.f32 %v2566, %v2599
  %v2628 = vsub.f32 %v2571, %v2614
  %v2629 = vsub.f32 %v2576, %v2599
  %v2630 = vsub.f32 %v2581, %v2614
  %v2631 = vmul.f32 %v2615, 1.442695
  %v2632 = vpow.pop %v2631
  %v2633 = vmul.f32 %v2616, 1.442695
  %v2634 = vpow.pop %v2633
  %v2635 = vmul.f32 %v2617, 1.442695
  %v2636 = vpow.pop %v2635
  %v2637 = vmul.f32 %v2618, 1.442695
  %v2638 = vpow.pop %v2637
  %v2639 = vmul.f32 %v2619, 1.442695
  %v2640 = vpow.pop %v2639
  %v2641 = vmul.f32 %v2620, 1.442695
  %v2642 = vpow.pop %v2641
  %v2643 = vmul.f32 %v2621, 1.442695
  %v2644 = vpow.pop %v2643
  %v2645 = vmul.f32 %v2622, 1.442695
  %v2646 = vpow.pop %v2645
  %v2647 = vmul.f32 %v2623, 1.442695
  %v2648 = vpow.pop %v2647
  %v2649 = vmul.f32 %v2624, 1.442695
  %v2650 = vpow.pop %v2649
  %v2651 = vmul.f32 %v2625, 1.442695
  %v2652 = vpow.pop %v2651
  %v2653 = vmul.f32 %v2626, 1.442695
  %v2654 = vpow.pop %v2653
  %v2655 = vmul.f32 %v2627, 1.442695
  %v2656 = vpow.pop %v2655
  %v2657 = vmul.f32 %v2628, 1.442695
  %v2658 = vpow.pop %v2657
  %v2659 = vmul.f32 %v2629, 1.442695
  %v2660 = vpow.pop %v2659
  %v2661 = vmul.f32 %v2630, 1.442695
  %v2662 = vpow.pop %v2661
  %v2663 = vsel %vm2584, %v2632, 0.0
  %v2664 = vsel %vm2584, %v2636, 0.0
  %v2665 = vadd.f32 %v2663, %v2664
  %v2666 = vsel %vm2584, %v2640, 0.0
  %v2667 = vadd.f32 %v2665, %v2666
  %v2668 = vsel %vm2584, %v2644, 0.0
  %v2669 = vadd.f32 %v2667, %v2668
  %v2670 = vsel %vm2584, %v2648, 0.0
  %v2671 = vadd.f32 %v2669, %v2670
  %v2672 = vsel %vm2584, %v2652, 0.0
  %v2673 = vadd.f32 %v2671, %v2672
  %v2674 = vsel %vm2584, %v2656, 0.0
  %v2675 = vadd.f32 %v2673, %v2674
  %v2676 = vsel %vm2584, %v2660, 0.0
  %v2677 = vadd.f32 %v2675, %v2676
  %v2678 = vsel %vm2584, %v2634, 0.0
  %v2679 = vsel %vm2584, %v2638, 0.0
  %v2680 = vadd.f32 %v2678, %v2679
  %v2681 = vsel %vm2584, %v2642, 0.0
  %v2682 = vadd.f32 %v2680, %v2681
  %v2683 = vsel %vm2584, %v2646, 0.0
  %v2684 = vadd.f32 %v2682, %v2683
  %v2685 = vsel %vm2584, %v2650, 0.0
  %v2686 = vadd.f32 %v2684, %v2685
  %v2687 = vsel %vm2584, %v2654, 0.0
  %v2688 = vadd.f32 %v2686, %v2687
  %v2689 = vsel %vm2584, %v2658, 0.0
  %v2690 = vadd.f32 %v2688, %v2689
  %v2691 = vsel %vm2584, %v2662, 0.0
  %v2692 = vadd.f32 %v2690, %v2691
  %v2693 = vrcp.pop %v2677
  %v2694 = vrcp.pop %v2692
  %v2695 = vmul.f32 %v2632, %v2693
  %v2696 = vmul.f32 %v2634, %v2694
  %v2697 = vmul.f32 %v2636, %v2693
  %v2698 = vmul.f32 %v2638, %v2694
  %v2699 = vmul.f32 %v2640, %v2693
  %v2700 = vmul.f32 %v2642, %v2694
  %v2701 = vmul.f32 %v2644, %v2693
  %v2702 = vmul.f32 %v2646, %v2694
  %v2703 = vmul.f32 %v2648, %v2693
  %v2704 = vmul.f32 %v2650, %v2694
  %v2705 = vmul.f32 %v2652, %v2693
  %v2706 = vmul.f32 %v2654, %v2694
  %v2707 = vmul.f32 %v2656, %v2693
  %v2708 = vmul.f32 %v2658, %v2694
  %v2709 = vmul.f32 %v2660, %v2693
  %v2710 = vmul.f32 %v2662, %v2694
  %2712 = vset.pattern.permute.xlu0 0
  %2713 = vperm.xlu0 %2712, %v2695
  %v2714 = vpop.permute.xlu0 %2713
  %2717 = vset.pattern.permute.xlu0 0
  %2718 = vperm.xlu0 %2717, %v2696
  %v2719 = vpop.permute.xlu0 %2718
  %2722 = vset.pattern.permute.xlu0 0
  %2723 = vperm.xlu0 %2722, %v2697
  %v2724 = vpop.permute.xlu0 %2723
  %2727 = vset.pattern.permute.xlu0 0
  %2728 = vperm.xlu0 %2727, %v2698
  %v2729 = vpop.permute.xlu0 %2728
  %2732 = vset.pattern.permute.xlu0 0
  %2733 = vperm.xlu0 %2732, %v2699
  %v2734 = vpop.permute.xlu0 %2733
  %2737 = vset.pattern.permute.xlu0 0
  %2738 = vperm.xlu0 %2737, %v2700
  %v2739 = vpop.permute.xlu0 %2738
  %2742 = vset.pattern.permute.xlu0 0
  %2743 = vperm.xlu0 %2742, %v2701
  %v2744 = vpop.permute.xlu0 %2743
  %2747 = vset.pattern.permute.xlu0 0
  %2748 = vperm.xlu0 %2747, %v2702
  %v2749 = vpop.permute.xlu0 %2748
  %2752 = vset.pattern.permute.xlu0 0
  %2753 = vperm.xlu0 %2752, %v2703
  %v2754 = vpop.permute.xlu0 %2753
  %2757 = vset.pattern.permute.xlu0 0
  %2758 = vperm.xlu0 %2757, %v2704
  %v2759 = vpop.permute.xlu0 %2758
  %2762 = vset.pattern.permute.xlu0 0
  %2763 = vperm.xlu0 %2762, %v2705
  %v2764 = vpop.permute.xlu0 %2763
  %2767 = vset.pattern.permute.xlu0 0
  %2768 = vperm.xlu0 %2767, %v2706
  %v2769 = vpop.permute.xlu0 %2768
  %2772 = vset.pattern.permute.xlu0 0
  %2773 = vperm.xlu0 %2772, %v2707
  %v2774 = vpop.permute.xlu0 %2773
  %2777 = vset.pattern.permute.xlu0 0
  %2778 = vperm.xlu0 %2777, %v2708
  %v2779 = vpop.permute.xlu0 %2778
  %2782 = vset.pattern.permute.xlu0 0
  %2783 = vperm.xlu0 %2782, %v2709
  %v2784 = vpop.permute.xlu0 %2783
  %2787 = vset.pattern.permute.xlu0 0
  %2788 = vperm.xlu0 %2787, %v2710
  %v2789 = vpop.permute.xlu0 %2788
  %v2791 = vmul.f32 %v2714, %v2151
  %v2792 = vmul.f32 %v2719, %v2152
  %v2793 = vmul.f32 %v2724, %v2153
  %v2794 = vmul.f32 %v2729, %v2154
  %v2795 = vmul.f32 %v2734, %v2155
  %v2796 = vmul.f32 %v2739, %v2156
  %v2797 = vmul.f32 %v2744, %v2157
  %v2798 = vmul.f32 %v2749, %v2158
  %v2799 = vmul.f32 %v2754, %v2159
  %v2800 = vmul.f32 %v2759, %v2160
  %v2801 = vmul.f32 %v2764, %v2161
  %v2802 = vmul.f32 %v2769, %v2162
  %v2803 = vmul.f32 %v2774, %v2163
  %v2804 = vmul.f32 %v2779, %v2164
  %v2805 = vmul.f32 %v2784, %v2165
  %v2806 = vmul.f32 %v2789, %v2166
  %v2807 = vsel %vm56, %v2791, 0.0
  %v2808 = vsel %vm56, %v2793, 0.0
  %v2809 = vadd.f32 %v2807, %v2808
  %v2810 = vsel %vm56, %v2795, 0.0
  %v2811 = vadd.f32 %v2809, %v2810
  %v2812 = vsel %vm56, %v2797, 0.0
  %v2813 = vadd.f32 %v2811, %v2812
  %v2814 = vsel %vm56, %v2799, 0.0
  %v2815 = vadd.f32 %v2813, %v2814
  %v2816 = vsel %vm56, %v2801, 0.0
  %v2817 = vadd.f32 %v2815, %v2816
  %v2818 = vsel %vm56, %v2803, 0.0
  %v2819 = vadd.f32 %v2817, %v2818
  %v2820 = vsel %vm56, %v2805, 0.0
  %v2821 = vadd.f32 %v2819, %v2820
  %v2822 = vsel %vm56, %v2792, 0.0
  %v2823 = vsel %vm56, %v2794, 0.0
  %v2824 = vadd.f32 %v2822, %v2823
  %v2825 = vsel %vm56, %v2796, 0.0
  %v2826 = vadd.f32 %v2824, %v2825
  %v2827 = vsel %vm56, %v2798, 0.0
  %v2828 = vadd.f32 %v2826, %v2827
  %v2829 = vsel %vm56, %v2800, 0.0
  %v2830 = vadd.f32 %v2828, %v2829
  %v2831 = vsel %vm56, %v2802, 0.0
  %v2832 = vadd.f32 %v2830, %v2831
  %v2833 = vsel %vm56, %v2804, 0.0
  %v2834 = vadd.f32 %v2832, %v2833
  %v2835 = vsel %vm56, %v2806, 0.0
  %v2836 = vadd.f32 %v2834, %v2835
  %2837 = vst.msk [vmem:[%s8] sm:$0xff] %vm56, %v2821
  %2838 = vst.msk [vmem:[%s8 + $0x8] sm:$0xff] %vm56, %v2836
  // Predicated region
  $region34: #{han_forward.2} parent=0 // pred_check
    _
  $region35: #{han_forward.2} parent=0 // pred_check_branch
    %2840 = sbr.rel (0) target = $region37
  $region36: #{han_forward.2} parent=0 // pred_region
    _
  $region37: #{han_forward.2} parent=0 // pred_fallthru
    _
  // Predicated region
  $region38: #{han_forward.2} parent=0 // pred_check
    _
  $region39: #{han_forward.2} parent=0 // pred_check_branch
    %2842 = sbr.rel (0) target = $region41
  $region40: #{han_forward.2} parent=0 // pred_region
    _
  $region41: #{han_forward.2} parent=0 // pred_fallthru
    _

</llo_original>
